<compile_context>
chip_gen: v7x
topology: tpu7x:2x2x1
jax: 0.10.0
libtpu: 0.0.40
codegen_flags: <defaults>
</compile_context>

<pallas_src>
import jax
import jax.numpy as jnp
from jax.experimental import pallas as pl
from jax.experimental.pallas import tpu as pltpu

_LANES = 128  # TPU lane width; output slab is kept lane-dense at this width.


def classifier_kernel(x_ref, w1_ref, b1_ref, w2_ref, o_ref):
    # x_ref : (tb, F)      bf16   batch tile
    # w1_ref: (F, H)       bf16   resident first-layer weight
    # b1_ref: (1, H)       f32    first-layer bias
    # w2_ref: (H, 128)     bf16   second-layer weight, real column in lane 0, rest zeros
    # o_ref : (tb, 128)    f32    lane-dense logits slab (lane 0 is the real logit)
    #
    # TODO(synk): Dropout layers are eval-mode identity; train-mode stochastic masking
    # (pltpu.prng_seed / pltpu.prng_random_bits) is not implemented.
    h = jnp.dot(x_ref[...], w1_ref[...], preferred_element_type=jnp.float32)
    h = jnp.tanh(h + b1_ref[...])                      # bias-add + tanh kept in f32
    o_ref[...] = jnp.dot(h.astype(jnp.bfloat16), w2_ref[...],
                         preferred_element_type=jnp.float32).astype(o_ref.dtype)


def _round_up(n, m):
    return ((n + m - 1) // m) * m


def _build_call(tb, F, H, Bp, single_buffer_weights):
    # Weights/biases never change block index across the grid -> single-buffer them
    # when supported (halves their VMEM footprint; matters for large F on v7x).
    resident = {"pipeline_mode": pl.Buffered(1)} if single_buffer_weights else {}
    in_specs = [
        pl.BlockSpec((tb, F), lambda i: (i, 0)),                    # x tile (batch-tiled)
        pl.BlockSpec((F, H), lambda i: (0, 0), **resident),         # W1 (resident)
        pl.BlockSpec((1, H), lambda i: (0, 0), **resident),         # b1 (resident)
        pl.BlockSpec((H, _LANES), lambda i: (0, 0), **resident),    # W2 padded (resident)
    ]
    return pl.pallas_call(
        classifier_kernel,
        out_shape=jax.ShapeDtypeStruct((Bp, _LANES), jnp.float32),
        grid_spec=pltpu.PrefetchScalarGridSpec(
            num_scalar_prefetch=0,
            grid=(Bp // tb,),
            in_specs=in_specs,
            out_specs=pl.BlockSpec((tb, _LANES), lambda i: (i, 0)),
        ),
        compiler_params=pltpu.CompilerParams(
            dimension_semantics=("parallel",),          # batch axis shards across TCs
            vmem_limit_bytes=32 * 1024 * 1024,          # explicit; safe on v5e/v6e/v7x
        ),
    )


def classifier_forward(x, w1, b1, w2, b2, *, tb=256):
    """x: [B, F] f32, w1: [F, H], b1: [1, H] (or [H]), w2: [H, 1], b2: [1, 1] (or scalar).

    tb: batch tile. Default 256 (v6e/v7x MXU M-dim); 128 is a good choice on v5e.
    Any B is handled by zero-padding the batch in the wrapper.
    """
    B, F = x.shape
    H = w1.shape[1]

    # Pick the batch tile: large for MXU utilization, but don't over-pad tiny batches.
    tb = max(16, min(tb, _round_up(B, 16)))
    Bp = _round_up(B, tb)

    xp = jnp.pad(x, ((0, Bp - B), (0, 0))) if Bp != B else x

    # bf16 inputs for the MXU; accumulation / activation stays f32 inside the kernel.
    x_bf = xp.astype(jnp.bfloat16)
    w1_bf = w1.astype(jnp.bfloat16)
    b1_f = b1.reshape(1, H).astype(jnp.float32)
    # Lane-dense second matmul: real weight column lives in lane 0 of a 128-wide slab.
    w2_pad = jnp.zeros((H, _LANES), jnp.bfloat16).at[:, :1].set(
        w2.reshape(H, 1).astype(jnp.bfloat16))

    try:
        out = _build_call(tb, F, H, Bp, True)(x_bf, w1_bf, b1_f, w2_pad)
    except Exception:
        # This Pallas build rejected per-spec pipeline_mode; identical semantics,
        # just default double-buffered weights.
        out = _build_call(tb, F, H, Bp, False)(x_bf, w1_bf, b1_f, w2_pad)

    # Logits are in lane 0; scalar output bias added outside the kernel (cheaper than
    # a (1,1) VMEM block + masked stores inside).
    return out[:B, :1].astype(x.dtype) + jnp.asarray(b2, x.dtype).reshape(1, 1)


def reference_forward(x, w1, b1, w2, b2):
    h = jnp.tanh(x @ w1 + b1)
    return h @ w2 + b2


def reference_forward_mixed(x, w1, b1, w2, b2):
    # Same precision policy as the kernel: bf16 MXU inputs, f32 accumulate/activations.
    h = jnp.dot(x.astype(jnp.bfloat16), w1.astype(jnp.bfloat16),
                preferred_element_type=jnp.float32)
    h = jnp.tanh(h + b1)
    o = jnp.dot(h.astype(jnp.bfloat16), w2.astype(jnp.bfloat16),
                preferred_element_type=jnp.float32)
    return o + b2


if __name__ == "__main__":
    # Module defaults: in_features=512, hidden=512. B=200 is small but deliberately
    # not a multiple of the tile, exercising the padded multi-step batch path.
    B, F, H = 200, 512, 512

    key = jax.random.PRNGKey(0)
    kx, kw1, kb1, kw2, kb2 = jax.random.split(key, 5)

    x = jax.random.normal(kx, (B, F), dtype=jnp.float32)
    # Deterministic parameter init (synthetic weights, not a checkpoint).
    w1 = jax.random.normal(kw1, (F, H), dtype=jnp.float32) * (1.0 / F ** 0.5)
    b1 = jax.random.normal(kb1, (1, H), dtype=jnp.float32) * 0.01
    w2 = jax.random.normal(kw2, (H, 1), dtype=jnp.float32) * (1.0 / H ** 0.5)
    b2 = jax.random.normal(kb2, (1, 1), dtype=jnp.float32) * 0.01

    out = classifier_forward(x, w1, b1, w2, b2, tb=128)  # 2 grid steps, padded last tile
    out = jax.block_until_ready(out)
    assert out.shape == (B, 1), out.shape

    ref_mixed = reference_forward_mixed(x, w1, b1, w2, b2)
    ref_f32 = reference_forward(x, w1, b1, w2, b2)
    assert jnp.allclose(out, ref_mixed, atol=5e-3, rtol=5e-3), "mismatch vs bf16-matched reference"
    assert jnp.allclose(out, ref_f32, atol=5e-2, rtol=5e-2), "mismatch vs f32 reference"

    print("KERNEL_OK")
</pallas_src>

<mosaic_0001>
module attributes {stable_mosaic.version = 11 : i64} {
  func.func @classifier_kernel(%arg0: i32, %arg1: memref<128x512xbf16, #tpu.memory_space<vmem>>, %arg2: memref<512x512xbf16, #tpu.memory_space<vmem>>, %arg3: memref<1x512xf32, #tpu.memory_space<vmem>>, %arg4: memref<512x128xbf16, #tpu.memory_space<vmem>>, %arg5: memref<128x128xf32, #tpu.memory_space<vmem>>) attributes {dimension_semantics = [#tpu.dimension_semantics<parallel>], iteration_bounds = array<i64: 2>, scalar_prefetch = 0 : i64, scratch_operands = 0 : i64, tpu.core_type = #tpu.core_type<tc>, window_params = [{transform_indices = @transform_0, window_bounds = array<i64: 128, 512>}, {pipeline_mode = #tpu.pipeline_mode<synchronous>, transform_indices = @transform_1, window_bounds = array<i64: 512, 512>}, {pipeline_mode = #tpu.pipeline_mode<synchronous>, transform_indices = @transform_2, window_bounds = array<i64: 1, 512>}, {pipeline_mode = #tpu.pipeline_mode<synchronous>, transform_indices = @transform_3, window_bounds = array<i64: 512, 128>}, {transform_indices = @transform_4, window_bounds = array<i64: 128, 128>}]} {
    %c0 = arith.constant 0 : index
    %c0_0 = arith.constant 0 : index
    %0 = vector.load %arg1[%c0, %c0_0] : memref<128x512xbf16, #tpu.memory_space<vmem>>, vector<128x512xbf16>
    %c0_1 = arith.constant 0 : index
    %c0_2 = arith.constant 0 : index
    %1 = vector.load %arg2[%c0_1, %c0_2] : memref<512x512xbf16, #tpu.memory_space<vmem>>, vector<512x512xbf16>
    %cst = arith.constant dense<0.000000e+00> : vector<128x512xf32>
    %2 = tpu.matmul %0, %1, %cst {dimension_numbers = #tpu.dot_dimension_numbers<[1], [0], [0], [1], [0, 0, 1, 1], [], []>} : vector<128x512xbf16>, vector<512x512xbf16>, vector<128x512xf32> -> vector<128x512xf32>
    %c0_3 = arith.constant 0 : index
    %c0_4 = arith.constant 0 : index
    %3 = vector.load %arg3[%c0_3, %c0_4] : memref<1x512xf32, #tpu.memory_space<vmem>>, vector<1x512xf32>
    %4 = vector.broadcast %3 : vector<1x512xf32> to vector<128x512xf32>
    %5 = arith.addf %2, %4 : vector<128x512xf32>
    %6 = math.tanh %5 : vector<128x512xf32>
    %7 = arith.truncf %6 : vector<128x512xf32> to vector<128x512xbf16>
    %c0_5 = arith.constant 0 : index
    %c0_6 = arith.constant 0 : index
    %8 = vector.load %arg4[%c0_5, %c0_6] : memref<512x128xbf16, #tpu.memory_space<vmem>>, vector<512x128xbf16>
    %cst_7 = arith.constant dense<0.000000e+00> : vector<128x128xf32>
    %9 = tpu.matmul %7, %8, %cst_7 {dimension_numbers = #tpu.dot_dimension_numbers<[1], [0], [0], [1], [0, 0, 1, 1], [], []>} : vector<128x512xbf16>, vector<512x128xbf16>, vector<128x128xf32> -> vector<128x128xf32>
    %c0_8 = arith.constant 0 : index
    %c0_9 = arith.constant 0 : index
    %10 = vector.load %arg5[%c0_8, %c0_9] : memref<128x128xf32, #tpu.memory_space<vmem>>, vector<128x128xf32>
    tpu.vector_store %arg5[%c0_8, %c0_9], %9 {strides = array<i32>} : memref<128x128xf32, #tpu.memory_space<vmem>>, vector<128x128xf32>,
    return
  }
  func.func @transform_0(%arg0: i32) -> (i32, i32) {
    %c0_i32 = arith.constant 0 : i32
    %c0_i32_0 = arith.constant 0 : i32
    return %arg0, %c0_i32 : i32, i32
  }
  func.func @transform_1(%arg0: i32) -> (i32, i32) {
    %c0_i32 = arith.constant 0 : i32
    %c0_i32_0 = arith.constant 0 : i32
    %c0_i32_1 = arith.constant 0 : i32
    return %c0_i32, %c0_i32_0 : i32, i32
  }
  func.func @transform_2(%arg0: i32) -> (i32, i32) {
    %c0_i32 = arith.constant 0 : i32
    %c0_i32_0 = arith.constant 0 : i32
    %c0_i32_1 = arith.constant 0 : i32
    return %c0_i32, %c0_i32_0 : i32, i32
  }
  func.func @transform_3(%arg0: i32) -> (i32, i32) {
    %c0_i32 = arith.constant 0 : i32
    %c0_i32_0 = arith.constant 0 : i32
    %c0_i32_1 = arith.constant 0 : i32
    return %c0_i32, %c0_i32_0 : i32, i32
  }
  func.func @transform_4(%arg0: i32) -> (i32, i32) {
    %c0_i32 = arith.constant 0 : i32
    %c0_i32_0 = arith.constant 0 : i32
    return %arg0, %c0_i32 : i32, i32
  }
}

module attributes {stable_mosaic.version = 11 : i64} {
  func.func @classifier_kernel(%arg0: i32, %arg1: memref<128x512xbf16, #tpu.memory_space<vmem>>, %arg2: memref<512x512xbf16, #tpu.memory_space<vmem>>, %arg3: memref<1x512xf32, #tpu.memory_space<vmem>>, %arg4: memref<512x128xbf16, #tpu.memory_space<vmem>>, %arg5: memref<128x128xf32, #tpu.memory_space<vmem>>) attributes {dimension_semantics = [#tpu.dimension_semantics<parallel>], iteration_bounds = array<i64: 2>, scalar_prefetch = 0 : i64, scratch_operands = 0 : i64, tpu.core_type = #tpu.core_type<tc>, window_params = [{transform_indices = @transform_0, window_bounds = array<i64: 128, 512>}, {pipeline_mode = #tpu.pipeline_mode<synchronous>, transform_indices = @transform_1, window_bounds = array<i64: 512, 512>}, {pipeline_mode = #tpu.pipeline_mode<synchronous>, transform_indices = @transform_2, window_bounds = array<i64: 1, 512>}, {pipeline_mode = #tpu.pipeline_mode<synchronous>, transform_indices = @transform_3, window_bounds = array<i64: 512, 128>}, {transform_indices = @transform_4, window_bounds = array<i64: 128, 128>}]} {
    %c0 = arith.constant 0 : index
    %c0_0 = arith.constant 0 : index
    %0 = vector.load %arg1[%c0, %c0_0] : memref<128x512xbf16, #tpu.memory_space<vmem>>, vector<128x512xbf16>
    %c0_1 = arith.constant 0 : index
    %c0_2 = arith.constant 0 : index
    %1 = vector.load %arg2[%c0_1, %c0_2] : memref<512x512xbf16, #tpu.memory_space<vmem>>, vector<512x512xbf16>
    %cst = arith.constant dense<0.000000e+00> : vector<128x512xf32>
    %2 = tpu.matmul %0, %1, %cst {dimension_numbers = #tpu.dot_dimension_numbers<[1], [0], [0], [1], [0, 0, 1, 1], [], []>} : vector<128x512xbf16>, vector<512x512xbf16>, vector<128x512xf32> -> vector<128x512xf32>
    %c0_3 = arith.constant 0 : index
    %c0_4 = arith.constant 0 : index
    %3 = vector.load %arg3[%c0_3, %c0_4] : memref<1x512xf32, #tpu.memory_space<vmem>>, vector<1x512xf32>
    %4 = vector.broadcast %3 : vector<1x512xf32> to vector<128x512xf32>
    %5 = arith.addf %2, %4 : vector<128x512xf32>
    %6 = math.tanh %5 : vector<128x512xf32>
    %7 = arith.truncf %6 : vector<128x512xf32> to vector<128x512xbf16>
    %c0_5 = arith.constant 0 : index
    %c0_6 = arith.constant 0 : index
    %8 = vector.load %arg4[%c0_5, %c0_6] : memref<512x128xbf16, #tpu.memory_space<vmem>>, vector<512x128xbf16>
    %cst_7 = arith.constant dense<0.000000e+00> : vector<128x128xf32>
    %9 = tpu.matmul %7, %8, %cst_7 {dimension_numbers = #tpu.dot_dimension_numbers<[1], [0], [0], [1], [0, 0, 1, 1], [], []>} : vector<128x512xbf16>, vector<512x128xbf16>, vector<128x128xf32> -> vector<128x128xf32>
    %c0_8 = arith.constant 0 : index
    %c0_9 = arith.constant 0 : index
    %10 = vector.load %arg5[%c0_8, %c0_9] : memref<128x128xf32, #tpu.memory_space<vmem>>, vector<128x128xf32>
    tpu.vector_store %arg5[%c0_8, %c0_9], %9 {strides = array<i32>} : memref<128x128xf32, #tpu.memory_space<vmem>>, vector<128x128xf32>,
    return
  }
  func.func @transform_0(%arg0: i32) -> (i32, i32) {
    %c0_i32 = arith.constant 0 : i32
    %c0_i32_0 = arith.constant 0 : i32
    return %arg0, %c0_i32 : i32, i32
  }
  func.func @transform_1(%arg0: i32) -> (i32, i32) {
    %c0_i32 = arith.constant 0 : i32
    %c0_i32_0 = arith.constant 0 : i32
    %c0_i32_1 = arith.constant 0 : i32
    return %c0_i32, %c0_i32_0 : i32, i32
  }
  func.func @transform_2(%arg0: i32) -> (i32, i32) {
    %c0_i32 = arith.constant 0 : i32
    %c0_i32_0 = arith.constant 0 : i32
    %c0_i32_1 = arith.constant 0 : i32
    return %c0_i32, %c0_i32_0 : i32, i32
  }
  func.func @transform_3(%arg0: i32) -> (i32, i32) {
    %c0_i32 = arith.constant 0 : i32
    %c0_i32_0 = arith.constant 0 : i32
    %c0_i32_1 = arith.constant 0 : i32
    return %c0_i32, %c0_i32_0 : i32, i32
  }
  func.func @transform_4(%arg0: i32) -> (i32, i32) {
    %c0_i32 = arith.constant 0 : i32
    %c0_i32_0 = arith.constant 0 : i32
    return %arg0, %c0_i32 : i32, i32
  }
}

</mosaic_0001>

<llo_original>
// kernel: tpu_custom_call.1
$region0: #{tpu_custom_call.1}
  #allocation0 [shape = 'u32[]', space=smem, size = 0x4, offset = 0x4, fixed_abs, tag = 'smem constant byte address 0x4 - core index']
  #allocation1 [shape = 'u32[144,128]{1,0:T(1,128)}', space=vmem, size = 0x12000, scoped, tag = 'internal scratch']
  %s0 = inlined_call_operand.hbm [shape: bf16[256,512], index: 0, kind: input, shape index: {}]
  %s1 = inlined_call_operand.hbm [shape: bf16[512,512], index: 1, kind: input, shape index: {}]
  %s2 = inlined_call_operand.vmem [shape: f32[1,512], index: 2, kind: input, shape index: {}]
  %s3 = inlined_call_operand.hbm [shape: bf16[512,128], index: 3, kind: input, shape index: {}]
  %s4 = inlined_call_operand.hbm [shape: f32[256,128], index: 4, kind: output, shape index: {}]
  %s5 = sld [smem:[#allocation0]]
  $region61: #{tpu_custom_call.1} parent=0
    _
  %s7 = ssub.s32 1, %s5
  %s8 = scalar_select 0, %s7, %s5
  $region1: #{tpu_custom_call.1} parent=0
    #allocation2 [shape = 'u8[262144]{0}', space=vmem, size = 0x40000, scoped, tag = 'input window, operand 0']
    #allocation3 [shape = 's32[2]{0}', space=sflag, size = 0x8, scoped, tag = 'scoped memory for tpu_custom_call.1']
    #allocation4 [shape = 's32[2]{0}', space=sflag, size = 0x8, scoped, tag = 'scoped memory for tpu_custom_call.1']
    #allocation5 [shape = 'u8[524288]{0}', space=vmem, size = 0x80000, scoped, tag = 'input window, operand 1, single buffered']
    #allocation6 [shape = 's32[1]{0}', space=sflag, size = 0x4, scoped, tag = 'scoped memory for tpu_custom_call.1']
    #allocation7 [shape = 'u8[131072]{0}', space=vmem, size = 0x20000, scoped, tag = 'input window, operand 3, single buffered']
    #allocation8 [shape = 'u8[131072]{0}', space=vmem, size = 0x20000, scoped, tag = 'output window, operand 0']
    %9 = vsyncpa [#allocation3], 0
    %s10 = scalar_lea.sflag [#allocation3], 1
    %11 = vsyncpa %s10, 0
    %12 = vsyncpa [#allocation6], 0
    %13 = vsyncpa [#allocation4], 0
    %s14 = scalar_lea.sflag [#allocation4], 1
    %15 = vsyncpa %s14, 0
    loop: start=0, step=1, limit=4
    $region2: #{tpu_custom_call.1} parent=1 // loop_pre_header
      _
    $region3: #{tpu_custom_call.1} parent=1 // loop_header
      %s17 = sphi 0, %s21
      %p18 = scmp.ge.s32.totalorder %s17, 4
      %s27 = sphi 0, %s29
      %s30 = sphi 0, %s27
      %s31 = sphi 0, %s30
      %s47 = sphi 0, %s31
      %s51 = sphi 0, %s51
      %s53 = sphi 0, %s51
      %s54 = sphi 0, %s53
      %s68 = sphi 0, %s54
      %s72 = sphi 0, %s72
      %s74 = sphi 0, %s72
      %s75 = sphi 0, %s74
      %s89 = sphi 0, %s75
      %s93 = sphi 0, %s93
      %s95 = sphi 0, %s93
      %s96 = sphi 0, %s95
      %s110 = sphi 0, %s96
      %s116 = sphi 0, %s118
      %s119 = sphi 0, %s116
      %s120 = sphi 0, %s119
      %s136 = sphi 0, %s120
    $region4: #{tpu_custom_call.1} parent=1 // loop_header_branch
      %20 = sbr.rel (%p18) target = $region8
    $region5: #{tpu_custom_call.1} parent=1 // loop_body
      %s22 = ssub.s32 %s17, 1
      %s23 = ssub.s32 %s17, 2
      %s24 = sadd.s32 %s17, 1
      %s25 = ssub.s32 %s17, %s24
      %p26 = scmp.eq.s32.totalorder %s25, 0
      %s28 = sadd.s32 %s27, 1
      %s29 = scalar_select %p26, %s27, %s28
      %p32 = pneg %p26
      %p33 = scmp.eq.s32.totalorder %s17, 1
      %p34 = por %p32, %p33
      %p35 = scmp.ne.s32.totalorder %s27, %s30
      %p36 = scmp.eq.s32.totalorder %s17, 0
      %p37 = por %p35, %p36
      %p38 = scmp.ne.s32.totalorder %s27, %s30
      %p39 = scmp.eq.s32.totalorder %s22, 1
      %p40 = por %p38, %p39
      %p41 = scmp.ne.s32.totalorder %s30, %s31
      %p42 = scmp.eq.s32.totalorder %s22, 0
      %p43 = por %p41, %p42
      %p44 = scmp.ne.s32.totalorder %s30, %s31
      %p45 = scmp.eq.s32.totalorder %s23, 1
      %p46 = por %p44, %p45
      %p48 = scmp.ne.s32.totalorder %s31, %s47
      %p49 = scmp.eq.s32.totalorder %s23, 0
      %p50 = por %p48, %p49
      %s52 = sadd.s32 %s51, 1
      %p55 = scmp.eq.s32.totalorder %s17, 1
      %p56 = scmp.ne.s32.totalorder %s51, %s53
      %p57 = scmp.eq.s32.totalorder %s17, 0
      %p58 = por %p56, %p57
      %p59 = scmp.ne.s32.totalorder %s51, %s53
      %p60 = scmp.eq.s32.totalorder %s22, 1
      %p61 = por %p59, %p60
      %p62 = scmp.ne.s32.totalorder %s53, %s54
      %p63 = scmp.eq.s32.totalorder %s22, 0
      %p64 = por %p62, %p63
      %p65 = scmp.ne.s32.totalorder %s53, %s54
      %p66 = scmp.eq.s32.totalorder %s23, 1
      %p67 = por %p65, %p66
      %p69 = scmp.ne.s32.totalorder %s54, %s68
      %p70 = scmp.eq.s32.totalorder %s23, 0
      %p71 = por %p69, %p70
      %s73 = sadd.s32 %s72, 1
      %p76 = scmp.eq.s32.totalorder %s17, 1
      %p77 = scmp.ne.s32.totalorder %s72, %s74
      %p78 = scmp.eq.s32.totalorder %s17, 0
      %p79 = por %p77, %p78
      %p80 = scmp.ne.s32.totalorder %s72, %s74
      %p81 = scmp.eq.s32.totalorder %s22, 1
      %p82 = por %p80, %p81
      %p83 = scmp.ne.s32.totalorder %s74, %s75
      %p84 = scmp.eq.s32.totalorder %s22, 0
      %p85 = por %p83, %p84
      %p86 = scmp.ne.s32.totalorder %s74, %s75
      %p87 = scmp.eq.s32.totalorder %s23, 1
      %p88 = por %p86, %p87
      %p90 = scmp.ne.s32.totalorder %s75, %s89
      %p91 = scmp.eq.s32.totalorder %s23, 0
      %p92 = por %p90, %p91
      %s94 = sadd.s32 %s93, 1
      %p97 = scmp.eq.s32.totalorder %s17, 1
      %p98 = scmp.ne.s32.totalorder %s93, %s95
      %p99 = scmp.eq.s32.totalorder %s17, 0
      %p100 = por %p98, %p99
      %p101 = scmp.ne.s32.totalorder %s93, %s95
      %p102 = scmp.eq.s32.totalorder %s22, 1
      %p103 = por %p101, %p102
      %p104 = scmp.ne.s32.totalorder %s95, %s96
      %p105 = scmp.eq.s32.totalorder %s22, 0
      %p106 = por %p104, %p105
      %p107 = scmp.ne.s32.totalorder %s95, %s96
      %p108 = scmp.eq.s32.totalorder %s23, 1
      %p109 = por %p107, %p108
      %p111 = scmp.ne.s32.totalorder %s96, %s110
      %p112 = scmp.eq.s32.totalorder %s23, 0
      %p113 = por %p111, %p112
      %s114 = ssub.s32 %s17, %s24
      %p115 = scmp.eq.s32.totalorder %s114, 0
      %s117 = sadd.s32 %s116, 1
      %s118 = scalar_select %p115, %s116, %s117
      %p121 = pneg %p115
      %p122 = scmp.eq.s32.totalorder %s17, 1
      %p123 = por %p121, %p122
      %p124 = scmp.ne.s32.totalorder %s116, %s119
      %p125 = scmp.eq.s32.totalorder %s17, 0
      %p126 = por %p124, %p125
      %p127 = scmp.ne.s32.totalorder %s116, %s119
      %p128 = scmp.eq.s32.totalorder %s22, 1
      %p129 = por %p127, %p128
      %p130 = scmp.ne.s32.totalorder %s119, %s120
      %p131 = scmp.eq.s32.totalorder %s22, 0
      %p132 = por %p130, %p131
      %p133 = scmp.ne.s32.totalorder %s119, %s120
      %p134 = scmp.eq.s32.totalorder %s23, 1
      %p135 = por %p133, %p134
      %p137 = scmp.ne.s32.totalorder %s120, %s136
      %p138 = scmp.eq.s32.totalorder %s23, 0
      %p139 = por %p137, %p138
      %p140 = scmp.le.s32.totalorder 1, %s17
      %p141 = scmp.lt.s32.totalorder %s17, 3
      %p142 = pnand %p140, %p141
      %p143 = pneg %p142
      // Predicated region
      $region9: #{tpu_custom_call.1} parent=5 // pred_check
        _
      $region10: #{tpu_custom_call.1} parent=5 // pred_check_branch
        %145 = sbr.rel (%p142) target = $region12
      $region11: #{tpu_custom_call.1} parent=5 // pred_region
        %s146 = ssub.s32 %s17, 1
        // Predicated region
        $region13: #{tpu_custom_call.1} parent=11 // pred_check
          %p147 = pneg %p64
        $region14: #{tpu_custom_call.1} parent=11 // pred_check_branch
          %149 = sbr.rel (%p147) target = $region16
        $region15: #{tpu_custom_call.1} parent=11 // pred_region
          %s151 = ssub.s32 16384, 16384
          %152 = vsyncadd [#allocation6], %s151
          %s153 = sshll.u32 [#allocation5], 4
          %s154 = int_to_ptr.vmem [resolvable:$true] %s153
          %159 = dma.hbm_to_vmem [thread:$0]  %s1, 16384, %s154, [#allocation6], 256, 256, 16
        $region16: #{tpu_custom_call.1} parent=11 // pred_fallthru
          _
        // Predicated region
        $region17: #{tpu_custom_call.1} parent=11 // pred_check
          %p160 = pneg %p85
        $region18: #{tpu_custom_call.1} parent=11 // pred_check_branch
          %162 = sbr.rel (%p160) target = $region20
        $region19: #{tpu_custom_call.1} parent=11 // pred_region
          _
        $region20: #{tpu_custom_call.1} parent=11 // pred_fallthru
          _
        // Predicated region
        $region21: #{tpu_custom_call.1} parent=11 // pred_check
          %p163 = pneg %p106
        $region22: #{tpu_custom_call.1} parent=11 // pred_check_branch
          %165 = sbr.rel (%p163) target = $region24
        $region23: #{tpu_custom_call.1} parent=11 // pred_region
          %s167 = ssub.s32 4096, 4096
          %168 = vsyncadd [#allocation6], %s167
          %s169 = sshll.u32 [#allocation7], 4
          %s170 = int_to_ptr.vmem [resolvable:$true] %s169
          %175 = dma.hbm_to_vmem [thread:$0]  %s3, 4096, %s170, [#allocation6], 64, 64, 4
        $region24: #{tpu_custom_call.1} parent=11 // pred_fallthru
          _
      $region12: #{tpu_custom_call.1} parent=5 // pred_fallthru
        _
      %p176 = scmp.lt.s32.totalorder %s17, 2
      // Predicated region
      $region25: #{tpu_custom_call.1} parent=5 // pred_check
        %p177 = pneg %p176
      $region26: #{tpu_custom_call.1} parent=5 // pred_check_branch
        %179 = sbr.rel (%p177) target = $region28
      $region27: #{tpu_custom_call.1} parent=5 // pred_region
        // Predicated region
        $region29: #{tpu_custom_call.1} parent=27 // pred_check
          %p180 = pneg %p37
        $region30: #{tpu_custom_call.1} parent=27 // pred_check_branch
          %182 = sbr.rel (%p180) target = $region32
        $region31: #{tpu_custom_call.1} parent=27 // pred_region
          %s183 = sand.u32 %s27, 1
          %s184 = scalar_lea.sflag [#allocation3], %s183
          %s185 = sand.u32 %s27, 1
          %s186 = smul.addr %s185, 256
          %s187 = scalar_lea.vmem [#allocation2], %s186
          %s188 = smul.u32 16, %s17
          %s190 = ssub.s32 4096, 4096
          %191 = vsyncadd %s184, %s190
          %s192 = smul.addr %s188, 4
          %s193 = smul.addr %s192, 64
          %s194 = scalar_lea.hbm %s0, %s193
          %s195 = sshll.u32 %s187, 4
          %s196 = int_to_ptr.vmem [resolvable:$true] %s195
          %201 = dma.hbm_to_vmem [thread:$0]  %s194, 4096, %s196, %s184, 256, 256, 16
        $region32: #{tpu_custom_call.1} parent=27 // pred_fallthru
          _
      $region28: #{tpu_custom_call.1} parent=5 // pred_fallthru
        _
      %p202 = scmp.le.s32.totalorder 1, %s17
      %p203 = scmp.lt.s32.totalorder %s17, 3
      %p204 = pnand %p202, %p203
      %p205 = pneg %p204
      // Predicated region
      $region33: #{tpu_custom_call.1} parent=5 // pred_check
        _
      $region34: #{tpu_custom_call.1} parent=5 // pred_check_branch
        %207 = sbr.rel (%p204) target = $region36
      $region35: #{tpu_custom_call.1} parent=5 // pred_region
        %s208 = ssub.s32 %s17, 1
        %s209 = sand.u32 %s30, 1
        %s210 = scalar_lea.sflag [#allocation3], %s209
        %s211 = sand.u32 %s30, 1
        %s212 = smul.addr %s211, 256
        %s213 = scalar_lea.vmem [#allocation2], %s212
        // Predicated region
        $region37: #{tpu_custom_call.1} parent=35 // pred_check
          %p214 = pneg %p43
        $region38: #{tpu_custom_call.1} parent=35 // pred_check_branch
          %216 = sbr.rel (%p214) target = $region40
        $region39: #{tpu_custom_call.1} parent=35 // pred_region
          %217 = dma.done %s210, 4096
        $region40: #{tpu_custom_call.1} parent=35 // pred_fallthru
          _
        // Predicated region
        $region41: #{tpu_custom_call.1} parent=35 // pred_check
          %p218 = pneg %p64
        $region42: #{tpu_custom_call.1} parent=35 // pred_check_branch
          %220 = sbr.rel (%p218) target = $region44
        $region43: #{tpu_custom_call.1} parent=35 // pred_region
          %221 = dma.done [#allocation6], 16384
        $region44: #{tpu_custom_call.1} parent=35 // pred_fallthru
          _
        // Predicated region
        $region45: #{tpu_custom_call.1} parent=35 // pred_check
          %p222 = pneg %p106
        $region46: #{tpu_custom_call.1} parent=35 // pred_check_branch
          %224 = sbr.rel (%p222) target = $region48
        $region47: #{tpu_custom_call.1} parent=35 // pred_region
          %225 = dma.done [#allocation6], 4096
        $region48: #{tpu_custom_call.1} parent=35 // pred_fallthru
          _
        %s226 = sand.u32 %s30, 1
        %s227 = scalar_lea.sflag [#allocation3], %s226
        %s228 = sand.u32 %s30, 1
        %s229 = smul.addr %s228, 256
        %s230 = scalar_lea.vmem [#allocation2], %s229
        %p231 = pneg %p43
        %p232 = pneg %p40
        %p233 = pneg %p64
        %p234 = pneg %p61
        %p235 = pneg %p85
        %p236 = pneg %p82
        %p237 = pneg %p106
        %p238 = pneg %p103
        %p239 = pneg %p132
        %p240 = pneg %p129
        %s241 = sand.u32 %s119, 1
        %s242 = scalar_lea.sflag [#allocation4], %s241
        %s243 = sand.u32 %s119, 1
        %s244 = smul.addr %s243, 128
        %s245 = scalar_lea.vmem [#allocation8], %s244
        %s246 = smul.u32 16, %s22
        %s247 = smul.u32 16, %s22
        %v249 = vld [vmem:[%s213] sm:$0xff]
        %v250 = vld [vmem:[%s213 + $0x8] sm:$0xff]
        %v251 = vld [vmem:[%s213 + $0x10] sm:$0xff]
        %v252 = vld [vmem:[%s213 + $0x18] sm:$0xff]
        %v253 = vld [vmem:[%s213 + $0x20] sm:$0xff]
        %v254 = vld [vmem:[%s213 + $0x28] sm:$0xff]
        %v255 = vld [vmem:[%s213 + $0x30] sm:$0xff]
        %v256 = vld [vmem:[%s213 + $0x38] sm:$0xff]
        %v257 = vld [vmem:[%s213 + $0x40] sm:$0xff]
        %v258 = vld [vmem:[%s213 + $0x48] sm:$0xff]
        %v259 = vld [vmem:[%s213 + $0x50] sm:$0xff]
        %v260 = vld [vmem:[%s213 + $0x58] sm:$0xff]
        %v261 = vld [vmem:[%s213 + $0x60] sm:$0xff]
        %v262 = vld [vmem:[%s213 + $0x68] sm:$0xff]
        %v263 = vld [vmem:[%s213 + $0x70] sm:$0xff]
        %v264 = vld [vmem:[%s213 + $0x78] sm:$0xff]
        %v265 = vld [vmem:[%s213 + $0x80] sm:$0xff]
        %v266 = vld [vmem:[%s213 + $0x88] sm:$0xff]
        %v267 = vld [vmem:[%s213 + $0x90] sm:$0xff]
        %v268 = vld [vmem:[%s213 + $0x98] sm:$0xff]
        %v269 = vld [vmem:[%s213 + $0xa0] sm:$0xff]
        %v270 = vld [vmem:[%s213 + $0xa8] sm:$0xff]
        %v271 = vld [vmem:[%s213 + $0xb0] sm:$0xff]
        %v272 = vld [vmem:[%s213 + $0xb8] sm:$0xff]
        %v273 = vld [vmem:[%s213 + $0xc0] sm:$0xff]
        %v274 = vld [vmem:[%s213 + $0xc8] sm:$0xff]
        %v275 = vld [vmem:[%s213 + $0xd0] sm:$0xff]
        %v276 = vld [vmem:[%s213 + $0xd8] sm:$0xff]
        %v277 = vld [vmem:[%s213 + $0xe0] sm:$0xff]
        %v278 = vld [vmem:[%s213 + $0xe8] sm:$0xff]
        %v279 = vld [vmem:[%s213 + $0xf0] sm:$0xff]
        %v280 = vld [vmem:[%s213 + $0xf8] sm:$0xff]
        %v281 = vld [vmem:[#allocation5] sm:$0xff]
        %v282 = vld [vmem:[#allocation5 + $0x8] sm:$0xff]
        %v283 = vld [vmem:[#allocation5 + $0x10] sm:$0xff]
        %v284 = vld [vmem:[#allocation5 + $0x18] sm:$0xff]
        %v285 = vld [vmem:[#allocation5 + $0x20] sm:$0xff]
        %v286 = vld [vmem:[#allocation5 + $0x28] sm:$0xff]
        %v287 = vld [vmem:[#allocation5 + $0x30] sm:$0xff]
        %v288 = vld [vmem:[#allocation5 + $0x38] sm:$0xff]
        %v289 = vld [vmem:[#allocation5 + $0x40] sm:$0xff]
        %v290 = vld [vmem:[#allocation5 + $0x48] sm:$0xff]
        %v291 = vld [vmem:[#allocation5 + $0x50] sm:$0xff]
        %v292 = vld [vmem:[#allocation5 + $0x58] sm:$0xff]
        %v293 = vld [vmem:[#allocation5 + $0x60] sm:$0xff]
        %v294 = vld [vmem:[#allocation5 + $0x68] sm:$0xff]
        %v295 = vld [vmem:[#allocation5 + $0x70] sm:$0xff]
        %v296 = vld [vmem:[#allocation5 + $0x78] sm:$0xff]
        %v297 = vld [vmem:[#allocation5 + $0x80] sm:$0xff]
        %v298 = vld [vmem:[#allocation5 + $0x88] sm:$0xff]
        %v299 = vld [vmem:[#allocation5 + $0x90] sm:$0xff]
        %v300 = vld [vmem:[#allocation5 + $0x98] sm:$0xff]
        %v301 = vld [vmem:[#allocation5 + $0xa0] sm:$0xff]
        %v302 = vld [vmem:[#allocation5 + $0xa8] sm:$0xff]
        %v303 = vld [vmem:[#allocation5 + $0xb0] sm:$0xff]
        %v304 = vld [vmem:[#allocation5 + $0xb8] sm:$0xff]
        %v305 = vld [vmem:[#allocation5 + $0xc0] sm:$0xff]
        %v306 = vld [vmem:[#allocation5 + $0xc8] sm:$0xff]
        %v307 = vld [vmem:[#allocation5 + $0xd0] sm:$0xff]
        %v308 = vld [vmem:[#allocation5 + $0xd8] sm:$0xff]
        %v309 = vld [vmem:[#allocation5 + $0xe0] sm:$0xff]
        %v310 = vld [vmem:[#allocation5 + $0xe8] sm:$0xff]
        %v311 = vld [vmem:[#allocation5 + $0xf0] sm:$0xff]
        %v312 = vld [vmem:[#allocation5 + $0xf8] sm:$0xff]
        %v313 = vld [vmem:[#allocation5 + $0x100] sm:$0xff]
        %v314 = vld [vmem:[#allocation5 + $0x108] sm:$0xff]
        %v315 = vld [vmem:[#allocation5 + $0x110] sm:$0xff]
        %v316 = vld [vmem:[#allocation5 + $0x118] sm:$0xff]
        %v317 = vld [vmem:[#allocation5 + $0x120] sm:$0xff]
        %v318 = vld [vmem:[#allocation5 + $0x128] sm:$0xff]
        %v319 = vld [vmem:[#allocation5 + $0x130] sm:$0xff]
        %v320 = vld [vmem:[#allocation5 + $0x138] sm:$0xff]
        %v321 = vld [vmem:[#allocation5 + $0x140] sm:$0xff]
        %v322 = vld [vmem:[#allocation5 + $0x148] sm:$0xff]
        %v323 = vld [vmem:[#allocation5 + $0x150] sm:$0xff]
        %v324 = vld [vmem:[#allocation5 + $0x158] sm:$0xff]
        %v325 = vld [vmem:[#allocation5 + $0x160] sm:$0xff]
        %v326 = vld [vmem:[#allocation5 + $0x168] sm:$0xff]
        %v327 = vld [vmem:[#allocation5 + $0x170] sm:$0xff]
        %v328 = vld [vmem:[#allocation5 + $0x178] sm:$0xff]
        %v329 = vld [vmem:[#allocation5 + $0x180] sm:$0xff]
        %v330 = vld [vmem:[#allocation5 + $0x188] sm:$0xff]
        %v331 = vld [vmem:[#allocation5 + $0x190] sm:$0xff]
        %v332 = vld [vmem:[#allocation5 + $0x198] sm:$0xff]
        %v333 = vld [vmem:[#allocation5 + $0x1a0] sm:$0xff]
        %v334 = vld [vmem:[#allocation5 + $0x1a8] sm:$0xff]
        %v335 = vld [vmem:[#allocation5 + $0x1b0] sm:$0xff]
        %v336 = vld [vmem:[#allocation5 + $0x1b8] sm:$0xff]
        %v337 = vld [vmem:[#allocation5 + $0x1c0] sm:$0xff]
        %v338 = vld [vmem:[#allocation5 + $0x1c8] sm:$0xff]
        %v339 = vld [vmem:[#allocation5 + $0x1d0] sm:$0xff]
        %v340 = vld [vmem:[#allocation5 + $0x1d8] sm:$0xff]
        %v341 = vld [vmem:[#allocation5 + $0x1e0] sm:$0xff]
        %v342 = vld [vmem:[#allocation5 + $0x1e8] sm:$0xff]
        %v343 = vld [vmem:[#allocation5 + $0x1f0] sm:$0xff]
        %v344 = vld [vmem:[#allocation5 + $0x1f8] sm:$0xff]
        %v345 = vld [vmem:[#allocation5 + $0x200] sm:$0xff]
        %v346 = vld [vmem:[#allocation5 + $0x208] sm:$0xff]
        %v347 = vld [vmem:[#allocation5 + $0x210] sm:$0xff]
        %v348 = vld [vmem:[#allocation5 + $0x218] sm:$0xff]
        %v349 = vld [vmem:[#allocation5 + $0x220] sm:$0xff]
        %v350 = vld [vmem:[#allocation5 + $0x228] sm:$0xff]
        %v351 = vld [vmem:[#allocation5 + $0x230] sm:$0xff]
        %v352 = vld [vmem:[#allocation5 + $0x238] sm:$0xff]
        %v353 = vld [vmem:[#allocation5 + $0x240] sm:$0xff]
        %v354 = vld [vmem:[#allocation5 + $0x248] sm:$0xff]
        %v355 = vld [vmem:[#allocation5 + $0x250] sm:$0xff]
        %v356 = vld [vmem:[#allocation5 + $0x258] sm:$0xff]
        %v357 = vld [vmem:[#allocation5 + $0x260] sm:$0xff]
        %v358 = vld [vmem:[#allocation5 + $0x268] sm:$0xff]
        %v359 = vld [vmem:[#allocation5 + $0x270] sm:$0xff]
        %v360 = vld [vmem:[#allocation5 + $0x278] sm:$0xff]
        %v361 = vld [vmem:[#allocation5 + $0x280] sm:$0xff]
        %v362 = vld [vmem:[#allocation5 + $0x288] sm:$0xff]
        %v363 = vld [vmem:[#allocation5 + $0x290] sm:$0xff]
        %v364 = vld [vmem:[#allocation5 + $0x298] sm:$0xff]
        %v365 = vld [vmem:[#allocation5 + $0x2a0] sm:$0xff]
        %v366 = vld [vmem:[#allocation5 + $0x2a8] sm:$0xff]
        %v367 = vld [vmem:[#allocation5 + $0x2b0] sm:$0xff]
        %v368 = vld [vmem:[#allocation5 + $0x2b8] sm:$0xff]
        %v369 = vld [vmem:[#allocation5 + $0x2c0] sm:$0xff]
        %v370 = vld [vmem:[#allocation5 + $0x2c8] sm:$0xff]
        %v371 = vld [vmem:[#allocation5 + $0x2d0] sm:$0xff]
        %v372 = vld [vmem:[#allocation5 + $0x2d8] sm:$0xff]
        %v373 = vld [vmem:[#allocation5 + $0x2e0] sm:$0xff]
        %v374 = vld [vmem:[#allocation5 + $0x2e8] sm:$0xff]
        %v375 = vld [vmem:[#allocation5 + $0x2f0] sm:$0xff]
        %v376 = vld [vmem:[#allocation5 + $0x2f8] sm:$0xff]
        %v377 = vld [vmem:[#allocation5 + $0x300] sm:$0xff]
        %v378 = vld [vmem:[#allocation5 + $0x308] sm:$0xff]
        %v379 = vld [vmem:[#allocation5 + $0x310] sm:$0xff]
        %v380 = vld [vmem:[#allocation5 + $0x318] sm:$0xff]
        %v381 = vld [vmem:[#allocation5 + $0x320] sm:$0xff]
        %v382 = vld [vmem:[#allocation5 + $0x328] sm:$0xff]
        %v383 = vld [vmem:[#allocation5 + $0x330] sm:$0xff]
        %v384 = vld [vmem:[#allocation5 + $0x338] sm:$0xff]
        %v385 = vld [vmem:[#allocation5 + $0x340] sm:$0xff]
        %v386 = vld [vmem:[#allocation5 + $0x348] sm:$0xff]
        %v387 = vld [vmem:[#allocation5 + $0x350] sm:$0xff]
        %v388 = vld [vmem:[#allocation5 + $0x358] sm:$0xff]
        %v389 = vld [vmem:[#allocation5 + $0x360] sm:$0xff]
        %v390 = vld [vmem:[#allocation5 + $0x368] sm:$0xff]
        %v391 = vld [vmem:[#allocation5 + $0x370] sm:$0xff]
        %v392 = vld [vmem:[#allocation5 + $0x378] sm:$0xff]
        %v393 = vld [vmem:[#allocation5 + $0x380] sm:$0xff]
        %v394 = vld [vmem:[#allocation5 + $0x388] sm:$0xff]
        %v395 = vld [vmem:[#allocation5 + $0x390] sm:$0xff]
        %v396 = vld [vmem:[#allocation5 + $0x398] sm:$0xff]
        %v397 = vld [vmem:[#allocation5 + $0x3a0] sm:$0xff]
        %v398 = vld [vmem:[#allocation5 + $0x3a8] sm:$0xff]
        %v399 = vld [vmem:[#allocation5 + $0x3b0] sm:$0xff]
        %v400 = vld [vmem:[#allocation5 + $0x3b8] sm:$0xff]
        %v401 = vld [vmem:[#allocation5 + $0x3c0] sm:$0xff]
        %v402 = vld [vmem:[#allocation5 + $0x3c8] sm:$0xff]
        %v403 = vld [vmem:[#allocation5 + $0x3d0] sm:$0xff]
        %v404 = vld [vmem:[#allocation5 + $0x3d8] sm:$0xff]
        %v405 = vld [vmem:[#allocation5 + $0x3e0] sm:$0xff]
        %v406 = vld [vmem:[#allocation5 + $0x3e8] sm:$0xff]
        %v407 = vld [vmem:[#allocation5 + $0x3f0] sm:$0xff]
        %v408 = vld [vmem:[#allocation5 + $0x3f8] sm:$0xff]
        %v409 = vld [vmem:[%s2] sm:$0xf]
        %v411 = vlaneseq
        %v412 = vshrl.u32 %v411, 7
        %v413 = vsub.s32 0, %v412
        %v414 = vrot.slane %v409, %v413
        %v415 = vlaneseq
        %v416 = vshrl.u32 %v415, 7
        %v417 = vsub.s32 1, %v416
        %v418 = vrot.slane %v409, %v417
        %v419 = vlaneseq
        %v420 = vshrl.u32 %v419, 7
        %v421 = vsub.s32 2, %v420
        %v422 = vrot.slane %v409, %v421
        %v423 = vlaneseq
        %v424 = vshrl.u32 %v423, 7
        %v425 = vsub.s32 3, %v424
        %v426 = vrot.slane %v409, %v425
        %v463 = vunpack.c.l.b16 %v249
        %v464 = vunpack.c.h.b16 %v249
        %v465 = vunpack.c.l.b16 %v250
        %v466 = vunpack.c.h.b16 %v250
        %v467 = vunpack.c.l.b16 %v251
        %v468 = vunpack.c.h.b16 %v251
        %v469 = vunpack.c.l.b16 %v252
        %v470 = vunpack.c.h.b16 %v252
        %v471 = vunpack.c.l.b16 %v253
        %v472 = vunpack.c.h.b16 %v253
        %v473 = vunpack.c.l.b16 %v254
        %v474 = vunpack.c.h.b16 %v254
        %v475 = vunpack.c.l.b16 %v255
        %v476 = vunpack.c.h.b16 %v255
        %v477 = vunpack.c.l.b16 %v256
        %v478 = vunpack.c.h.b16 %v256
        %v479 = vunpack.c.l.b16 %v257
        %v480 = vunpack.c.h.b16 %v257
        %v481 = vunpack.c.l.b16 %v258
        %v482 = vunpack.c.h.b16 %v258
        %v483 = vunpack.c.l.b16 %v259
        %v484 = vunpack.c.h.b16 %v259
        %v485 = vunpack.c.l.b16 %v260
        %v486 = vunpack.c.h.b16 %v260
        %v487 = vunpack.c.l.b16 %v261
        %v488 = vunpack.c.h.b16 %v261
        %v489 = vunpack.c.l.b16 %v262
        %v490 = vunpack.c.h.b16 %v262
        %v491 = vunpack.c.l.b16 %v263
        %v492 = vunpack.c.h.b16 %v263
        %v493 = vunpack.c.l.b16 %v264
        %v494 = vunpack.c.h.b16 %v264
        %v495 = vunpack.c.l.b16 %v265
        %v496 = vunpack.c.h.b16 %v265
        %v497 = vunpack.c.l.b16 %v266
        %v498 = vunpack.c.h.b16 %v266
        %v499 = vunpack.c.l.b16 %v267
        %v500 = vunpack.c.h.b16 %v267
        %v501 = vunpack.c.l.b16 %v268
        %v502 = vunpack.c.h.b16 %v268
        %v503 = vunpack.c.l.b16 %v269
        %v504 = vunpack.c.h.b16 %v269
        %v505 = vunpack.c.l.b16 %v270
        %v506 = vunpack.c.h.b16 %v270
        %v507 = vunpack.c.l.b16 %v271
        %v508 = vunpack.c.h.b16 %v271
        %v509 = vunpack.c.l.b16 %v272
        %v510 = vunpack.c.h.b16 %v272
        %v511 = vunpack.c.l.b16 %v273
        %v512 = vunpack.c.h.b16 %v273
        %v513 = vunpack.c.l.b16 %v274
        %v514 = vunpack.c.h.b16 %v274
        %v515 = vunpack.c.l.b16 %v275
        %v516 = vunpack.c.h.b16 %v275
        %v517 = vunpack.c.l.b16 %v276
        %v518 = vunpack.c.h.b16 %v276
        %v519 = vunpack.c.l.b16 %v277
        %v520 = vunpack.c.h.b16 %v277
        %v521 = vunpack.c.l.b16 %v278
        %v522 = vunpack.c.h.b16 %v278
        %v523 = vunpack.c.l.b16 %v279
        %v524 = vunpack.c.h.b16 %v279
        %v525 = vunpack.c.l.b16 %v280
        %v526 = vunpack.c.h.b16 %v280
        %v527 = vpack.c.b16 %v467, %v463
        %v528 = vpack.c.b16 %v468, %v464
        %v529 = vpack.c.b16 %v469, %v465
        %v530 = vpack.c.b16 %v470, %v466
        %v531 = vpack.c.b16 %v475, %v471
        %v532 = vpack.c.b16 %v476, %v472
        %v533 = vpack.c.b16 %v477, %v473
        %v534 = vpack.c.b16 %v478, %v474
        %v535 = vpack.c.b16 %v483, %v479
        %v536 = vpack.c.b16 %v484, %v480
        %v537 = vpack.c.b16 %v485, %v481
        %v538 = vpack.c.b16 %v486, %v482
        %v539 = vpack.c.b16 %v491, %v487
        %v540 = vpack.c.b16 %v492, %v488
        %v541 = vpack.c.b16 %v493, %v489
        %v542 = vpack.c.b16 %v494, %v490
        %v543 = vpack.c.b16 %v499, %v495
        %v544 = vpack.c.b16 %v500, %v496
        %v545 = vpack.c.b16 %v501, %v497
        %v546 = vpack.c.b16 %v502, %v498
        %v547 = vpack.c.b16 %v507, %v503
        %v548 = vpack.c.b16 %v508, %v504
        %v549 = vpack.c.b16 %v509, %v505
        %v550 = vpack.c.b16 %v510, %v506
        %v551 = vpack.c.b16 %v515, %v511
        %v552 = vpack.c.b16 %v516, %v512
        %v553 = vpack.c.b16 %v517, %v513
        %v554 = vpack.c.b16 %v518, %v514
        %v555 = vpack.c.b16 %v523, %v519
        %v556 = vpack.c.b16 %v524, %v520
        %v557 = vpack.c.b16 %v525, %v521
        %v558 = vpack.c.b16 %v526, %v522
        %v719 = vunpack.c.l.b16 %v281
        %v720 = vunpack.c.h.b16 %v281
        %v721 = vunpack.c.l.b16 %v282
        %v722 = vunpack.c.h.b16 %v282
        %v723 = vunpack.c.l.b16 %v283
        %v724 = vunpack.c.h.b16 %v283
        %v725 = vunpack.c.l.b16 %v284
        %v726 = vunpack.c.h.b16 %v284
        %v727 = vunpack.c.l.b16 %v285
        %v728 = vunpack.c.h.b16 %v285
        %v729 = vunpack.c.l.b16 %v286
        %v730 = vunpack.c.h.b16 %v286
        %v731 = vunpack.c.l.b16 %v287
        %v732 = vunpack.c.h.b16 %v287
        %v733 = vunpack.c.l.b16 %v288
        %v734 = vunpack.c.h.b16 %v288
        %v735 = vunpack.c.l.b16 %v289
        %v736 = vunpack.c.h.b16 %v289
        %v737 = vunpack.c.l.b16 %v290
        %v738 = vunpack.c.h.b16 %v290
        %v739 = vunpack.c.l.b16 %v291
        %v740 = vunpack.c.h.b16 %v291
        %v741 = vunpack.c.l.b16 %v292
        %v742 = vunpack.c.h.b16 %v292
        %v743 = vunpack.c.l.b16 %v293
        %v744 = vunpack.c.h.b16 %v293
        %v745 = vunpack.c.l.b16 %v294
        %v746 = vunpack.c.h.b16 %v294
        %v747 = vunpack.c.l.b16 %v295
        %v748 = vunpack.c.h.b16 %v295
        %v749 = vunpack.c.l.b16 %v296
        %v750 = vunpack.c.h.b16 %v296
        %v751 = vunpack.c.l.b16 %v297
        %v752 = vunpack.c.h.b16 %v297
        %v753 = vunpack.c.l.b16 %v298
        %v754 = vunpack.c.h.b16 %v298
        %v755 = vunpack.c.l.b16 %v299
        %v756 = vunpack.c.h.b16 %v299
        %v757 = vunpack.c.l.b16 %v300
        %v758 = vunpack.c.h.b16 %v300
        %v759 = vunpack.c.l.b16 %v301
        %v760 = vunpack.c.h.b16 %v301
        %v761 = vunpack.c.l.b16 %v302
        %v762 = vunpack.c.h.b16 %v302
        %v763 = vunpack.c.l.b16 %v303
        %v764 = vunpack.c.h.b16 %v303
        %v765 = vunpack.c.l.b16 %v304
        %v766 = vunpack.c.h.b16 %v304
        %v767 = vunpack.c.l.b16 %v305
        %v768 = vunpack.c.h.b16 %v305
        %v769 = vunpack.c.l.b16 %v306
        %v770 = vunpack.c.h.b16 %v306
        %v771 = vunpack.c.l.b16 %v307
        %v772 = vunpack.c.h.b16 %v307
        %v773 = vunpack.c.l.b16 %v308
        %v774 = vunpack.c.h.b16 %v308
        %v775 = vunpack.c.l.b16 %v309
        %v776 = vunpack.c.h.b16 %v309
        %v777 = vunpack.c.l.b16 %v310
        %v778 = vunpack.c.h.b16 %v310
        %v779 = vunpack.c.l.b16 %v311
        %v780 = vunpack.c.h.b16 %v311
        %v781 = vunpack.c.l.b16 %v312
        %v782 = vunpack.c.h.b16 %v312
        %v783 = vunpack.c.l.b16 %v313
        %v784 = vunpack.c.h.b16 %v313
        %v785 = vunpack.c.l.b16 %v314
        %v786 = vunpack.c.h.b16 %v314
        %v787 = vunpack.c.l.b16 %v315
        %v788 = vunpack.c.h.b16 %v315
        %v789 = vunpack.c.l.b16 %v316
        %v790 = vunpack.c.h.b16 %v316
        %v791 = vunpack.c.l.b16 %v317
        %v792 = vunpack.c.h.b16 %v317
        %v793 = vunpack.c.l.b16 %v318
        %v794 = vunpack.c.h.b16 %v318
        %v795 = vunpack.c.l.b16 %v319
        %v796 = vunpack.c.h.b16 %v319
        %v797 = vunpack.c.l.b16 %v320
        %v798 = vunpack.c.h.b16 %v320
        %v799 = vunpack.c.l.b16 %v321
        %v800 = vunpack.c.h.b16 %v321
        %v801 = vunpack.c.l.b16 %v322
        %v802 = vunpack.c.h.b16 %v322
        %v803 = vunpack.c.l.b16 %v323
        %v804 = vunpack.c.h.b16 %v323
        %v805 = vunpack.c.l.b16 %v324
        %v806 = vunpack.c.h.b16 %v324
        %v807 = vunpack.c.l.b16 %v325
        %v808 = vunpack.c.h.b16 %v325
        %v809 = vunpack.c.l.b16 %v326
        %v810 = vunpack.c.h.b16 %v326
        %v811 = vunpack.c.l.b16 %v327
        %v812 = vunpack.c.h.b16 %v327
        %v813 = vunpack.c.l.b16 %v328
        %v814 = vunpack.c.h.b16 %v328
        %v815 = vunpack.c.l.b16 %v329
        %v816 = vunpack.c.h.b16 %v329
        %v817 = vunpack.c.l.b16 %v330
        %v818 = vunpack.c.h.b16 %v330
        %v819 = vunpack.c.l.b16 %v331
        %v820 = vunpack.c.h.b16 %v331
        %v821 = vunpack.c.l.b16 %v332
        %v822 = vunpack.c.h.b16 %v332
        %v823 = vunpack.c.l.b16 %v333
        %v824 = vunpack.c.h.b16 %v333
        %v825 = vunpack.c.l.b16 %v334
        %v826 = vunpack.c.h.b16 %v334
        %v827 = vunpack.c.l.b16 %v335
        %v828 = vunpack.c.h.b16 %v335
        %v829 = vunpack.c.l.b16 %v336
        %v830 = vunpack.c.h.b16 %v336
        %v831 = vunpack.c.l.b16 %v337
        %v832 = vunpack.c.h.b16 %v337
        %v833 = vunpack.c.l.b16 %v338
        %v834 = vunpack.c.h.b16 %v338
        %v835 = vunpack.c.l.b16 %v339
        %v836 = vunpack.c.h.b16 %v339
        %v837 = vunpack.c.l.b16 %v340
        %v838 = vunpack.c.h.b16 %v340
        %v839 = vunpack.c.l.b16 %v341
        %v840 = vunpack.c.h.b16 %v341
        %v841 = vunpack.c.l.b16 %v342
        %v842 = vunpack.c.h.b16 %v342
        %v843 = vunpack.c.l.b16 %v343
        %v844 = vunpack.c.h.b16 %v343
        %v845 = vunpack.c.l.b16 %v344
        %v846 = vunpack.c.h.b16 %v344
        %v847 = vunpack.c.l.b16 %v345
        %v848 = vunpack.c.h.b16 %v345
        %v849 = vunpack.c.l.b16 %v346
        %v850 = vunpack.c.h.b16 %v346
        %v851 = vunpack.c.l.b16 %v347
        %v852 = vunpack.c.h.b16 %v347
        %v853 = vunpack.c.l.b16 %v348
        %v854 = vunpack.c.h.b16 %v348
        %v855 = vunpack.c.l.b16 %v349
        %v856 = vunpack.c.h.b16 %v349
        %v857 = vunpack.c.l.b16 %v350
        %v858 = vunpack.c.h.b16 %v350
        %v859 = vunpack.c.l.b16 %v351
        %v860 = vunpack.c.h.b16 %v351
        %v861 = vunpack.c.l.b16 %v352
        %v862 = vunpack.c.h.b16 %v352
        %v863 = vunpack.c.l.b16 %v353
        %v864 = vunpack.c.h.b16 %v353
        %v865 = vunpack.c.l.b16 %v354
        %v866 = vunpack.c.h.b16 %v354
        %v867 = vunpack.c.l.b16 %v355
        %v868 = vunpack.c.h.b16 %v355
        %v869 = vunpack.c.l.b16 %v356
        %v870 = vunpack.c.h.b16 %v356
        %v871 = vunpack.c.l.b16 %v357
        %v872 = vunpack.c.h.b16 %v357
        %v873 = vunpack.c.l.b16 %v358
        %v874 = vunpack.c.h.b16 %v358
        %v875 = vunpack.c.l.b16 %v359
        %v876 = vunpack.c.h.b16 %v359
        %v877 = vunpack.c.l.b16 %v360
        %v878 = vunpack.c.h.b16 %v360
        %v879 = vunpack.c.l.b16 %v361
        %v880 = vunpack.c.h.b16 %v361
        %v881 = vunpack.c.l.b16 %v362
        %v882 = vunpack.c.h.b16 %v362
        %v883 = vunpack.c.l.b16 %v363
        %v884 = vunpack.c.h.b16 %v363
        %v885 = vunpack.c.l.b16 %v364
        %v886 = vunpack.c.h.b16 %v364
        %v887 = vunpack.c.l.b16 %v365
        %v888 = vunpack.c.h.b16 %v365
        %v889 = vunpack.c.l.b16 %v366
        %v890 = vunpack.c.h.b16 %v366
        %v891 = vunpack.c.l.b16 %v367
        %v892 = vunpack.c.h.b16 %v367
        %v893 = vunpack.c.l.b16 %v368
        %v894 = vunpack.c.h.b16 %v368
        %v895 = vunpack.c.l.b16 %v369
        %v896 = vunpack.c.h.b16 %v369
        %v897 = vunpack.c.l.b16 %v370
        %v898 = vunpack.c.h.b16 %v370
        %v899 = vunpack.c.l.b16 %v371
        %v900 = vunpack.c.h.b16 %v371
        %v901 = vunpack.c.l.b16 %v372
        %v902 = vunpack.c.h.b16 %v372
        %v903 = vunpack.c.l.b16 %v373
        %v904 = vunpack.c.h.b16 %v373
        %v905 = vunpack.c.l.b16 %v374
        %v906 = vunpack.c.h.b16 %v374
        %v907 = vunpack.c.l.b16 %v375
        %v908 = vunpack.c.h.b16 %v375
        %v909 = vunpack.c.l.b16 %v376
        %v910 = vunpack.c.h.b16 %v376
        %v911 = vunpack.c.l.b16 %v377
        %v912 = vunpack.c.h.b16 %v377
        %v913 = vunpack.c.l.b16 %v378
        %v914 = vunpack.c.h.b16 %v378
        %v915 = vunpack.c.l.b16 %v379
        %v916 = vunpack.c.h.b16 %v379
        %v917 = vunpack.c.l.b16 %v380
        %v918 = vunpack.c.h.b16 %v380
        %v919 = vunpack.c.l.b16 %v381
        %v920 = vunpack.c.h.b16 %v381
        %v921 = vunpack.c.l.b16 %v382
        %v922 = vunpack.c.h.b16 %v382
        %v923 = vunpack.c.l.b16 %v383
        %v924 = vunpack.c.h.b16 %v383
        %v925 = vunpack.c.l.b16 %v384
        %v926 = vunpack.c.h.b16 %v384
        %v927 = vunpack.c.l.b16 %v385
        %v928 = vunpack.c.h.b16 %v385
        %v929 = vunpack.c.l.b16 %v386
        %v930 = vunpack.c.h.b16 %v386
        %v931 = vunpack.c.l.b16 %v387
        %v932 = vunpack.c.h.b16 %v387
        %v933 = vunpack.c.l.b16 %v388
        %v934 = vunpack.c.h.b16 %v388
        %v935 = vunpack.c.l.b16 %v389
        %v936 = vunpack.c.h.b16 %v389
        %v937 = vunpack.c.l.b16 %v390
        %v938 = vunpack.c.h.b16 %v390
        %v939 = vunpack.c.l.b16 %v391
        %v940 = vunpack.c.h.b16 %v391
        %v941 = vunpack.c.l.b16 %v392
        %v942 = vunpack.c.h.b16 %v392
        %v943 = vunpack.c.l.b16 %v393
        %v944 = vunpack.c.h.b16 %v393
        %v945 = vunpack.c.l.b16 %v394
        %v946 = vunpack.c.h.b16 %v394
        %v947 = vunpack.c.l.b16 %v395
        %v948 = vunpack.c.h.b16 %v395
        %v949 = vunpack.c.l.b16 %v396
        %v950 = vunpack.c.h.b16 %v396
        %v951 = vunpack.c.l.b16 %v397
        %v952 = vunpack.c.h.b16 %v397
        %v953 = vunpack.c.l.b16 %v398
        %v954 = vunpack.c.h.b16 %v398
        %v955 = vunpack.c.l.b16 %v399
        %v956 = vunpack.c.h.b16 %v399
        %v957 = vunpack.c.l.b16 %v400
        %v958 = vunpack.c.h.b16 %v400
        %v959 = vunpack.c.l.b16 %v401
        %v960 = vunpack.c.h.b16 %v401
        %v961 = vunpack.c.l.b16 %v402
        %v962 = vunpack.c.h.b16 %v402
        %v963 = vunpack.c.l.b16 %v403
        %v964 = vunpack.c.h.b16 %v403
        %v965 = vunpack.c.l.b16 %v404
        %v966 = vunpack.c.h.b16 %v404
        %v967 = vunpack.c.l.b16 %v405
        %v968 = vunpack.c.h.b16 %v405
        %v969 = vunpack.c.l.b16 %v406
        %v970 = vunpack.c.h.b16 %v406
        %v971 = vunpack.c.l.b16 %v407
        %v972 = vunpack.c.h.b16 %v407
        %v973 = vunpack.c.l.b16 %v408
        %v974 = vunpack.c.h.b16 %v408
        %v975 = vpack.c.b16 %v723, %v719
        %v976 = vpack.c.b16 %v724, %v720
        %v977 = vpack.c.b16 %v725, %v721
        %v978 = vpack.c.b16 %v726, %v722
        %v979 = vpack.c.b16 %v731, %v727
        %v980 = vpack.c.b16 %v732, %v728
        %v981 = vpack.c.b16 %v733, %v729
        %v982 = vpack.c.b16 %v734, %v730
        %v983 = vpack.c.b16 %v739, %v735
        %v984 = vpack.c.b16 %v740, %v736
        %v985 = vpack.c.b16 %v741, %v737
        %v986 = vpack.c.b16 %v742, %v738
        %v987 = vpack.c.b16 %v747, %v743
        %v988 = vpack.c.b16 %v748, %v744
        %v989 = vpack.c.b16 %v749, %v745
        %v990 = vpack.c.b16 %v750, %v746
        %v991 = vpack.c.b16 %v755, %v751
        %v992 = vpack.c.b16 %v756, %v752
        %v993 = vpack.c.b16 %v757, %v753
        %v994 = vpack.c.b16 %v758, %v754
        %v995 = vpack.c.b16 %v763, %v759
        %v996 = vpack.c.b16 %v764, %v760
        %v997 = vpack.c.b16 %v765, %v761
        %v998 = vpack.c.b16 %v766, %v762
        %v999 = vpack.c.b16 %v771, %v767
        %v1000 = vpack.c.b16 %v772, %v768
        %v1001 = vpack.c.b16 %v773, %v769
        %v1002 = vpack.c.b16 %v774, %v770
        %v1003 = vpack.c.b16 %v779, %v775
        %v1004 = vpack.c.b16 %v780, %v776
        %v1005 = vpack.c.b16 %v781, %v777
        %v1006 = vpack.c.b16 %v782, %v778
        %v1007 = vpack.c.b16 %v787, %v783
        %v1008 = vpack.c.b16 %v788, %v784
        %v1009 = vpack.c.b16 %v789, %v785
        %v1010 = vpack.c.b16 %v790, %v786
        %v1011 = vpack.c.b16 %v795, %v791
        %v1012 = vpack.c.b16 %v796, %v792
        %v1013 = vpack.c.b16 %v797, %v793
        %v1014 = vpack.c.b16 %v798, %v794
        %v1015 = vpack.c.b16 %v803, %v799
        %v1016 = vpack.c.b16 %v804, %v800
        %v1017 = vpack.c.b16 %v805, %v801
        %v1018 = vpack.c.b16 %v806, %v802
        %v1019 = vpack.c.b16 %v811, %v807
        %v1020 = vpack.c.b16 %v812, %v808
        %v1021 = vpack.c.b16 %v813, %v809
        %v1022 = vpack.c.b16 %v814, %v810
        %v1023 = vpack.c.b16 %v819, %v815
        %v1024 = vpack.c.b16 %v820, %v816
        %v1025 = vpack.c.b16 %v821, %v817
        %v1026 = vpack.c.b16 %v822, %v818
        %v1027 = vpack.c.b16 %v827, %v823
        %v1028 = vpack.c.b16 %v828, %v824
        %v1029 = vpack.c.b16 %v829, %v825
        %v1030 = vpack.c.b16 %v830, %v826
        %v1031 = vpack.c.b16 %v835, %v831
        %v1032 = vpack.c.b16 %v836, %v832
        %v1033 = vpack.c.b16 %v837, %v833
        %v1034 = vpack.c.b16 %v838, %v834
        %v1035 = vpack.c.b16 %v843, %v839
        %v1036 = vpack.c.b16 %v844, %v840
        %v1037 = vpack.c.b16 %v845, %v841
        %v1038 = vpack.c.b16 %v846, %v842
        %v1039 = vpack.c.b16 %v851, %v847
        %v1040 = vpack.c.b16 %v852, %v848
        %v1041 = vpack.c.b16 %v853, %v849
        %v1042 = vpack.c.b16 %v854, %v850
        %v1043 = vpack.c.b16 %v859, %v855
        %v1044 = vpack.c.b16 %v860, %v856
        %v1045 = vpack.c.b16 %v861, %v857
        %v1046 = vpack.c.b16 %v862, %v858
        %v1047 = vpack.c.b16 %v867, %v863
        %v1048 = vpack.c.b16 %v868, %v864
        %v1049 = vpack.c.b16 %v869, %v865
        %v1050 = vpack.c.b16 %v870, %v866
        %v1051 = vpack.c.b16 %v875, %v871
        %v1052 = vpack.c.b16 %v876, %v872
        %v1053 = vpack.c.b16 %v877, %v873
        %v1054 = vpack.c.b16 %v878, %v874
        %v1055 = vpack.c.b16 %v883, %v879
        %v1056 = vpack.c.b16 %v884, %v880
        %v1057 = vpack.c.b16 %v885, %v881
        %v1058 = vpack.c.b16 %v886, %v882
        %v1059 = vpack.c.b16 %v891, %v887
        %v1060 = vpack.c.b16 %v892, %v888
        %v1061 = vpack.c.b16 %v893, %v889
        %v1062 = vpack.c.b16 %v894, %v890
        %v1063 = vpack.c.b16 %v899, %v895
        %v1064 = vpack.c.b16 %v900, %v896
        %v1065 = vpack.c.b16 %v901, %v897
        %v1066 = vpack.c.b16 %v902, %v898
        %v1067 = vpack.c.b16 %v907, %v903
        %v1068 = vpack.c.b16 %v908, %v904
        %v1069 = vpack.c.b16 %v909, %v905
        %v1070 = vpack.c.b16 %v910, %v906
        %v1071 = vpack.c.b16 %v915, %v911
        %v1072 = vpack.c.b16 %v916, %v912
        %v1073 = vpack.c.b16 %v917, %v913
        %v1074 = vpack.c.b16 %v918, %v914
        %v1075 = vpack.c.b16 %v923, %v919
        %v1076 = vpack.c.b16 %v924, %v920
        %v1077 = vpack.c.b16 %v925, %v921
        %v1078 = vpack.c.b16 %v926, %v922
        %v1079 = vpack.c.b16 %v931, %v927
        %v1080 = vpack.c.b16 %v932, %v928
        %v1081 = vpack.c.b16 %v933, %v929
        %v1082 = vpack.c.b16 %v934, %v930
        %v1083 = vpack.c.b16 %v939, %v935
        %v1084 = vpack.c.b16 %v940, %v936
        %v1085 = vpack.c.b16 %v941, %v937
        %v1086 = vpack.c.b16 %v942, %v938
        %v1087 = vpack.c.b16 %v947, %v943
        %v1088 = vpack.c.b16 %v948, %v944
        %v1089 = vpack.c.b16 %v949, %v945
        %v1090 = vpack.c.b16 %v950, %v946
        %v1091 = vpack.c.b16 %v955, %v951
        %v1092 = vpack.c.b16 %v956, %v952
        %v1093 = vpack.c.b16 %v957, %v953
        %v1094 = vpack.c.b16 %v958, %v954
        %v1095 = vpack.c.b16 %v963, %v959
        %v1096 = vpack.c.b16 %v964, %v960
        %v1097 = vpack.c.b16 %v965, %v961
        %v1098 = vpack.c.b16 %v966, %v962
        %v1099 = vpack.c.b16 %v971, %v967
        %v1100 = vpack.c.b16 %v972, %v968
        %v1101 = vpack.c.b16 %v973, %v969
        %v1102 = vpack.c.b16 %v974, %v970
        %1231 = vmatprep.subr.bf16.mxu0 %v976
        %1232 = vmatpush1.bf16.msra.mxu0 %v975
        %1233 = vmatprep.subr.bf16.mxu0 %v980
        %1234 = vmatpush1.bf16.msra.mxu0 %v979
        %1235 = vmatprep.subr.bf16.mxu0 %v984
        %1236 = vmatpush1.bf16.msra.mxu0 %v983
        %1237 = vmatprep.subr.bf16.mxu0 %v988
        %1238 = vmatpush1.bf16.msra.mxu0 %v987
        %1239 = vmatprep.subr.bf16.mxu0 %v992
        %1240 = vmatpush1.bf16.msra.mxu0 %v991
        %1241 = vmatprep.subr.bf16.mxu0 %v996
        %1242 = vmatpush1.bf16.msra.mxu0 %v995
        %1243 = vmatprep.subr.bf16.mxu0 %v1000
        %1244 = vmatpush1.bf16.msra.mxu0 %v999
        %1245 = vmatprep.subr.bf16.mxu0 %v1004
        %1246 = vmatpush1.bf16.msra.mxu0 %v1003
        %1247 = vmatprep.subr.bf16.mxu0 %v1008
        %1248 = vmatpush1.bf16.msra.mxu0 %v1007
        %1249 = vmatprep.subr.bf16.mxu0 %v1012
        %1250 = vmatpush1.bf16.msra.mxu0 %v1011
        %1251 = vmatprep.subr.bf16.mxu0 %v1016
        %1252 = vmatpush1.bf16.msra.mxu0 %v1015
        %1253 = vmatprep.subr.bf16.mxu0 %v1020
        %1254 = vmatpush1.bf16.msra.mxu0 %v1019
        %1255 = vmatprep.subr.bf16.mxu0 %v1024
        %1256 = vmatpush1.bf16.msra.mxu0 %v1023
        %1257 = vmatprep.subr.bf16.mxu0 %v1028
        %1258 = vmatpush1.bf16.msra.mxu0 %v1027
        %1259 = vmatprep.subr.bf16.mxu0 %v1032
        %1260 = vmatpush1.bf16.msra.mxu0 %v1031
        %1261 = vmatprep.subr.bf16.mxu0 %v1036
        %1262 = vmatpush1.bf16.msra.mxu0 %v1035
        %1263 = vmatprep.mubr.bf16.mxu0 %v528
        %1264 = vmatmul.mubr.bf16.gmra.mrb[0].mxu0 %v527
        %v1265 = vpop.f32.mrb[0].mxu0
        %v1266 = vadd.f32 %v414, %v1265
        %v1267 = vpop.f32.mrb[0].mxu0
        %v1268 = vadd.f32 %v418, %v1267
        %v1269 = vpop.f32.mrb[0].mxu0
        %v1270 = vadd.f32 %v414, %v1269
        %v1271 = vpop.f32.mrb[0].mxu0
        %v1272 = vadd.f32 %v418, %v1271
        %1273 = vmatprep.mubr.bf16.mxu0 %v532
        %1274 = vmatmul.mubr.bf16.gmra.mrb[0].mxu0 %v531
        %v1275 = vpop.f32.mrb[0].mxu0
        %v1276 = vadd.f32 %v414, %v1275
        %v1277 = vpop.f32.mrb[0].mxu0
        %v1278 = vadd.f32 %v418, %v1277
        %v1279 = vpop.f32.mrb[0].mxu0
        %v1280 = vadd.f32 %v414, %v1279
        %v1281 = vpop.f32.mrb[0].mxu0
        %v1282 = vadd.f32 %v418, %v1281
        %1283 = vmatprep.mubr.bf16.mxu0 %v536
        %1284 = vmatmul.mubr.bf16.gmra.mrb[0].mxu0 %v535
        %v1285 = vpop.f32.mrb[0].mxu0
        %v1286 = vadd.f32 %v414, %v1285
        %v1287 = vpop.f32.mrb[0].mxu0
        %v1288 = vadd.f32 %v418, %v1287
        %v1289 = vpop.f32.mrb[0].mxu0
        %v1290 = vadd.f32 %v414, %v1289
        %v1291 = vpop.f32.mrb[0].mxu0
        %v1292 = vadd.f32 %v418, %v1291
        %1293 = vmatprep.mubr.bf16.mxu0 %v540
        %1294 = vmatmul.mubr.bf16.gmra.mrb[0].mxu0 %v539
        %v1295 = vpop.f32.mrb[0].mxu0
        %v1296 = vadd.f32 %v414, %v1295
        %v1297 = vpop.f32.mrb[0].mxu0
        %v1298 = vadd.f32 %v418, %v1297
        %v1299 = vpop.f32.mrb[0].mxu0
        %v1300 = vadd.f32 %v414, %v1299
        %v1301 = vpop.f32.mrb[0].mxu0
        %v1302 = vadd.f32 %v418, %v1301
        %1303 = vmatprep.mubr.bf16.mxu0 %v544
        %1304 = vmatmul.mubr.bf16.gmra.mrb[0].mxu0 %v543
        %v1305 = vpop.f32.mrb[0].mxu0
        %v1306 = vadd.f32 %v414, %v1305
        %v1307 = vpop.f32.mrb[0].mxu0
        %v1308 = vadd.f32 %v418, %v1307
        %v1309 = vpop.f32.mrb[0].mxu0
        %v1310 = vadd.f32 %v414, %v1309
        %v1311 = vpop.f32.mrb[0].mxu0
        %v1312 = vadd.f32 %v418, %v1311
        %1313 = vmatprep.mubr.bf16.mxu0 %v548
        %1314 = vmatmul.mubr.bf16.gmra.mrb[0].mxu0 %v547
        %v1315 = vpop.f32.mrb[0].mxu0
        %v1316 = vadd.f32 %v414, %v1315
        %v1317 = vpop.f32.mrb[0].mxu0
        %v1318 = vadd.f32 %v418, %v1317
        %v1319 = vpop.f32.mrb[0].mxu0
        %v1320 = vadd.f32 %v414, %v1319
        %v1321 = vpop.f32.mrb[0].mxu0
        %v1322 = vadd.f32 %v418, %v1321
        %1323 = vmatprep.mubr.bf16.mxu0 %v552
        %1324 = vmatmul.mubr.bf16.gmra.mrb[0].mxu0 %v551
        %v1325 = vpop.f32.mrb[0].mxu0
        %v1326 = vadd.f32 %v414, %v1325
        %v1327 = vpop.f32.mrb[0].mxu0
        %v1328 = vadd.f32 %v418, %v1327
        %v1329 = vpop.f32.mrb[0].mxu0
        %v1330 = vadd.f32 %v414, %v1329
        %v1331 = vpop.f32.mrb[0].mxu0
        %v1332 = vadd.f32 %v418, %v1331
        %1333 = vmatprep.mubr.bf16.mxu0 %v556
        %1334 = vmatmul.mubr.bf16.gmra.mrb[0].mxu0 %v555
        %v1335 = vpop.f32.mrb[0].mxu0
        %v1336 = vadd.f32 %v414, %v1335
        %v1337 = vpop.f32.mrb[0].mxu0
        %v1338 = vadd.f32 %v418, %v1337
        %v1339 = vpop.f32.mrb[0].mxu0
        %v1340 = vadd.f32 %v414, %v1339
        %v1341 = vpop.f32.mrb[0].mxu0
        %v1342 = vadd.f32 %v418, %v1341
        %1343 = vdwg.mxu0
        %1344 = vmatprep.subr.bf16.mxu0 %v1040
        %1345 = vmatpush1.bf16.msra.mxu0 %v1039
        %1346 = vmatprep.subr.bf16.mxu0 %v1044
        %1347 = vmatpush1.bf16.msra.mxu0 %v1043
        %1348 = vmatprep.subr.bf16.mxu0 %v1048
        %1349 = vmatpush1.bf16.msra.mxu0 %v1047
        %1350 = vmatprep.subr.bf16.mxu0 %v1052
        %1351 = vmatpush1.bf16.msra.mxu0 %v1051
        %1352 = vmatprep.subr.bf16.mxu0 %v1056
        %1353 = vmatpush1.bf16.msra.mxu0 %v1055
        %1354 = vmatprep.subr.bf16.mxu0 %v1060
        %1355 = vmatpush1.bf16.msra.mxu0 %v1059
        %1356 = vmatprep.subr.bf16.mxu0 %v1064
        %1357 = vmatpush1.bf16.msra.mxu0 %v1063
        %1358 = vmatprep.subr.bf16.mxu0 %v1068
        %1359 = vmatpush1.bf16.msra.mxu0 %v1067
        %1360 = vmatprep.subr.bf16.mxu0 %v1072
        %1361 = vmatpush1.bf16.msra.mxu0 %v1071
        %1362 = vmatprep.subr.bf16.mxu0 %v1076
        %1363 = vmatpush1.bf16.msra.mxu0 %v1075
        %1364 = vmatprep.subr.bf16.mxu0 %v1080
        %1365 = vmatpush1.bf16.msra.mxu0 %v1079
        %1366 = vmatprep.subr.bf16.mxu0 %v1084
        %1367 = vmatpush1.bf16.msra.mxu0 %v1083
        %1368 = vmatprep.subr.bf16.mxu0 %v1088
        %1369 = vmatpush1.bf16.msra.mxu0 %v1087
        %1370 = vmatprep.subr.bf16.mxu0 %v1092
        %1371 = vmatpush1.bf16.msra.mxu0 %v1091
        %1372 = vmatprep.subr.bf16.mxu0 %v1096
        %1373 = vmatpush1.bf16.msra.mxu0 %v1095
        %1374 = vmatprep.subr.bf16.mxu0 %v1100
        %1375 = vmatpush1.bf16.msra.mxu0 %v1099
        %1376 = vmatprep.mubr.bf16.mxu0 %v530
        %1377 = vmatmul.mubr.bf16.gmra.mrb[0].mxu0 %v529
        %v1378 = vpop.f32.mrb[0].mxu0
        %v1379 = vadd.f32 %v1266, %v1378
        %v1380 = vpop.f32.mrb[0].mxu0
        %v1381 = vadd.f32 %v1268, %v1380
        %v1382 = vpop.f32.mrb[0].mxu0
        %v1383 = vadd.f32 %v1270, %v1382
        %v1384 = vpop.f32.mrb[0].mxu0
        %v1385 = vadd.f32 %v1272, %v1384
        %1386 = vmatprep.mubr.bf16.mxu0 %v534
        %1387 = vmatmul.mubr.bf16.gmra.mrb[0].mxu0 %v533
        %v1388 = vpop.f32.mrb[0].mxu0
        %v1389 = vadd.f32 %v1276, %v1388
        %v1390 = vpop.f32.mrb[0].mxu0
        %v1391 = vadd.f32 %v1278, %v1390
        %v1392 = vpop.f32.mrb[0].mxu0
        %v1393 = vadd.f32 %v1280, %v1392
        %v1394 = vpop.f32.mrb[0].mxu0
        %v1395 = vadd.f32 %v1282, %v1394
        %1396 = vmatprep.mubr.bf16.mxu0 %v538
        %1397 = vmatmul.mubr.bf16.gmra.mrb[0].mxu0 %v537
        %v1398 = vpop.f32.mrb[0].mxu0
        %v1399 = vadd.f32 %v1286, %v1398
        %v1400 = vpop.f32.mrb[0].mxu0
        %v1401 = vadd.f32 %v1288, %v1400
        %v1402 = vpop.f32.mrb[0].mxu0
        %v1403 = vadd.f32 %v1290, %v1402
        %v1404 = vpop.f32.mrb[0].mxu0
        %v1405 = vadd.f32 %v1292, %v1404
        %1406 = vmatprep.mubr.bf16.mxu0 %v542
        %1407 = vmatmul.mubr.bf16.gmra.mrb[0].mxu0 %v541
        %v1408 = vpop.f32.mrb[0].mxu0
        %v1409 = vadd.f32 %v1296, %v1408
        %v1410 = vpop.f32.mrb[0].mxu0
        %v1411 = vadd.f32 %v1298, %v1410
        %v1412 = vpop.f32.mrb[0].mxu0
        %v1413 = vadd.f32 %v1300, %v1412
        %v1414 = vpop.f32.mrb[0].mxu0
        %v1415 = vadd.f32 %v1302, %v1414
        %1416 = vmatprep.mubr.bf16.mxu0 %v546
        %1417 = vmatmul.mubr.bf16.gmra.mrb[0].mxu0 %v545
        %v1418 = vpop.f32.mrb[0].mxu0
        %v1419 = vadd.f32 %v1306, %v1418
        %v1420 = vpop.f32.mrb[0].mxu0
        %v1421 = vadd.f32 %v1308, %v1420
        %v1422 = vpop.f32.mrb[0].mxu0
        %v1423 = vadd.f32 %v1310, %v1422
        %v1424 = vpop.f32.mrb[0].mxu0
        %v1425 = vadd.f32 %v1312, %v1424
        %1426 = vmatprep.mubr.bf16.mxu0 %v550
        %1427 = vmatmul.mubr.bf16.gmra.mrb[0].mxu0 %v549
        %v1428 = vpop.f32.mrb[0].mxu0
        %v1429 = vadd.f32 %v1316, %v1428
        %v1430 = vpop.f32.mrb[0].mxu0
        %v1431 = vadd.f32 %v1318, %v1430
        %v1432 = vpop.f32.mrb[0].mxu0
        %v1433 = vadd.f32 %v1320, %v1432
        %v1434 = vpop.f32.mrb[0].mxu0
        %v1435 = vadd.f32 %v1322, %v1434
        %1436 = vmatprep.mubr.bf16.mxu0 %v554
        %1437 = vmatmul.mubr.bf16.gmra.mrb[0].mxu0 %v553
        %v1438 = vpop.f32.mrb[0].mxu0
        %v1439 = vadd.f32 %v1326, %v1438
        %v1440 = vpop.f32.mrb[0].mxu0
        %v1441 = vadd.f32 %v1328, %v1440
        %v1442 = vpop.f32.mrb[0].mxu0
        %v1443 = vadd.f32 %v1330, %v1442
        %v1444 = vpop.f32.mrb[0].mxu0
        %v1445 = vadd.f32 %v1332, %v1444
        %1446 = vmatprep.mubr.bf16.mxu0 %v558
        %1447 = vmatmul.mubr.bf16.gmra.mrb[0].mxu0 %v557
        %v1448 = vpop.f32.mrb[0].mxu0
        %v1449 = vadd.f32 %v1336, %v1448
        %v1450 = vpop.f32.mrb[0].mxu0
        %v1451 = vadd.f32 %v1338, %v1450
        %v1452 = vpop.f32.mrb[0].mxu0
        %v1453 = vadd.f32 %v1340, %v1452
        %v1454 = vpop.f32.mrb[0].mxu0
        %v1455 = vadd.f32 %v1342, %v1454
        %1456 = vdwg.mxu0
        %1457 = vmatprep.subr.bf16.mxu0 %v978
        %1458 = vmatpush1.bf16.msra.mxu0 %v977
        %1459 = vmatprep.subr.bf16.mxu0 %v982
        %1460 = vmatpush1.bf16.msra.mxu0 %v981
        %1461 = vmatprep.subr.bf16.mxu0 %v986
        %1462 = vmatpush1.bf16.msra.mxu0 %v985
        %1463 = vmatprep.subr.bf16.mxu0 %v990
        %1464 = vmatpush1.bf16.msra.mxu0 %v989
        %1465 = vmatprep.subr.bf16.mxu0 %v994
        %1466 = vmatpush1.bf16.msra.mxu0 %v993
        %1467 = vmatprep.subr.bf16.mxu0 %v998
        %1468 = vmatpush1.bf16.msra.mxu0 %v997
        %1469 = vmatprep.subr.bf16.mxu0 %v1002
        %1470 = vmatpush1.bf16.msra.mxu0 %v1001
        %1471 = vmatprep.subr.bf16.mxu0 %v1006
        %1472 = vmatpush1.bf16.msra.mxu0 %v1005
        %1473 = vmatprep.subr.bf16.mxu0 %v1010
        %1474 = vmatpush1.bf16.msra.mxu0 %v1009
        %1475 = vmatprep.subr.bf16.mxu0 %v1014
        %1476 = vmatpush1.bf16.msra.mxu0 %v1013
        %1477 = vmatprep.subr.bf16.mxu0 %v1018
        %1478 = vmatpush1.bf16.msra.mxu0 %v1017
        %1479 = vmatprep.subr.bf16.mxu0 %v1022
        %1480 = vmatpush1.bf16.msra.mxu0 %v1021
        %1481 = vmatprep.subr.bf16.mxu0 %v1026
        %1482 = vmatpush1.bf16.msra.mxu0 %v1025
        %1483 = vmatprep.subr.bf16.mxu0 %v1030
        %1484 = vmatpush1.bf16.msra.mxu0 %v1029
        %1485 = vmatprep.subr.bf16.mxu0 %v1034
        %1486 = vmatpush1.bf16.msra.mxu0 %v1033
        %1487 = vmatprep.subr.bf16.mxu0 %v1038
        %1488 = vmatpush1.bf16.msra.mxu0 %v1037
        %1489 = vmatprep.mubr.bf16.mxu0 %v528
        %1490 = vmatmul.mubr.bf16.gmra.mrb[0].mxu0 %v527
        %v1491 = vpop.f32.mrb[0].mxu0
        %v1492 = vadd.f32 %v422, %v1491
        %v1493 = vpop.f32.mrb[0].mxu0
        %v1494 = vadd.f32 %v426, %v1493
        %v1495 = vpop.f32.mrb[0].mxu0
        %v1496 = vadd.f32 %v422, %v1495
        %v1497 = vpop.f32.mrb[0].mxu0
        %v1498 = vadd.f32 %v426, %v1497
        %1499 = vmatprep.mubr.bf16.mxu0 %v532
        %1500 = vmatmul.mubr.bf16.gmra.mrb[0].mxu0 %v531
        %v1501 = vpop.f32.mrb[0].mxu0
        %v1502 = vadd.f32 %v422, %v1501
        %v1503 = vpop.f32.mrb[0].mxu0
        %v1504 = vadd.f32 %v426, %v1503
        %v1505 = vpop.f32.mrb[0].mxu0
        %v1506 = vadd.f32 %v422, %v1505
        %v1507 = vpop.f32.mrb[0].mxu0
        %v1508 = vadd.f32 %v426, %v1507
        %1509 = vmatprep.mubr.bf16.mxu0 %v536
        %1510 = vmatmul.mubr.bf16.gmra.mrb[0].mxu0 %v535
        %v1511 = vpop.f32.mrb[0].mxu0
        %v1512 = vadd.f32 %v422, %v1511
        %v1513 = vpop.f32.mrb[0].mxu0
        %v1514 = vadd.f32 %v426, %v1513
        %v1515 = vpop.f32.mrb[0].mxu0
        %v1516 = vadd.f32 %v422, %v1515
        %v1517 = vpop.f32.mrb[0].mxu0
        %v1518 = vadd.f32 %v426, %v1517
        %1519 = vmatprep.mubr.bf16.mxu0 %v540
        %1520 = vmatmul.mubr.bf16.gmra.mrb[0].mxu0 %v539
        %v1521 = vpop.f32.mrb[0].mxu0
        %v1522 = vadd.f32 %v422, %v1521
        %v1523 = vpop.f32.mrb[0].mxu0
        %v1524 = vadd.f32 %v426, %v1523
        %v1525 = vpop.f32.mrb[0].mxu0
        %v1526 = vadd.f32 %v422, %v1525
        %v1527 = vpop.f32.mrb[0].mxu0
        %v1528 = vadd.f32 %v426, %v1527
        %1529 = vmatprep.mubr.bf16.mxu0 %v544
        %1530 = vmatmul.mubr.bf16.gmra.mrb[0].mxu0 %v543
        %v1531 = vpop.f32.mrb[0].mxu0
        %v1532 = vadd.f32 %v422, %v1531
        %v1533 = vpop.f32.mrb[0].mxu0
        %v1534 = vadd.f32 %v426, %v1533
        %v1535 = vpop.f32.mrb[0].mxu0
        %v1536 = vadd.f32 %v422, %v1535
        %v1537 = vpop.f32.mrb[0].mxu0
        %v1538 = vadd.f32 %v426, %v1537
        %1539 = vmatprep.mubr.bf16.mxu0 %v548
        %1540 = vmatmul.mubr.bf16.gmra.mrb[0].mxu0 %v547
        %v1541 = vpop.f32.mrb[0].mxu0
        %v1542 = vadd.f32 %v422, %v1541
        %v1543 = vpop.f32.mrb[0].mxu0
        %v1544 = vadd.f32 %v426, %v1543
        %v1545 = vpop.f32.mrb[0].mxu0
        %v1546 = vadd.f32 %v422, %v1545
        %v1547 = vpop.f32.mrb[0].mxu0
        %v1548 = vadd.f32 %v426, %v1547
        %1549 = vmatprep.mubr.bf16.mxu0 %v552
        %1550 = vmatmul.mubr.bf16.gmra.mrb[0].mxu0 %v551
        %v1551 = vpop.f32.mrb[0].mxu0
        %v1552 = vadd.f32 %v422, %v1551
        %v1553 = vpop.f32.mrb[0].mxu0
        %v1554 = vadd.f32 %v426, %v1553
        %v1555 = vpop.f32.mrb[0].mxu0
        %v1556 = vadd.f32 %v422, %v1555
        %v1557 = vpop.f32.mrb[0].mxu0
        %v1558 = vadd.f32 %v426, %v1557
        %1559 = vmatprep.mubr.bf16.mxu0 %v556
        %1560 = vmatmul.mubr.bf16.gmra.mrb[0].mxu0 %v555
        %v1561 = vpop.f32.mrb[0].mxu0
        %v1562 = vadd.f32 %v422, %v1561
        %v1563 = vpop.f32.mrb[0].mxu0
        %v1564 = vadd.f32 %v426, %v1563
        %v1565 = vpop.f32.mrb[0].mxu0
        %v1566 = vadd.f32 %v422, %v1565
        %v1567 = vpop.f32.mrb[0].mxu0
        %v1568 = vadd.f32 %v426, %v1567
        %1569 = vdwg.mxu0
        %1570 = vmatprep.subr.bf16.mxu0 %v1042
        %1571 = vmatpush1.bf16.msra.mxu0 %v1041
        %1572 = vmatprep.subr.bf16.mxu0 %v1046
        %1573 = vmatpush1.bf16.msra.mxu0 %v1045
        %1574 = vmatprep.subr.bf16.mxu0 %v1050
        %1575 = vmatpush1.bf16.msra.mxu0 %v1049
        %1576 = vmatprep.subr.bf16.mxu0 %v1054
        %1577 = vmatpush1.bf16.msra.mxu0 %v1053
        %1578 = vmatprep.subr.bf16.mxu0 %v1058
        %1579 = vmatpush1.bf16.msra.mxu0 %v1057
        %1580 = vmatprep.subr.bf16.mxu0 %v1062
        %1581 = vmatpush1.bf16.msra.mxu0 %v1061
        %1582 = vmatprep.subr.bf16.mxu0 %v1066
        %1583 = vmatpush1.bf16.msra.mxu0 %v1065
        %1584 = vmatprep.subr.bf16.mxu0 %v1070
        %1585 = vmatpush1.bf16.msra.mxu0 %v1069
        %1586 = vmatprep.subr.bf16.mxu0 %v1074
        %1587 = vmatpush1.bf16.msra.mxu0 %v1073
        %1588 = vmatprep.subr.bf16.mxu0 %v1078
        %1589 = vmatpush1.bf16.msra.mxu0 %v1077
        %1590 = vmatprep.subr.bf16.mxu0 %v1082
        %1591 = vmatpush1.bf16.msra.mxu0 %v1081
        %1592 = vmatprep.subr.bf16.mxu0 %v1086
        %1593 = vmatpush1.bf16.msra.mxu0 %v1085
        %1594 = vmatprep.subr.bf16.mxu0 %v1090
        %1595 = vmatpush1.bf16.msra.mxu0 %v1089
        %1596 = vmatprep.subr.bf16.mxu0 %v1094
        %1597 = vmatpush1.bf16.msra.mxu0 %v1093
        %1598 = vmatprep.subr.bf16.mxu0 %v1098
        %1599 = vmatpush1.bf16.msra.mxu0 %v1097
        %1600 = vmatprep.subr.bf16.mxu0 %v1102
        %1601 = vmatpush1.bf16.msra.mxu0 %v1101
        %1602 = vmatprep.mubr.bf16.mxu0 %v530
        %1603 = vmatmul.mubr.bf16.gmra.mrb[0].mxu0 %v529
        %v1604 = vpop.f32.mrb[0].mxu0
        %v1605 = vadd.f32 %v1492, %v1604
        %v1606 = vpop.f32.mrb[0].mxu0
        %v1607 = vadd.f32 %v1494, %v1606
        %v1608 = vpop.f32.mrb[0].mxu0
        %v1609 = vadd.f32 %v1496, %v1608
        %v1610 = vpop.f32.mrb[0].mxu0
        %v1611 = vadd.f32 %v1498, %v1610
        %1612 = vmatprep.mubr.bf16.mxu0 %v534
        %1613 = vmatmul.mubr.bf16.gmra.mrb[0].mxu0 %v533
        %v1614 = vpop.f32.mrb[0].mxu0
        %v1615 = vadd.f32 %v1502, %v1614
        %v1616 = vpop.f32.mrb[0].mxu0
        %v1617 = vadd.f32 %v1504, %v1616
        %v1618 = vpop.f32.mrb[0].mxu0
        %v1619 = vadd.f32 %v1506, %v1618
        %v1620 = vpop.f32.mrb[0].mxu0
        %v1621 = vadd.f32 %v1508, %v1620
        %1622 = vmatprep.mubr.bf16.mxu0 %v538
        %1623 = vmatmul.mubr.bf16.gmra.mrb[0].mxu0 %v537
        %v1624 = vpop.f32.mrb[0].mxu0
        %v1625 = vadd.f32 %v1512, %v1624
        %v1626 = vpop.f32.mrb[0].mxu0
        %v1627 = vadd.f32 %v1514, %v1626
        %v1628 = vpop.f32.mrb[0].mxu0
        %v1629 = vadd.f32 %v1516, %v1628
        %v1630 = vpop.f32.mrb[0].mxu0
        %v1631 = vadd.f32 %v1518, %v1630
        %1632 = vmatprep.mubr.bf16.mxu0 %v542
        %1633 = vmatmul.mubr.bf16.gmra.mrb[0].mxu0 %v541
        %v1634 = vpop.f32.mrb[0].mxu0
        %v1635 = vadd.f32 %v1522, %v1634
        %v1636 = vpop.f32.mrb[0].mxu0
        %v1637 = vadd.f32 %v1524, %v1636
        %v1638 = vpop.f32.mrb[0].mxu0
        %v1639 = vadd.f32 %v1526, %v1638
        %v1640 = vpop.f32.mrb[0].mxu0
        %v1641 = vadd.f32 %v1528, %v1640
        %1642 = vmatprep.mubr.bf16.mxu0 %v546
        %1643 = vmatmul.mubr.bf16.gmra.mrb[0].mxu0 %v545
        %v1644 = vpop.f32.mrb[0].mxu0
        %v1645 = vadd.f32 %v1532, %v1644
        %v1646 = vpop.f32.mrb[0].mxu0
        %v1647 = vadd.f32 %v1534, %v1646
        %v1648 = vpop.f32.mrb[0].mxu0
        %v1649 = vadd.f32 %v1536, %v1648
        %v1650 = vpop.f32.mrb[0].mxu0
        %v1651 = vadd.f32 %v1538, %v1650
        %1652 = vmatprep.mubr.bf16.mxu0 %v550
        %1653 = vmatmul.mubr.bf16.gmra.mrb[0].mxu0 %v549
        %v1654 = vpop.f32.mrb[0].mxu0
        %v1655 = vadd.f32 %v1542, %v1654
        %v1656 = vpop.f32.mrb[0].mxu0
        %v1657 = vadd.f32 %v1544, %v1656
        %v1658 = vpop.f32.mrb[0].mxu0
        %v1659 = vadd.f32 %v1546, %v1658
        %v1660 = vpop.f32.mrb[0].mxu0
        %v1661 = vadd.f32 %v1548, %v1660
        %1662 = vmatprep.mubr.bf16.mxu0 %v554
        %1663 = vmatmul.mubr.bf16.gmra.mrb[0].mxu0 %v553
        %v1664 = vpop.f32.mrb[0].mxu0
        %v1665 = vadd.f32 %v1552, %v1664
        %v1666 = vpop.f32.mrb[0].mxu0
        %v1667 = vadd.f32 %v1554, %v1666
        %v1668 = vpop.f32.mrb[0].mxu0
        %v1669 = vadd.f32 %v1556, %v1668
        %v1670 = vpop.f32.mrb[0].mxu0
        %v1671 = vadd.f32 %v1558, %v1670
        %1672 = vmatprep.mubr.bf16.mxu0 %v558
        %1673 = vmatmul.mubr.bf16.gmra.mrb[0].mxu0 %v557
        %v1674 = vpop.f32.mrb[0].mxu0
        %v1675 = vadd.f32 %v1562, %v1674
        %v1676 = vpop.f32.mrb[0].mxu0
        %v1677 = vadd.f32 %v1564, %v1676
        %v1678 = vpop.f32.mrb[0].mxu0
        %v1679 = vadd.f32 %v1566, %v1678
        %v1680 = vpop.f32.mrb[0].mxu0
        %v1681 = vadd.f32 %v1568, %v1680
        %1682 = vdwg.mxu0
        %v1683 = vtanh.pop %v1379
        %v1684 = vtanh.pop %v1381
        %v1685 = vtanh.pop %v1605
        %v1686 = vtanh.pop %v1607
        %v1687 = vtanh.pop %v1383
        %v1688 = vtanh.pop %v1385
        %v1689 = vtanh.pop %v1609
        %v1690 = vtanh.pop %v1611
        %v1691 = vtanh.pop %v1389
        %v1692 = vtanh.pop %v1391
        %v1693 = vtanh.pop %v1615
        %v1694 = vtanh.pop %v1617
        %v1695 = vtanh.pop %v1393
        %v1696 = vtanh.pop %v1395
        %v1697 = vtanh.pop %v1619
        %v1698 = vtanh.pop %v1621
        %v1699 = vtanh.pop %v1399
        %v1700 = vtanh.pop %v1401
        %v1701 = vtanh.pop %v1625
        %v1702 = vtanh.pop %v1627
        %v1703 = vtanh.pop %v1403
        %v1704 = vtanh.pop %v1405
        %v1705 = vtanh.pop %v1629
        %v1706 = vtanh.pop %v1631
        %v1707 = vtanh.pop %v1409
        %v1708 = vtanh.pop %v1411
        %v1709 = vtanh.pop %v1635
        %v1710 = vtanh.pop %v1637
        %v1711 = vtanh.pop %v1413
        %v1712 = vtanh.pop %v1415
        %v1713 = vtanh.pop %v1639
        %v1714 = vtanh.pop %v1641
        %v1715 = vtanh.pop %v1419
        %v1716 = vtanh.pop %v1421
        %v1717 = vtanh.pop %v1645
        %v1718 = vtanh.pop %v1647
        %v1719 = vtanh.pop %v1423
        %v1720 = vtanh.pop %v1425
        %v1721 = vtanh.pop %v1649
        %v1722 = vtanh.pop %v1651
        %v1723 = vtanh.pop %v1429
        %v1724 = vtanh.pop %v1431
        %v1725 = vtanh.pop %v1655
        %v1726 = vtanh.pop %v1657
        %v1727 = vtanh.pop %v1433
        %v1728 = vtanh.pop %v1435
        %v1729 = vtanh.pop %v1659
        %v1730 = vtanh.pop %v1661
        %v1731 = vtanh.pop %v1439
        %v1732 = vtanh.pop %v1441
        %v1733 = vtanh.pop %v1665
        %v1734 = vtanh.pop %v1667
        %v1735 = vtanh.pop %v1443
        %v1736 = vtanh.pop %v1445
        %v1737 = vtanh.pop %v1669
        %v1738 = vtanh.pop %v1671
        %v1739 = vtanh.pop %v1449
        %v1740 = vtanh.pop %v1451
        %v1741 = vtanh.pop %v1675
        %v1742 = vtanh.pop %v1677
        %v1743 = vtanh.pop %v1453
        %v1744 = vtanh.pop %v1455
        %v1745 = vtanh.pop %v1679
        %v1746 = vtanh.pop %v1681
        %v1747 = vpack.c.bf16 %v1687, %v1683
        %v1748 = vpack.c.bf16 %v1688, %v1684
        %v1749 = vpack.c.bf16 %v1689, %v1685
        %v1750 = vpack.c.bf16 %v1690, %v1686
        %v1751 = vpack.c.bf16 %v1695, %v1691
        %v1752 = vpack.c.bf16 %v1696, %v1692
        %v1753 = vpack.c.bf16 %v1697, %v1693
        %v1754 = vpack.c.bf16 %v1698, %v1694
        %v1755 = vpack.c.bf16 %v1703, %v1699
        %v1756 = vpack.c.bf16 %v1704, %v1700
        %v1757 = vpack.c.bf16 %v1705, %v1701
        %v1758 = vpack.c.bf16 %v1706, %v1702
        %v1759 = vpack.c.bf16 %v1711, %v1707
        %v1760 = vpack.c.bf16 %v1712, %v1708
        %v1761 = vpack.c.bf16 %v1713, %v1709
        %v1762 = vpack.c.bf16 %v1714, %v1710
        %v1763 = vpack.c.bf16 %v1719, %v1715
        %v1764 = vpack.c.bf16 %v1720, %v1716
        %v1765 = vpack.c.bf16 %v1721, %v1717
        %v1766 = vpack.c.bf16 %v1722, %v1718
        %v1767 = vpack.c.bf16 %v1727, %v1723
        %v1768 = vpack.c.bf16 %v1728, %v1724
        %v1769 = vpack.c.bf16 %v1729, %v1725
        %v1770 = vpack.c.bf16 %v1730, %v1726
        %v1771 = vpack.c.bf16 %v1735, %v1731
        %v1772 = vpack.c.bf16 %v1736, %v1732
        %v1773 = vpack.c.bf16 %v1737, %v1733
        %v1774 = vpack.c.bf16 %v1738, %v1734
        %v1775 = vpack.c.bf16 %v1743, %v1739
        %v1776 = vpack.c.bf16 %v1744, %v1740
        %v1777 = vpack.c.bf16 %v1745, %v1741
        %v1778 = vpack.c.bf16 %v1746, %v1742
        %v1779 = vld [vmem:[#allocation7] sm:$0xf]
        %v1780 = vld [vmem:[#allocation7 + $0x4] sm:$0xf]
        %v1781 = vld [vmem:[#allocation7 + $0x8] sm:$0xf]
        %v1782 = vld [vmem:[#allocation7 + $0xc] sm:$0xf]
        %v1783 = vld [vmem:[#allocation7 + $0x10] sm:$0xf]
        %v1784 = vld [vmem:[#allocation7 + $0x14] sm:$0xf]
        %v1785 = vld [vmem:[#allocation7 + $0x18] sm:$0xf]
        %v1786 = vld [vmem:[#allocation7 + $0x1c] sm:$0xf]
        %v1787 = vld [vmem:[#allocation7 + $0x20] sm:$0xf]
        %v1788 = vld [vmem:[#allocation7 + $0x24] sm:$0xf]
        %v1789 = vld [vmem:[#allocation7 + $0x28] sm:$0xf]
        %v1790 = vld [vmem:[#allocation7 + $0x2c] sm:$0xf]
        %v1791 = vld [vmem:[#allocation7 + $0x30] sm:$0xf]
        %v1792 = vld [vmem:[#allocation7 + $0x34] sm:$0xf]
        %v1793 = vld [vmem:[#allocation7 + $0x38] sm:$0xf]
        %v1794 = vld [vmem:[#allocation7 + $0x3c] sm:$0xf]
        %v1795 = vld [vmem:[#allocation7 + $0x40] sm:$0xf]
        %v1796 = vld [vmem:[#allocation7 + $0x44] sm:$0xf]
        %v1797 = vld [vmem:[#allocation7 + $0x48] sm:$0xf]
        %v1798 = vld [vmem:[#allocation7 + $0x4c] sm:$0xf]
        %v1799 = vld [vmem:[#allocation7 + $0x50] sm:$0xf]
        %v1800 = vld [vmem:[#allocation7 + $0x54] sm:$0xf]
        %v1801 = vld [vmem:[#allocation7 + $0x58] sm:$0xf]
        %v1802 = vld [vmem:[#allocation7 + $0x5c] sm:$0xf]
        %v1803 = vld [vmem:[#allocation7 + $0x60] sm:$0xf]
        %v1804 = vld [vmem:[#allocation7 + $0x64] sm:$0xf]
        %v1805 = vld [vmem:[#allocation7 + $0x68] sm:$0xf]
        %v1806 = vld [vmem:[#allocation7 + $0x6c] sm:$0xf]
        %v1807 = vld [vmem:[#allocation7 + $0x70] sm:$0xf]
        %v1808 = vld [vmem:[#allocation7 + $0x74] sm:$0xf]
        %v1809 = vld [vmem:[#allocation7 + $0x78] sm:$0xf]
        %v1810 = vld [vmem:[#allocation7 + $0x7c] sm:$0xf]
        %v1811 = vld [vmem:[#allocation7 + $0x80] sm:$0xf]
        %v1812 = vld [vmem:[#allocation7 + $0x84] sm:$0xf]
        %v1813 = vld [vmem:[#allocation7 + $0x88] sm:$0xf]
        %v1814 = vld [vmem:[#allocation7 + $0x8c] sm:$0xf]
        %v1815 = vld [vmem:[#allocation7 + $0x90] sm:$0xf]
        %v1816 = vld [vmem:[#allocation7 + $0x94] sm:$0xf]
        %v1817 = vld [vmem:[#allocation7 + $0x98] sm:$0xf]
        %v1818 = vld [vmem:[#allocation7 + $0x9c] sm:$0xf]
        %v1819 = vld [vmem:[#allocation7 + $0xa0] sm:$0xf]
        %v1820 = vld [vmem:[#allocation7 + $0xa4] sm:$0xf]
        %v1821 = vld [vmem:[#allocation7 + $0xa8] sm:$0xf]
        %v1822 = vld [vmem:[#allocation7 + $0xac] sm:$0xf]
        %v1823 = vld [vmem:[#allocation7 + $0xb0] sm:$0xf]
        %v1824 = vld [vmem:[#allocation7 + $0xb4] sm:$0xf]
        %v1825 = vld [vmem:[#allocation7 + $0xb8] sm:$0xf]
        %v1826 = vld [vmem:[#allocation7 + $0xbc] sm:$0xf]
        %v1827 = vld [vmem:[#allocation7 + $0xc0] sm:$0xf]
        %v1828 = vld [vmem:[#allocation7 + $0xc4] sm:$0xf]
        %v1829 = vld [vmem:[#allocation7 + $0xc8] sm:$0xf]
        %v1830 = vld [vmem:[#allocation7 + $0xcc] sm:$0xf]
        %v1831 = vld [vmem:[#allocation7 + $0xd0] sm:$0xf]
        %v1832 = vld [vmem:[#allocation7 + $0xd4] sm:$0xf]
        %v1833 = vld [vmem:[#allocation7 + $0xd8] sm:$0xf]
        %v1834 = vld [vmem:[#allocation7 + $0xdc] sm:$0xf]
        %v1835 = vld [vmem:[#allocation7 + $0xe0] sm:$0xf]
        %v1836 = vld [vmem:[#allocation7 + $0xe4] sm:$0xf]
        %v1837 = vld [vmem:[#allocation7 + $0xe8] sm:$0xf]
        %v1838 = vld [vmem:[#allocation7 + $0xec] sm:$0xf]
        %v1839 = vld [vmem:[#allocation7 + $0xf0] sm:$0xf]
        %v1840 = vld [vmem:[#allocation7 + $0xf4] sm:$0xf]
        %v1841 = vld [vmem:[#allocation7 + $0xf8] sm:$0xf]
        %v1842 = vld [vmem:[#allocation7 + $0xfc] sm:$0xf]
        %v1907 = vunpack.c.l.b16 %v1779
        %v1908 = vunpack.c.l.b16 %v1780
        %v1909 = vunpack.c.l.b16 %v1781
        %v1910 = vunpack.c.l.b16 %v1782
        %v1911 = vunpack.c.l.b16 %v1783
        %v1912 = vunpack.c.l.b16 %v1784
        %v1913 = vunpack.c.l.b16 %v1785
        %v1914 = vunpack.c.l.b16 %v1786
        %v1915 = vunpack.c.l.b16 %v1787
        %v1916 = vunpack.c.l.b16 %v1788
        %v1917 = vunpack.c.l.b16 %v1789
        %v1918 = vunpack.c.l.b16 %v1790
        %v1919 = vunpack.c.l.b16 %v1791
        %v1920 = vunpack.c.l.b16 %v1792
        %v1921 = vunpack.c.l.b16 %v1793
        %v1922 = vunpack.c.l.b16 %v1794
        %v1923 = vunpack.c.l.b16 %v1795
        %v1924 = vunpack.c.l.b16 %v1796
        %v1925 = vunpack.c.l.b16 %v1797
        %v1926 = vunpack.c.l.b16 %v1798
        %v1927 = vunpack.c.l.b16 %v1799
        %v1928 = vunpack.c.l.b16 %v1800
        %v1929 = vunpack.c.l.b16 %v1801
        %v1930 = vunpack.c.l.b16 %v1802
        %v1931 = vunpack.c.l.b16 %v1803
        %v1932 = vunpack.c.l.b16 %v1804
        %v1933 = vunpack.c.l.b16 %v1805
        %v1934 = vunpack.c.l.b16 %v1806
        %v1935 = vunpack.c.l.b16 %v1807
        %v1936 = vunpack.c.l.b16 %v1808
        %v1937 = vunpack.c.l.b16 %v1809
        %v1938 = vunpack.c.l.b16 %v1810
        %v1939 = vunpack.c.l.b16 %v1811
        %v1940 = vunpack.c.l.b16 %v1812
        %v1941 = vunpack.c.l.b16 %v1813
        %v1942 = vunpack.c.l.b16 %v1814
        %v1943 = vunpack.c.l.b16 %v1815
        %v1944 = vunpack.c.l.b16 %v1816
        %v1945 = vunpack.c.l.b16 %v1817
        %v1946 = vunpack.c.l.b16 %v1818
        %v1947 = vunpack.c.l.b16 %v1819
        %v1948 = vunpack.c.l.b16 %v1820
        %v1949 = vunpack.c.l.b16 %v1821
        %v1950 = vunpack.c.l.b16 %v1822
        %v1951 = vunpack.c.l.b16 %v1823
        %v1952 = vunpack.c.l.b16 %v1824
        %v1953 = vunpack.c.l.b16 %v1825
        %v1954 = vunpack.c.l.b16 %v1826
        %v1955 = vunpack.c.l.b16 %v1827
        %v1956 = vunpack.c.l.b16 %v1828
        %v1957 = vunpack.c.l.b16 %v1829
        %v1958 = vunpack.c.l.b16 %v1830
        %v1959 = vunpack.c.l.b16 %v1831
        %v1960 = vunpack.c.l.b16 %v1832
        %v1961 = vunpack.c.l.b16 %v1833
        %v1962 = vunpack.c.l.b16 %v1834
        %v1963 = vunpack.c.l.b16 %v1835
        %v1964 = vunpack.c.l.b16 %v1836
        %v1965 = vunpack.c.l.b16 %v1837
        %v1966 = vunpack.c.l.b16 %v1838
        %v1967 = vunpack.c.l.b16 %v1839
        %v1968 = vunpack.c.l.b16 %v1840
        %v1969 = vunpack.c.l.b16 %v1841
        %v1970 = vunpack.c.l.b16 %v1842
        %v1971 = vpack.c.b16 %v1908, %v1907
        %v1972 = vpack.c.b16 %v1910, %v1909
        %v1973 = vpack.c.b16 %v1912, %v1911
        %v1974 = vpack.c.b16 %v1914, %v1913
        %v1975 = vpack.c.b16 %v1916, %v1915
        %v1976 = vpack.c.b16 %v1918, %v1917
        %v1977 = vpack.c.b16 %v1920, %v1919
        %v1978 = vpack.c.b16 %v1922, %v1921
        %v1979 = vpack.c.b16 %v1924, %v1923
        %v1980 = vpack.c.b16 %v1926, %v1925
        %v1981 = vpack.c.b16 %v1928, %v1927
        %v1982 = vpack.c.b16 %v1930, %v1929
        %v1983 = vpack.c.b16 %v1932, %v1931
        %v1984 = vpack.c.b16 %v1934, %v1933
        %v1985 = vpack.c.b16 %v1936, %v1935
        %v1986 = vpack.c.b16 %v1938, %v1937
        %v1987 = vpack.c.b16 %v1940, %v1939
        %v1988 = vpack.c.b16 %v1942, %v1941
        %v1989 = vpack.c.b16 %v1944, %v1943
        %v1990 = vpack.c.b16 %v1946, %v1945
        %v1991 = vpack.c.b16 %v1948, %v1947
        %v1992 = vpack.c.b16 %v1950, %v1949
        %v1993 = vpack.c.b16 %v1952, %v1951
        %v1994 = vpack.c.b16 %v1954, %v1953
        %v1995 = vpack.c.b16 %v1956, %v1955
        %v1996 = vpack.c.b16 %v1958, %v1957
        %v1997 = vpack.c.b16 %v1960, %v1959
        %v1998 = vpack.c.b16 %v1962, %v1961
        %v1999 = vpack.c.b16 %v1964, %v1963
        %v2000 = vpack.c.b16 %v1966, %v1965
        %v2001 = vpack.c.b16 %v1968, %v1967
        %v2002 = vpack.c.b16 %v1970, %v1969
        %2035 = vmatprep.subr.bf16.mxu0 0
        %2036 = vmatpush1.bf16.msra.mxu0 %v1971
        %2037 = vmatprep.subr.bf16.mxu0 0
        %2038 = vmatpush1.bf16.msra.mxu0 %v1972
        %2039 = vmatprep.subr.bf16.mxu0 0
        %2040 = vmatpush1.bf16.msra.mxu0 %v1973
        %2041 = vmatprep.subr.bf16.mxu0 0
        %2042 = vmatpush1.bf16.msra.mxu0 %v1974
        %2043 = vmatprep.subr.bf16.mxu0 0
        %2044 = vmatpush1.bf16.msra.mxu0 %v1975
        %2045 = vmatprep.subr.bf16.mxu0 0
        %2046 = vmatpush1.bf16.msra.mxu0 %v1976
        %2047 = vmatprep.subr.bf16.mxu0 0
        %2048 = vmatpush1.bf16.msra.mxu0 %v1977
        %2049 = vmatprep.subr.bf16.mxu0 0
        %2050 = vmatpush1.bf16.msra.mxu0 %v1978
        %2051 = vmatprep.subr.bf16.mxu0 0
        %2052 = vmatpush1.bf16.msra.mxu0 %v1979
        %2053 = vmatprep.subr.bf16.mxu0 0
        %2054 = vmatpush1.bf16.msra.mxu0 %v1980
        %2055 = vmatprep.subr.bf16.mxu0 0
        %2056 = vmatpush1.bf16.msra.mxu0 %v1981
        %2057 = vmatprep.subr.bf16.mxu0 0
        %2058 = vmatpush1.bf16.msra.mxu0 %v1982
        %2059 = vmatprep.subr.bf16.mxu0 0
        %2060 = vmatpush1.bf16.msra.mxu0 %v1983
        %2061 = vmatprep.subr.bf16.mxu0 0
        %2062 = vmatpush1.bf16.msra.mxu0 %v1984
        %2063 = vmatprep.subr.bf16.mxu0 0
        %2064 = vmatpush1.bf16.msra.mxu0 %v1985
        %2065 = vmatprep.subr.bf16.mxu0 0
        %2066 = vmatpush1.bf16.msra.mxu0 %v1986
        %2067 = vmatprep.mubr.bf16.mxu0 %v1748
        %2068 = vmatmul.mubr.bf16.gmra.mrb[0].mxu0 %v1747
        %v2069 = vpop.f32.mrb[0].mxu0
        %v2070 = vadd.f32 0.0, %v2069
        %v2071 = vpop.f32.mrb[0].mxu0
        %v2072 = vpop.f32.mrb[0].mxu0
        %v2073 = vadd.f32 0.0, %v2072
        %v2074 = vpop.f32.mrb[0].mxu0
        %2075 = vmatprep.mubr.bf16.mxu0 %v1752
        %2076 = vmatmul.mubr.bf16.gmra.mrb[0].mxu0 %v1751
        %v2077 = vpop.f32.mrb[0].mxu0
        %v2078 = vadd.f32 0.0, %v2077
        %v2079 = vpop.f32.mrb[0].mxu0
        %v2080 = vpop.f32.mrb[0].mxu0
        %v2081 = vadd.f32 0.0, %v2080
        %v2082 = vpop.f32.mrb[0].mxu0
        %2083 = vmatprep.mubr.bf16.mxu0 %v1756
        %2084 = vmatmul.mubr.bf16.gmra.mrb[0].mxu0 %v1755
        %v2085 = vpop.f32.mrb[0].mxu0
        %v2086 = vadd.f32 0.0, %v2085
        %v2087 = vpop.f32.mrb[0].mxu0
        %v2088 = vpop.f32.mrb[0].mxu0
        %v2089 = vadd.f32 0.0, %v2088
        %v2090 = vpop.f32.mrb[0].mxu0
        %2091 = vmatprep.mubr.bf16.mxu0 %v1760
        %2092 = vmatmul.mubr.bf16.gmra.mrb[0].mxu0 %v1759
        %v2093 = vpop.f32.mrb[0].mxu0
        %v2094 = vadd.f32 0.0, %v2093
        %v2095 = vpop.f32.mrb[0].mxu0
        %v2096 = vpop.f32.mrb[0].mxu0
        %v2097 = vadd.f32 0.0, %v2096
        %v2098 = vpop.f32.mrb[0].mxu0
        %2099 = vmatprep.mubr.bf16.mxu0 %v1764
        %2100 = vmatmul.mubr.bf16.gmra.mrb[0].mxu0 %v1763
        %v2101 = vpop.f32.mrb[0].mxu0
        %v2102 = vadd.f32 0.0, %v2101
        %v2103 = vpop.f32.mrb[0].mxu0
        %v2104 = vpop.f32.mrb[0].mxu0
        %v2105 = vadd.f32 0.0, %v2104
        %v2106 = vpop.f32.mrb[0].mxu0
        %2107 = vmatprep.mubr.bf16.mxu0 %v1768
        %2108 = vmatmul.mubr.bf16.gmra.mrb[0].mxu0 %v1767
        %v2109 = vpop.f32.mrb[0].mxu0
        %v2110 = vadd.f32 0.0, %v2109
        %v2111 = vpop.f32.mrb[0].mxu0
        %v2112 = vpop.f32.mrb[0].mxu0
        %v2113 = vadd.f32 0.0, %v2112
        %v2114 = vpop.f32.mrb[0].mxu0
        %2115 = vmatprep.mubr.bf16.mxu0 %v1772
        %2116 = vmatmul.mubr.bf16.gmra.mrb[0].mxu0 %v1771
        %v2117 = vpop.f32.mrb[0].mxu0
        %v2118 = vadd.f32 0.0, %v2117
        %v2119 = vpop.f32.mrb[0].mxu0
        %v2120 = vpop.f32.mrb[0].mxu0
        %v2121 = vadd.f32 0.0, %v2120
        %v2122 = vpop.f32.mrb[0].mxu0
        %2123 = vmatprep.mubr.bf16.mxu0 %v1776
        %2124 = vmatmul.mubr.bf16.gmra.mrb[0].mxu0 %v1775
        %v2125 = vpop.f32.mrb[0].mxu0
        %v2126 = vadd.f32 0.0, %v2125
        %v2127 = vpop.f32.mrb[0].mxu0
        %v2128 = vpop.f32.mrb[0].mxu0
        %v2129 = vadd.f32 0.0, %v2128
        %v2130 = vpop.f32.mrb[0].mxu0
        %2131 = vdwg.mxu0
        %2132 = vmatprep.subr.bf16.mxu0 0
        %2133 = vmatpush1.bf16.msra.mxu0 %v1987
        %2134 = vmatprep.subr.bf16.mxu0 0
        %2135 = vmatpush1.bf16.msra.mxu0 %v1988
        %2136 = vmatprep.subr.bf16.mxu0 0
        %2137 = vmatpush1.bf16.msra.mxu0 %v1989
        %2138 = vmatprep.subr.bf16.mxu0 0
        %2139 = vmatpush1.bf16.msra.mxu0 %v1990
        %2140 = vmatprep.subr.bf16.mxu0 0
        %2141 = vmatpush1.bf16.msra.mxu0 %v1991
        %2142 = vmatprep.subr.bf16.mxu0 0
        %2143 = vmatpush1.bf16.msra.mxu0 %v1992
        %2144 = vmatprep.subr.bf16.mxu0 0
        %2145 = vmatpush1.bf16.msra.mxu0 %v1993
        %2146 = vmatprep.subr.bf16.mxu0 0
        %2147 = vmatpush1.bf16.msra.mxu0 %v1994
        %2148 = vmatprep.subr.bf16.mxu0 0
        %2149 = vmatpush1.bf16.msra.mxu0 %v1995
        %2150 = vmatprep.subr.bf16.mxu0 0
        %2151 = vmatpush1.bf16.msra.mxu0 %v1996
        %2152 = vmatprep.subr.bf16.mxu0 0
        %2153 = vmatpush1.bf16.msra.mxu0 %v1997
        %2154 = vmatprep.subr.bf16.mxu0 0
        %2155 = vmatpush1.bf16.msra.mxu0 %v1998
        %2156 = vmatprep.subr.bf16.mxu0 0
        %2157 = vmatpush1.bf16.msra.mxu0 %v1999
        %2158 = vmatprep.subr.bf16.mxu0 0
        %2159 = vmatpush1.bf16.msra.mxu0 %v2000
        %2160 = vmatprep.subr.bf16.mxu0 0
        %2161 = vmatpush1.bf16.msra.mxu0 %v2001
        %2162 = vmatprep.subr.bf16.mxu0 0
        %2163 = vmatpush1.bf16.msra.mxu0 %v2002
        %2164 = vmatprep.mubr.bf16.mxu0 %v1750
        %2165 = vmatmul.mubr.bf16.gmra.mrb[0].mxu0 %v1749
        %v2166 = vpop.f32.mrb[0].mxu0
        %v2167 = vadd.f32 %v2070, %v2166
        %v2168 = vpop.f32.mrb[0].mxu0
        %v2169 = vpop.f32.mrb[0].mxu0
        %v2170 = vadd.f32 %v2073, %v2169
        %v2171 = vpop.f32.mrb[0].mxu0
        %2172 = vmatprep.mubr.bf16.mxu0 %v1754
        %2173 = vmatmul.mubr.bf16.gmra.mrb[0].mxu0 %v1753
        %v2174 = vpop.f32.mrb[0].mxu0
        %v2175 = vadd.f32 %v2078, %v2174
        %v2176 = vpop.f32.mrb[0].mxu0
        %v2177 = vpop.f32.mrb[0].mxu0
        %v2178 = vadd.f32 %v2081, %v2177
        %v2179 = vpop.f32.mrb[0].mxu0
        %2180 = vmatprep.mubr.bf16.mxu0 %v1758
        %2181 = vmatmul.mubr.bf16.gmra.mrb[0].mxu0 %v1757
        %v2182 = vpop.f32.mrb[0].mxu0
        %v2183 = vadd.f32 %v2086, %v2182
        %v2184 = vpop.f32.mrb[0].mxu0
        %v2185 = vpop.f32.mrb[0].mxu0
        %v2186 = vadd.f32 %v2089, %v2185
        %v2187 = vpop.f32.mrb[0].mxu0
        %2188 = vmatprep.mubr.bf16.mxu0 %v1762
        %2189 = vmatmul.mubr.bf16.gmra.mrb[0].mxu0 %v1761
        %v2190 = vpop.f32.mrb[0].mxu0
        %v2191 = vadd.f32 %v2094, %v2190
        %v2192 = vpop.f32.mrb[0].mxu0
        %v2193 = vpop.f32.mrb[0].mxu0
        %v2194 = vadd.f32 %v2097, %v2193
        %v2195 = vpop.f32.mrb[0].mxu0
        %2196 = vmatprep.mubr.bf16.mxu0 %v1766
        %2197 = vmatmul.mubr.bf16.gmra.mrb[0].mxu0 %v1765
        %v2198 = vpop.f32.mrb[0].mxu0
        %v2199 = vadd.f32 %v2102, %v2198
        %v2200 = vpop.f32.mrb[0].mxu0
        %v2201 = vpop.f32.mrb[0].mxu0
        %v2202 = vadd.f32 %v2105, %v2201
        %v2203 = vpop.f32.mrb[0].mxu0
        %2204 = vmatprep.mubr.bf16.mxu0 %v1770
        %2205 = vmatmul.mubr.bf16.gmra.mrb[0].mxu0 %v1769
        %v2206 = vpop.f32.mrb[0].mxu0
        %v2207 = vadd.f32 %v2110, %v2206
        %v2208 = vpop.f32.mrb[0].mxu0
        %v2209 = vpop.f32.mrb[0].mxu0
        %v2210 = vadd.f32 %v2113, %v2209
        %v2211 = vpop.f32.mrb[0].mxu0
        %2212 = vmatprep.mubr.bf16.mxu0 %v1774
        %2213 = vmatmul.mubr.bf16.gmra.mrb[0].mxu0 %v1773
        %v2214 = vpop.f32.mrb[0].mxu0
        %v2215 = vadd.f32 %v2118, %v2214
        %v2216 = vpop.f32.mrb[0].mxu0
        %v2217 = vpop.f32.mrb[0].mxu0
        %v2218 = vadd.f32 %v2121, %v2217
        %v2219 = vpop.f32.mrb[0].mxu0
        %2220 = vmatprep.mubr.bf16.mxu0 %v1778
        %2221 = vmatmul.mubr.bf16.gmra.mrb[0].mxu0 %v1777
        %v2222 = vpop.f32.mrb[0].mxu0
        %v2223 = vadd.f32 %v2126, %v2222
        %v2224 = vpop.f32.mrb[0].mxu0
        %v2225 = vpop.f32.mrb[0].mxu0
        %v2226 = vadd.f32 %v2129, %v2225
        %v2227 = vpop.f32.mrb[0].mxu0
        %2228 = vdwg.mxu0
        %2229 = vst [vmem:[%s245] sm:$0xff] %v2167
        %2230 = vst [vmem:[%s245 + $0x8] sm:$0xff] %v2170
        %2231 = vst [vmem:[%s245 + $0x10] sm:$0xff] %v2175
        %2232 = vst [vmem:[%s245 + $0x18] sm:$0xff] %v2178
        %2233 = vst [vmem:[%s245 + $0x20] sm:$0xff] %v2183
        %2234 = vst [vmem:[%s245 + $0x28] sm:$0xff] %v2186
        %2235 = vst [vmem:[%s245 + $0x30] sm:$0xff] %v2191
        %2236 = vst [vmem:[%s245 + $0x38] sm:$0xff] %v2194
        %2237 = vst [vmem:[%s245 + $0x40] sm:$0xff] %v2199
        %2238 = vst [vmem:[%s245 + $0x48] sm:$0xff] %v2202
        %2239 = vst [vmem:[%s245 + $0x50] sm:$0xff] %v2207
        %2240 = vst [vmem:[%s245 + $0x58] sm:$0xff] %v2210
        %2241 = vst [vmem:[%s245 + $0x60] sm:$0xff] %v2215
        %2242 = vst [vmem:[%s245 + $0x68] sm:$0xff] %v2218
        %2243 = vst [vmem:[%s245 + $0x70] sm:$0xff] %v2223
        %2244 = vst [vmem:[%s245 + $0x78] sm:$0xff] %v2226
        %s2245 = sand.u32 %s119, 1
        %s2246 = scalar_lea.sflag [#allocation4], %s2245
        %s2247 = sand.u32 %s119, 1
        %s2248 = smul.addr %s2247, 128
        %s2249 = scalar_lea.vmem [#allocation8], %s2248
        // Predicated region
        $region49: #{tpu_custom_call.1} parent=35 // pred_check
          %p2250 = pneg %p129
        $region50: #{tpu_custom_call.1} parent=35 // pred_check_branch
          %2252 = sbr.rel (%p2250) target = $region52
        $region51: #{tpu_custom_call.1} parent=35 // pred_region
          %s2253 = smul.u32 16, %s22
          %s2255 = ssub.s32 2048, 2048
          %2256 = vsyncadd %s2246, %s2255
          %s2257 = smul.addr %s2253, 128
          %s2258 = scalar_lea.hbm %s4, %s2257
          %s2259 = sshll.u32 %s2249, 4
          %s2260 = int_to_ptr.vmem [resolvable:$true] %s2259
          %2265 = dma.vmem_to_hbm [thread:$0]  %s2260, 2048, %s2258, %s2246, 128, 128, 8
        $region52: #{tpu_custom_call.1} parent=35 // pred_fallthru
          _
      $region36: #{tpu_custom_call.1} parent=5 // pred_fallthru
        _
      %p2266 = scmp.le.s32.totalorder 2, %s17
      // Predicated region
      $region53: #{tpu_custom_call.1} parent=5 // pred_check
        %p2267 = pneg %p2266
      $region54: #{tpu_custom_call.1} parent=5 // pred_check_branch
        %2269 = sbr.rel (%p2267) target = $region56
      $region55: #{tpu_custom_call.1} parent=5 // pred_region
        %s2270 = ssub.s32 %s17, 2
        // Predicated region
        $region57: #{tpu_custom_call.1} parent=55 // pred_check
          %p2271 = pneg %p135
        $region58: #{tpu_custom_call.1} parent=55 // pred_check_branch
          %2273 = sbr.rel (%p2271) target = $region60
        $region59: #{tpu_custom_call.1} parent=55 // pred_region
          %s2274 = sand.u32 %s120, 1
          %s2275 = scalar_lea.sflag [#allocation4], %s2274
          %s2276 = sand.u32 %s120, 1
          %s2277 = smul.addr %s2276, 128
          %s2278 = scalar_lea.vmem [#allocation8], %s2277
          %2279 = dma.done %s2275, 2048
        $region60: #{tpu_custom_call.1} parent=55 // pred_fallthru
          _
      $region56: #{tpu_custom_call.1} parent=5 // pred_fallthru
        _
    $region6: #{tpu_custom_call.1} parent=1 // loop_footer
      %s21 = sadd.s32 1, %s17
    $region7: #{tpu_custom_call.1} parent=1 // loop_footer_branch
      %16 = sbr.rel target = $region3
    $region8: #{tpu_custom_call.1} parent=1 // loop_exit
      _
    %2280 = vsyncpa [#allocation3], 1
    %s2281 = scalar_lea.sflag [#allocation3], 1
    %2282 = vsyncpa %s2281, 1
    %2283 = vsyncpa [#allocation6], 1
    %2284 = vsyncpa [#allocation4], 1
    %s2285 = scalar_lea.sflag [#allocation4], 1
    %2286 = vsyncpa %s2285, 1

// kernel: tpu_custom_call.1
$region0: #{tpu_custom_call.1}
  #allocation0 [shape = 'u32[]', space=smem, size = 0x4, offset = 0x4, fixed_abs, tag = 'smem constant byte address 0x4 - core index']
  #allocation1 [shape = 'u32[144,128]{1,0:T(1,128)}', space=vmem, size = 0x12000, scoped, tag = 'internal scratch']
  %s0 = inlined_call_operand.hbm [shape: bf16[256,512], index: 0, kind: input, shape index: {}]
  %s1 = inlined_call_operand.hbm [shape: bf16[512,512], index: 1, kind: input, shape index: {}]
  %s2 = inlined_call_operand.vmem [shape: f32[1,512], index: 2, kind: input, shape index: {}]
  %s3 = inlined_call_operand.hbm [shape: bf16[512,128], index: 3, kind: input, shape index: {}]
  %s4 = inlined_call_operand.hbm [shape: f32[256,128], index: 4, kind: output, shape index: {}]
  %s5 = sld [smem:[#allocation0]]
  $region61: #{tpu_custom_call.1} parent=0
    _
  %s7 = ssub.s32 1, %s5
  %s8 = scalar_select 0, %s7, %s5
  $region1: #{tpu_custom_call.1} parent=0
    #allocation2 [shape = 'u8[262144]{0}', space=vmem, size = 0x40000, scoped, tag = 'input window, operand 0']
    #allocation3 [shape = 's32[2]{0}', space=sflag, size = 0x8, scoped, tag = 'scoped memory for tpu_custom_call.1']
    #allocation4 [shape = 's32[2]{0}', space=sflag, size = 0x8, scoped, tag = 'scoped memory for tpu_custom_call.1']
    #allocation5 [shape = 'u8[524288]{0}', space=vmem, size = 0x80000, scoped, tag = 'input window, operand 1, single buffered']
    #allocation6 [shape = 's32[1]{0}', space=sflag, size = 0x4, scoped, tag = 'scoped memory for tpu_custom_call.1']
    #allocation7 [shape = 'u8[131072]{0}', space=vmem, size = 0x20000, scoped, tag = 'input window, operand 3, single buffered']
    #allocation8 [shape = 'u8[131072]{0}', space=vmem, size = 0x20000, scoped, tag = 'output window, operand 0']
    %9 = vsyncpa [#allocation3], 0
    %s10 = scalar_lea.sflag [#allocation3], 1
    %11 = vsyncpa %s10, 0
    %12 = vsyncpa [#allocation6], 0
    %13 = vsyncpa [#allocation4], 0
    %s14 = scalar_lea.sflag [#allocation4], 1
    %15 = vsyncpa %s14, 0
    loop: start=0, step=1, limit=4
    $region2: #{tpu_custom_call.1} parent=1 // loop_pre_header
      _
    $region3: #{tpu_custom_call.1} parent=1 // loop_header
      %s17 = sphi 0, %s21
      %p18 = scmp.ge.s32.totalorder %s17, 4
      %s27 = sphi 0, %s29
      %s30 = sphi 0, %s27
      %s31 = sphi 0, %s30
      %s47 = sphi 0, %s31
      %s51 = sphi 0, %s51
      %s53 = sphi 0, %s51
      %s54 = sphi 0, %s53
      %s68 = sphi 0, %s54
      %s72 = sphi 0, %s72
      %s74 = sphi 0, %s72
      %s75 = sphi 0, %s74
      %s89 = sphi 0, %s75
      %s93 = sphi 0, %s93
      %s95 = sphi 0, %s93
      %s96 = sphi 0, %s95
      %s110 = sphi 0, %s96
      %s116 = sphi 0, %s118
      %s119 = sphi 0, %s116
      %s120 = sphi 0, %s119
      %s136 = sphi 0, %s120
    $region4: #{tpu_custom_call.1} parent=1 // loop_header_branch
      %20 = sbr.rel (%p18) target = $region8
    $region5: #{tpu_custom_call.1} parent=1 // loop_body
      %s22 = ssub.s32 %s17, 1
      %s23 = ssub.s32 %s17, 2
      %s24 = sadd.s32 %s17, 1
      %s25 = ssub.s32 %s17, %s24
      %p26 = scmp.eq.s32.totalorder %s25, 0
      %s28 = sadd.s32 %s27, 1
      %s29 = scalar_select %p26, %s27, %s28
      %p32 = pneg %p26
      %p33 = scmp.eq.s32.totalorder %s17, 1
      %p34 = por %p32, %p33
      %p35 = scmp.ne.s32.totalorder %s27, %s30
      %p36 = scmp.eq.s32.totalorder %s17, 0
      %p37 = por %p35, %p36
      %p38 = scmp.ne.s32.totalorder %s27, %s30
      %p39 = scmp.eq.s32.totalorder %s22, 1
      %p40 = por %p38, %p39
      %p41 = scmp.ne.s32.totalorder %s30, %s31
      %p42 = scmp.eq.s32.totalorder %s22, 0
      %p43 = por %p41, %p42
      %p44 = scmp.ne.s32.totalorder %s30, %s31
      %p45 = scmp.eq.s32.totalorder %s23, 1
      %p46 = por %p44, %p45
      %p48 = scmp.ne.s32.totalorder %s31, %s47
      %p49 = scmp.eq.s32.totalorder %s23, 0
      %p50 = por %p48, %p49
      %s52 = sadd.s32 %s51, 1
      %p55 = scmp.eq.s32.totalorder %s17, 1
      %p56 = scmp.ne.s32.totalorder %s51, %s53
      %p57 = scmp.eq.s32.totalorder %s17, 0
      %p58 = por %p56, %p57
      %p59 = scmp.ne.s32.totalorder %s51, %s53
      %p60 = scmp.eq.s32.totalorder %s22, 1
      %p61 = por %p59, %p60
      %p62 = scmp.ne.s32.totalorder %s53, %s54
      %p63 = scmp.eq.s32.totalorder %s22, 0
      %p64 = por %p62, %p63
      %p65 = scmp.ne.s32.totalorder %s53, %s54
      %p66 = scmp.eq.s32.totalorder %s23, 1
      %p67 = por %p65, %p66
      %p69 = scmp.ne.s32.totalorder %s54, %s68
      %p70 = scmp.eq.s32.totalorder %s23, 0
      %p71 = por %p69, %p70
      %s73 = sadd.s32 %s72, 1
      %p76 = scmp.eq.s32.totalorder %s17, 1
      %p77 = scmp.ne.s32.totalorder %s72, %s74
      %p78 = scmp.eq.s32.totalorder %s17, 0
      %p79 = por %p77, %p78
      %p80 = scmp.ne.s32.totalorder %s72, %s74
      %p81 = scmp.eq.s32.totalorder %s22, 1
      %p82 = por %p80, %p81
      %p83 = scmp.ne.s32.totalorder %s74, %s75
      %p84 = scmp.eq.s32.totalorder %s22, 0
      %p85 = por %p83, %p84
      %p86 = scmp.ne.s32.totalorder %s74, %s75
      %p87 = scmp.eq.s32.totalorder %s23, 1
      %p88 = por %p86, %p87
      %p90 = scmp.ne.s32.totalorder %s75, %s89
      %p91 = scmp.eq.s32.totalorder %s23, 0
      %p92 = por %p90, %p91
      %s94 = sadd.s32 %s93, 1
      %p97 = scmp.eq.s32.totalorder %s17, 1
      %p98 = scmp.ne.s32.totalorder %s93, %s95
      %p99 = scmp.eq.s32.totalorder %s17, 0
      %p100 = por %p98, %p99
      %p101 = scmp.ne.s32.totalorder %s93, %s95
      %p102 = scmp.eq.s32.totalorder %s22, 1
      %p103 = por %p101, %p102
      %p104 = scmp.ne.s32.totalorder %s95, %s96
      %p105 = scmp.eq.s32.totalorder %s22, 0
      %p106 = por %p104, %p105
      %p107 = scmp.ne.s32.totalorder %s95, %s96
      %p108 = scmp.eq.s32.totalorder %s23, 1
      %p109 = por %p107, %p108
      %p111 = scmp.ne.s32.totalorder %s96, %s110
      %p112 = scmp.eq.s32.totalorder %s23, 0
      %p113 = por %p111, %p112
      %s114 = ssub.s32 %s17, %s24
      %p115 = scmp.eq.s32.totalorder %s114, 0
      %s117 = sadd.s32 %s116, 1
      %s118 = scalar_select %p115, %s116, %s117
      %p121 = pneg %p115
      %p122 = scmp.eq.s32.totalorder %s17, 1
      %p123 = por %p121, %p122
      %p124 = scmp.ne.s32.totalorder %s116, %s119
      %p125 = scmp.eq.s32.totalorder %s17, 0
      %p126 = por %p124, %p125
      %p127 = scmp.ne.s32.totalorder %s116, %s119
      %p128 = scmp.eq.s32.totalorder %s22, 1
      %p129 = por %p127, %p128
      %p130 = scmp.ne.s32.totalorder %s119, %s120
      %p131 = scmp.eq.s32.totalorder %s22, 0
      %p132 = por %p130, %p131
      %p133 = scmp.ne.s32.totalorder %s119, %s120
      %p134 = scmp.eq.s32.totalorder %s23, 1
      %p135 = por %p133, %p134
      %p137 = scmp.ne.s32.totalorder %s120, %s136
      %p138 = scmp.eq.s32.totalorder %s23, 0
      %p139 = por %p137, %p138
      %p140 = scmp.le.s32.totalorder 1, %s17
      %p141 = scmp.lt.s32.totalorder %s17, 3
      %p142 = pnand %p140, %p141
      %p143 = pneg %p142
      // Predicated region
      $region9: #{tpu_custom_call.1} parent=5 // pred_check
        _
      $region10: #{tpu_custom_call.1} parent=5 // pred_check_branch
        %145 = sbr.rel (%p142) target = $region12
      $region11: #{tpu_custom_call.1} parent=5 // pred_region
        %s146 = ssub.s32 %s17, 1
        // Predicated region
        $region13: #{tpu_custom_call.1} parent=11 // pred_check
          %p147 = pneg %p64
        $region14: #{tpu_custom_call.1} parent=11 // pred_check_branch
          %149 = sbr.rel (%p147) target = $region16
        $region15: #{tpu_custom_call.1} parent=11 // pred_region
          %s151 = ssub.s32 16384, 16384
          %152 = vsyncadd [#allocation6], %s151
          %s153 = sshll.u32 [#allocation5], 4
          %s154 = int_to_ptr.vmem [resolvable:$true] %s153
          %159 = dma.hbm_to_vmem [thread:$0]  %s1, 16384, %s154, [#allocation6], 256, 256, 16
        $region16: #{tpu_custom_call.1} parent=11 // pred_fallthru
          _
        // Predicated region
        $region17: #{tpu_custom_call.1} parent=11 // pred_check
          %p160 = pneg %p85
        $region18: #{tpu_custom_call.1} parent=11 // pred_check_branch
          %162 = sbr.rel (%p160) target = $region20
        $region19: #{tpu_custom_call.1} parent=11 // pred_region
          _
        $region20: #{tpu_custom_call.1} parent=11 // pred_fallthru
          _
        // Predicated region
        $region21: #{tpu_custom_call.1} parent=11 // pred_check
          %p163 = pneg %p106
        $region22: #{tpu_custom_call.1} parent=11 // pred_check_branch
          %165 = sbr.rel (%p163) target = $region24
        $region23: #{tpu_custom_call.1} parent=11 // pred_region
          %s167 = ssub.s32 4096, 4096
          %168 = vsyncadd [#allocation6], %s167
          %s169 = sshll.u32 [#allocation7], 4
          %s170 = int_to_ptr.vmem [resolvable:$true] %s169
          %175 = dma.hbm_to_vmem [thread:$0]  %s3, 4096, %s170, [#allocation6], 64, 64, 4
        $region24: #{tpu_custom_call.1} parent=11 // pred_fallthru
          _
      $region12: #{tpu_custom_call.1} parent=5 // pred_fallthru
        _
      %p176 = scmp.lt.s32.totalorder %s17, 2
      // Predicated region
      $region25: #{tpu_custom_call.1} parent=5 // pred_check
        %p177 = pneg %p176
      $region26: #{tpu_custom_call.1} parent=5 // pred_check_branch
        %179 = sbr.rel (%p177) target = $region28
      $region27: #{tpu_custom_call.1} parent=5 // pred_region
        // Predicated region
        $region29: #{tpu_custom_call.1} parent=27 // pred_check
          %p180 = pneg %p37
        $region30: #{tpu_custom_call.1} parent=27 // pred_check_branch
          %182 = sbr.rel (%p180) target = $region32
        $region31: #{tpu_custom_call.1} parent=27 // pred_region
          %s183 = sand.u32 %s27, 1
          %s184 = scalar_lea.sflag [#allocation3], %s183
          %s185 = sand.u32 %s27, 1
          %s186 = smul.addr %s185, 256
          %s187 = scalar_lea.vmem [#allocation2], %s186
          %s188 = smul.u32 16, %s17
          %s190 = ssub.s32 4096, 4096
          %191 = vsyncadd %s184, %s190
          %s192 = smul.addr %s188, 4
          %s193 = smul.addr %s192, 64
          %s194 = scalar_lea.hbm %s0, %s193
          %s195 = sshll.u32 %s187, 4
          %s196 = int_to_ptr.vmem [resolvable:$true] %s195
          %201 = dma.hbm_to_vmem [thread:$0]  %s194, 4096, %s196, %s184, 256, 256, 16
        $region32: #{tpu_custom_call.1} parent=27 // pred_fallthru
          _
      $region28: #{tpu_custom_call.1} parent=5 // pred_fallthru
        _
      %p202 = scmp.le.s32.totalorder 1, %s17
      %p203 = scmp.lt.s32.totalorder %s17, 3
      %p204 = pnand %p202, %p203
      %p205 = pneg %p204
      // Predicated region
      $region33: #{tpu_custom_call.1} parent=5 // pred_check
        _
      $region34: #{tpu_custom_call.1} parent=5 // pred_check_branch
        %207 = sbr.rel (%p204) target = $region36
      $region35: #{tpu_custom_call.1} parent=5 // pred_region
        %s208 = ssub.s32 %s17, 1
        %s209 = sand.u32 %s30, 1
        %s210 = scalar_lea.sflag [#allocation3], %s209
        %s211 = sand.u32 %s30, 1
        %s212 = smul.addr %s211, 256
        %s213 = scalar_lea.vmem [#allocation2], %s212
        // Predicated region
        $region37: #{tpu_custom_call.1} parent=35 // pred_check
          %p214 = pneg %p43
        $region38: #{tpu_custom_call.1} parent=35 // pred_check_branch
          %216 = sbr.rel (%p214) target = $region40
        $region39: #{tpu_custom_call.1} parent=35 // pred_region
          %217 = dma.done %s210, 4096
        $region40: #{tpu_custom_call.1} parent=35 // pred_fallthru
          _
        // Predicated region
        $region41: #{tpu_custom_call.1} parent=35 // pred_check
          %p218 = pneg %p64
        $region42: #{tpu_custom_call.1} parent=35 // pred_check_branch
          %220 = sbr.rel (%p218) target = $region44
        $region43: #{tpu_custom_call.1} parent=35 // pred_region
          %221 = dma.done [#allocation6], 16384
        $region44: #{tpu_custom_call.1} parent=35 // pred_fallthru
          _
        // Predicated region
        $region45: #{tpu_custom_call.1} parent=35 // pred_check
          %p222 = pneg %p106
        $region46: #{tpu_custom_call.1} parent=35 // pred_check_branch
          %224 = sbr.rel (%p222) target = $region48
        $region47: #{tpu_custom_call.1} parent=35 // pred_region
          %225 = dma.done [#allocation6], 4096
        $region48: #{tpu_custom_call.1} parent=35 // pred_fallthru
          _
        %s226 = sand.u32 %s30, 1
        %s227 = scalar_lea.sflag [#allocation3], %s226
        %s228 = sand.u32 %s30, 1
        %s229 = smul.addr %s228, 256
        %s230 = scalar_lea.vmem [#allocation2], %s229
        %p231 = pneg %p43
        %p232 = pneg %p40
        %p233 = pneg %p64
        %p234 = pneg %p61
        %p235 = pneg %p85
        %p236 = pneg %p82
        %p237 = pneg %p106
        %p238 = pneg %p103
        %p239 = pneg %p132
        %p240 = pneg %p129
        %s241 = sand.u32 %s119, 1
        %s242 = scalar_lea.sflag [#allocation4], %s241
        %s243 = sand.u32 %s119, 1
        %s244 = smul.addr %s243, 128
        %s245 = scalar_lea.vmem [#allocation8], %s244
        %s246 = smul.u32 16, %s22
        %s247 = smul.u32 16, %s22
        %v249 = vld [vmem:[%s213] sm:$0xff]
        %v250 = vld [vmem:[%s213 + $0x8] sm:$0xff]
        %v251 = vld [vmem:[%s213 + $0x10] sm:$0xff]
        %v252 = vld [vmem:[%s213 + $0x18] sm:$0xff]
        %v253 = vld [vmem:[%s213 + $0x20] sm:$0xff]
        %v254 = vld [vmem:[%s213 + $0x28] sm:$0xff]
        %v255 = vld [vmem:[%s213 + $0x30] sm:$0xff]
        %v256 = vld [vmem:[%s213 + $0x38] sm:$0xff]
        %v257 = vld [vmem:[%s213 + $0x40] sm:$0xff]
        %v258 = vld [vmem:[%s213 + $0x48] sm:$0xff]
        %v259 = vld [vmem:[%s213 + $0x50] sm:$0xff]
        %v260 = vld [vmem:[%s213 + $0x58] sm:$0xff]
        %v261 = vld [vmem:[%s213 + $0x60] sm:$0xff]
        %v262 = vld [vmem:[%s213 + $0x68] sm:$0xff]
        %v263 = vld [vmem:[%s213 + $0x70] sm:$0xff]
        %v264 = vld [vmem:[%s213 + $0x78] sm:$0xff]
        %v265 = vld [vmem:[%s213 + $0x80] sm:$0xff]
        %v266 = vld [vmem:[%s213 + $0x88] sm:$0xff]
        %v267 = vld [vmem:[%s213 + $0x90] sm:$0xff]
        %v268 = vld [vmem:[%s213 + $0x98] sm:$0xff]
        %v269 = vld [vmem:[%s213 + $0xa0] sm:$0xff]
        %v270 = vld [vmem:[%s213 + $0xa8] sm:$0xff]
        %v271 = vld [vmem:[%s213 + $0xb0] sm:$0xff]
        %v272 = vld [vmem:[%s213 + $0xb8] sm:$0xff]
        %v273 = vld [vmem:[%s213 + $0xc0] sm:$0xff]
        %v274 = vld [vmem:[%s213 + $0xc8] sm:$0xff]
        %v275 = vld [vmem:[%s213 + $0xd0] sm:$0xff]
        %v276 = vld [vmem:[%s213 + $0xd8] sm:$0xff]
        %v277 = vld [vmem:[%s213 + $0xe0] sm:$0xff]
        %v278 = vld [vmem:[%s213 + $0xe8] sm:$0xff]
        %v279 = vld [vmem:[%s213 + $0xf0] sm:$0xff]
        %v280 = vld [vmem:[%s213 + $0xf8] sm:$0xff]
        %v281 = vld [vmem:[#allocation5] sm:$0xff]
        %v282 = vld [vmem:[#allocation5 + $0x8] sm:$0xff]
        %v283 = vld [vmem:[#allocation5 + $0x10] sm:$0xff]
        %v284 = vld [vmem:[#allocation5 + $0x18] sm:$0xff]
        %v285 = vld [vmem:[#allocation5 + $0x20] sm:$0xff]
        %v286 = vld [vmem:[#allocation5 + $0x28] sm:$0xff]
        %v287 = vld [vmem:[#allocation5 + $0x30] sm:$0xff]
        %v288 = vld [vmem:[#allocation5 + $0x38] sm:$0xff]
        %v289 = vld [vmem:[#allocation5 + $0x40] sm:$0xff]
        %v290 = vld [vmem:[#allocation5 + $0x48] sm:$0xff]
        %v291 = vld [vmem:[#allocation5 + $0x50] sm:$0xff]
        %v292 = vld [vmem:[#allocation5 + $0x58] sm:$0xff]
        %v293 = vld [vmem:[#allocation5 + $0x60] sm:$0xff]
        %v294 = vld [vmem:[#allocation5 + $0x68] sm:$0xff]
        %v295 = vld [vmem:[#allocation5 + $0x70] sm:$0xff]
        %v296 = vld [vmem:[#allocation5 + $0x78] sm:$0xff]
        %v297 = vld [vmem:[#allocation5 + $0x80] sm:$0xff]
        %v298 = vld [vmem:[#allocation5 + $0x88] sm:$0xff]
        %v299 = vld [vmem:[#allocation5 + $0x90] sm:$0xff]
        %v300 = vld [vmem:[#allocation5 + $0x98] sm:$0xff]
        %v301 = vld [vmem:[#allocation5 + $0xa0] sm:$0xff]
        %v302 = vld [vmem:[#allocation5 + $0xa8] sm:$0xff]
        %v303 = vld [vmem:[#allocation5 + $0xb0] sm:$0xff]
        %v304 = vld [vmem:[#allocation5 + $0xb8] sm:$0xff]
        %v305 = vld [vmem:[#allocation5 + $0xc0] sm:$0xff]
        %v306 = vld [vmem:[#allocation5 + $0xc8] sm:$0xff]
        %v307 = vld [vmem:[#allocation5 + $0xd0] sm:$0xff]
        %v308 = vld [vmem:[#allocation5 + $0xd8] sm:$0xff]
        %v309 = vld [vmem:[#allocation5 + $0xe0] sm:$0xff]
        %v310 = vld [vmem:[#allocation5 + $0xe8] sm:$0xff]
        %v311 = vld [vmem:[#allocation5 + $0xf0] sm:$0xff]
        %v312 = vld [vmem:[#allocation5 + $0xf8] sm:$0xff]
        %v313 = vld [vmem:[#allocation5 + $0x100] sm:$0xff]
        %v314 = vld [vmem:[#allocation5 + $0x108] sm:$0xff]
        %v315 = vld [vmem:[#allocation5 + $0x110] sm:$0xff]
        %v316 = vld [vmem:[#allocation5 + $0x118] sm:$0xff]
        %v317 = vld [vmem:[#allocation5 + $0x120] sm:$0xff]
        %v318 = vld [vmem:[#allocation5 + $0x128] sm:$0xff]
        %v319 = vld [vmem:[#allocation5 + $0x130] sm:$0xff]
        %v320 = vld [vmem:[#allocation5 + $0x138] sm:$0xff]
        %v321 = vld [vmem:[#allocation5 + $0x140] sm:$0xff]
        %v322 = vld [vmem:[#allocation5 + $0x148] sm:$0xff]
        %v323 = vld [vmem:[#allocation5 + $0x150] sm:$0xff]
        %v324 = vld [vmem:[#allocation5 + $0x158] sm:$0xff]
        %v325 = vld [vmem:[#allocation5 + $0x160] sm:$0xff]
        %v326 = vld [vmem:[#allocation5 + $0x168] sm:$0xff]
        %v327 = vld [vmem:[#allocation5 + $0x170] sm:$0xff]
        %v328 = vld [vmem:[#allocation5 + $0x178] sm:$0xff]
        %v329 = vld [vmem:[#allocation5 + $0x180] sm:$0xff]
        %v330 = vld [vmem:[#allocation5 + $0x188] sm:$0xff]
        %v331 = vld [vmem:[#allocation5 + $0x190] sm:$0xff]
        %v332 = vld [vmem:[#allocation5 + $0x198] sm:$0xff]
        %v333 = vld [vmem:[#allocation5 + $0x1a0] sm:$0xff]
        %v334 = vld [vmem:[#allocation5 + $0x1a8] sm:$0xff]
        %v335 = vld [vmem:[#allocation5 + $0x1b0] sm:$0xff]
        %v336 = vld [vmem:[#allocation5 + $0x1b8] sm:$0xff]
        %v337 = vld [vmem:[#allocation5 + $0x1c0] sm:$0xff]
        %v338 = vld [vmem:[#allocation5 + $0x1c8] sm:$0xff]
        %v339 = vld [vmem:[#allocation5 + $0x1d0] sm:$0xff]
        %v340 = vld [vmem:[#allocation5 + $0x1d8] sm:$0xff]
        %v341 = vld [vmem:[#allocation5 + $0x1e0] sm:$0xff]
        %v342 = vld [vmem:[#allocation5 + $0x1e8] sm:$0xff]
        %v343 = vld [vmem:[#allocation5 + $0x1f0] sm:$0xff]
        %v344 = vld [vmem:[#allocation5 + $0x1f8] sm:$0xff]
        %v345 = vld [vmem:[#allocation5 + $0x200] sm:$0xff]
        %v346 = vld [vmem:[#allocation5 + $0x208] sm:$0xff]
        %v347 = vld [vmem:[#allocation5 + $0x210] sm:$0xff]
        %v348 = vld [vmem:[#allocation5 + $0x218] sm:$0xff]
        %v349 = vld [vmem:[#allocation5 + $0x220] sm:$0xff]
        %v350 = vld [vmem:[#allocation5 + $0x228] sm:$0xff]
        %v351 = vld [vmem:[#allocation5 + $0x230] sm:$0xff]
        %v352 = vld [vmem:[#allocation5 + $0x238] sm:$0xff]
        %v353 = vld [vmem:[#allocation5 + $0x240] sm:$0xff]
        %v354 = vld [vmem:[#allocation5 + $0x248] sm:$0xff]
        %v355 = vld [vmem:[#allocation5 + $0x250] sm:$0xff]
        %v356 = vld [vmem:[#allocation5 + $0x258] sm:$0xff]
        %v357 = vld [vmem:[#allocation5 + $0x260] sm:$0xff]
        %v358 = vld [vmem:[#allocation5 + $0x268] sm:$0xff]
        %v359 = vld [vmem:[#allocation5 + $0x270] sm:$0xff]
        %v360 = vld [vmem:[#allocation5 + $0x278] sm:$0xff]
        %v361 = vld [vmem:[#allocation5 + $0x280] sm:$0xff]
        %v362 = vld [vmem:[#allocation5 + $0x288] sm:$0xff]
        %v363 = vld [vmem:[#allocation5 + $0x290] sm:$0xff]
        %v364 = vld [vmem:[#allocation5 + $0x298] sm:$0xff]
        %v365 = vld [vmem:[#allocation5 + $0x2a0] sm:$0xff]
        %v366 = vld [vmem:[#allocation5 + $0x2a8] sm:$0xff]
        %v367 = vld [vmem:[#allocation5 + $0x2b0] sm:$0xff]
        %v368 = vld [vmem:[#allocation5 + $0x2b8] sm:$0xff]
        %v369 = vld [vmem:[#allocation5 + $0x2c0] sm:$0xff]
        %v370 = vld [vmem:[#allocation5 + $0x2c8] sm:$0xff]
        %v371 = vld [vmem:[#allocation5 + $0x2d0] sm:$0xff]
        %v372 = vld [vmem:[#allocation5 + $0x2d8] sm:$0xff]
        %v373 = vld [vmem:[#allocation5 + $0x2e0] sm:$0xff]
        %v374 = vld [vmem:[#allocation5 + $0x2e8] sm:$0xff]
        %v375 = vld [vmem:[#allocation5 + $0x2f0] sm:$0xff]
        %v376 = vld [vmem:[#allocation5 + $0x2f8] sm:$0xff]
        %v377 = vld [vmem:[#allocation5 + $0x300] sm:$0xff]
        %v378 = vld [vmem:[#allocation5 + $0x308] sm:$0xff]
        %v379 = vld [vmem:[#allocation5 + $0x310] sm:$0xff]
        %v380 = vld [vmem:[#allocation5 + $0x318] sm:$0xff]
        %v381 = vld [vmem:[#allocation5 + $0x320] sm:$0xff]
        %v382 = vld [vmem:[#allocation5 + $0x328] sm:$0xff]
        %v383 = vld [vmem:[#allocation5 + $0x330] sm:$0xff]
        %v384 = vld [vmem:[#allocation5 + $0x338] sm:$0xff]
        %v385 = vld [vmem:[#allocation5 + $0x340] sm:$0xff]
        %v386 = vld [vmem:[#allocation5 + $0x348] sm:$0xff]
        %v387 = vld [vmem:[#allocation5 + $0x350] sm:$0xff]
        %v388 = vld [vmem:[#allocation5 + $0x358] sm:$0xff]
        %v389 = vld [vmem:[#allocation5 + $0x360] sm:$0xff]
        %v390 = vld [vmem:[#allocation5 + $0x368] sm:$0xff]
        %v391 = vld [vmem:[#allocation5 + $0x370] sm:$0xff]
        %v392 = vld [vmem:[#allocation5 + $0x378] sm:$0xff]
        %v393 = vld [vmem:[#allocation5 + $0x380] sm:$0xff]
        %v394 = vld [vmem:[#allocation5 + $0x388] sm:$0xff]
        %v395 = vld [vmem:[#allocation5 + $0x390] sm:$0xff]
        %v396 = vld [vmem:[#allocation5 + $0x398] sm:$0xff]
        %v397 = vld [vmem:[#allocation5 + $0x3a0] sm:$0xff]
        %v398 = vld [vmem:[#allocation5 + $0x3a8] sm:$0xff]
        %v399 = vld [vmem:[#allocation5 + $0x3b0] sm:$0xff]
        %v400 = vld [vmem:[#allocation5 + $0x3b8] sm:$0xff]
        %v401 = vld [vmem:[#allocation5 + $0x3c0] sm:$0xff]
        %v402 = vld [vmem:[#allocation5 + $0x3c8] sm:$0xff]
        %v403 = vld [vmem:[#allocation5 + $0x3d0] sm:$0xff]
        %v404 = vld [vmem:[#allocation5 + $0x3d8] sm:$0xff]
        %v405 = vld [vmem:[#allocation5 + $0x3e0] sm:$0xff]
        %v406 = vld [vmem:[#allocation5 + $0x3e8] sm:$0xff]
        %v407 = vld [vmem:[#allocation5 + $0x3f0] sm:$0xff]
        %v408 = vld [vmem:[#allocation5 + $0x3f8] sm:$0xff]
        %v409 = vld [vmem:[%s2] sm:$0xf]
        %v411 = vlaneseq
        %v412 = vshrl.u32 %v411, 7
        %v413 = vsub.s32 0, %v412
        %v414 = vrot.slane %v409, %v413
        %v415 = vlaneseq
        %v416 = vshrl.u32 %v415, 7
        %v417 = vsub.s32 1, %v416
        %v418 = vrot.slane %v409, %v417
        %v419 = vlaneseq
        %v420 = vshrl.u32 %v419, 7
        %v421 = vsub.s32 2, %v420
        %v422 = vrot.slane %v409, %v421
        %v423 = vlaneseq
        %v424 = vshrl.u32 %v423, 7
        %v425 = vsub.s32 3, %v424
        %v426 = vrot.slane %v409, %v425
        %v463 = vunpack.c.l.b16 %v249
        %v464 = vunpack.c.h.b16 %v249
        %v465 = vunpack.c.l.b16 %v250
        %v466 = vunpack.c.h.b16 %v250
        %v467 = vunpack.c.l.b16 %v251
        %v468 = vunpack.c.h.b16 %v251
        %v469 = vunpack.c.l.b16 %v252
        %v470 = vunpack.c.h.b16 %v252
        %v471 = vunpack.c.l.b16 %v253
        %v472 = vunpack.c.h.b16 %v253
        %v473 = vunpack.c.l.b16 %v254
        %v474 = vunpack.c.h.b16 %v254
        %v475 = vunpack.c.l.b16 %v255
        %v476 = vunpack.c.h.b16 %v255
        %v477 = vunpack.c.l.b16 %v256
        %v478 = vunpack.c.h.b16 %v256
        %v479 = vunpack.c.l.b16 %v257
        %v480 = vunpack.c.h.b16 %v257
        %v481 = vunpack.c.l.b16 %v258
        %v482 = vunpack.c.h.b16 %v258
        %v483 = vunpack.c.l.b16 %v259
        %v484 = vunpack.c.h.b16 %v259
        %v485 = vunpack.c.l.b16 %v260
        %v486 = vunpack.c.h.b16 %v260
        %v487 = vunpack.c.l.b16 %v261
        %v488 = vunpack.c.h.b16 %v261
        %v489 = vunpack.c.l.b16 %v262
        %v490 = vunpack.c.h.b16 %v262
        %v491 = vunpack.c.l.b16 %v263
        %v492 = vunpack.c.h.b16 %v263
        %v493 = vunpack.c.l.b16 %v264
        %v494 = vunpack.c.h.b16 %v264
        %v495 = vunpack.c.l.b16 %v265
        %v496 = vunpack.c.h.b16 %v265
        %v497 = vunpack.c.l.b16 %v266
        %v498 = vunpack.c.h.b16 %v266
        %v499 = vunpack.c.l.b16 %v267
        %v500 = vunpack.c.h.b16 %v267
        %v501 = vunpack.c.l.b16 %v268
        %v502 = vunpack.c.h.b16 %v268
        %v503 = vunpack.c.l.b16 %v269
        %v504 = vunpack.c.h.b16 %v269
        %v505 = vunpack.c.l.b16 %v270
        %v506 = vunpack.c.h.b16 %v270
        %v507 = vunpack.c.l.b16 %v271
        %v508 = vunpack.c.h.b16 %v271
        %v509 = vunpack.c.l.b16 %v272
        %v510 = vunpack.c.h.b16 %v272
        %v511 = vunpack.c.l.b16 %v273
        %v512 = vunpack.c.h.b16 %v273
        %v513 = vunpack.c.l.b16 %v274
        %v514 = vunpack.c.h.b16 %v274
        %v515 = vunpack.c.l.b16 %v275
        %v516 = vunpack.c.h.b16 %v275
        %v517 = vunpack.c.l.b16 %v276
        %v518 = vunpack.c.h.b16 %v276
        %v519 = vunpack.c.l.b16 %v277
        %v520 = vunpack.c.h.b16 %v277
        %v521 = vunpack.c.l.b16 %v278
        %v522 = vunpack.c.h.b16 %v278
        %v523 = vunpack.c.l.b16 %v279
        %v524 = vunpack.c.h.b16 %v279
        %v525 = vunpack.c.l.b16 %v280
        %v526 = vunpack.c.h.b16 %v280
        %v527 = vpack.c.b16 %v467, %v463
        %v528 = vpack.c.b16 %v468, %v464
        %v529 = vpack.c.b16 %v469, %v465
        %v530 = vpack.c.b16 %v470, %v466
        %v531 = vpack.c.b16 %v475, %v471
        %v532 = vpack.c.b16 %v476, %v472
        %v533 = vpack.c.b16 %v477, %v473
        %v534 = vpack.c.b16 %v478, %v474
        %v535 = vpack.c.b16 %v483, %v479
        %v536 = vpack.c.b16 %v484, %v480
        %v537 = vpack.c.b16 %v485, %v481
        %v538 = vpack.c.b16 %v486, %v482
        %v539 = vpack.c.b16 %v491, %v487
        %v540 = vpack.c.b16 %v492, %v488
        %v541 = vpack.c.b16 %v493, %v489
        %v542 = vpack.c.b16 %v494, %v490
        %v543 = vpack.c.b16 %v499, %v495
        %v544 = vpack.c.b16 %v500, %v496
        %v545 = vpack.c.b16 %v501, %v497
        %v546 = vpack.c.b16 %v502, %v498
        %v547 = vpack.c.b16 %v507, %v503
        %v548 = vpack.c.b16 %v508, %v504
        %v549 = vpack.c.b16 %v509, %v505
        %v550 = vpack.c.b16 %v510, %v506
        %v551 = vpack.c.b16 %v515, %v511
        %v552 = vpack.c.b16 %v516, %v512
        %v553 = vpack.c.b16 %v517, %v513
        %v554 = vpack.c.b16 %v518, %v514
        %v555 = vpack.c.b16 %v523, %v519
        %v556 = vpack.c.b16 %v524, %v520
        %v557 = vpack.c.b16 %v525, %v521
        %v558 = vpack.c.b16 %v526, %v522
        %v719 = vunpack.c.l.b16 %v281
        %v720 = vunpack.c.h.b16 %v281
        %v721 = vunpack.c.l.b16 %v282
        %v722 = vunpack.c.h.b16 %v282
        %v723 = vunpack.c.l.b16 %v283
        %v724 = vunpack.c.h.b16 %v283
        %v725 = vunpack.c.l.b16 %v284
        %v726 = vunpack.c.h.b16 %v284
        %v727 = vunpack.c.l.b16 %v285
        %v728 = vunpack.c.h.b16 %v285
        %v729 = vunpack.c.l.b16 %v286
        %v730 = vunpack.c.h.b16 %v286
        %v731 = vunpack.c.l.b16 %v287
        %v732 = vunpack.c.h.b16 %v287
        %v733 = vunpack.c.l.b16 %v288
        %v734 = vunpack.c.h.b16 %v288
        %v735 = vunpack.c.l.b16 %v289
        %v736 = vunpack.c.h.b16 %v289
        %v737 = vunpack.c.l.b16 %v290
        %v738 = vunpack.c.h.b16 %v290
        %v739 = vunpack.c.l.b16 %v291
        %v740 = vunpack.c.h.b16 %v291
        %v741 = vunpack.c.l.b16 %v292
        %v742 = vunpack.c.h.b16 %v292
        %v743 = vunpack.c.l.b16 %v293
        %v744 = vunpack.c.h.b16 %v293
        %v745 = vunpack.c.l.b16 %v294
        %v746 = vunpack.c.h.b16 %v294
        %v747 = vunpack.c.l.b16 %v295
        %v748 = vunpack.c.h.b16 %v295
        %v749 = vunpack.c.l.b16 %v296
        %v750 = vunpack.c.h.b16 %v296
        %v751 = vunpack.c.l.b16 %v297
        %v752 = vunpack.c.h.b16 %v297
        %v753 = vunpack.c.l.b16 %v298
        %v754 = vunpack.c.h.b16 %v298
        %v755 = vunpack.c.l.b16 %v299
        %v756 = vunpack.c.h.b16 %v299
        %v757 = vunpack.c.l.b16 %v300
        %v758 = vunpack.c.h.b16 %v300
        %v759 = vunpack.c.l.b16 %v301
        %v760 = vunpack.c.h.b16 %v301
        %v761 = vunpack.c.l.b16 %v302
        %v762 = vunpack.c.h.b16 %v302
        %v763 = vunpack.c.l.b16 %v303
        %v764 = vunpack.c.h.b16 %v303
        %v765 = vunpack.c.l.b16 %v304
        %v766 = vunpack.c.h.b16 %v304
        %v767 = vunpack.c.l.b16 %v305
        %v768 = vunpack.c.h.b16 %v305
        %v769 = vunpack.c.l.b16 %v306
        %v770 = vunpack.c.h.b16 %v306
        %v771 = vunpack.c.l.b16 %v307
        %v772 = vunpack.c.h.b16 %v307
        %v773 = vunpack.c.l.b16 %v308
        %v774 = vunpack.c.h.b16 %v308
        %v775 = vunpack.c.l.b16 %v309
        %v776 = vunpack.c.h.b16 %v309
        %v777 = vunpack.c.l.b16 %v310
        %v778 = vunpack.c.h.b16 %v310
        %v779 = vunpack.c.l.b16 %v311
        %v780 = vunpack.c.h.b16 %v311
        %v781 = vunpack.c.l.b16 %v312
        %v782 = vunpack.c.h.b16 %v312
        %v783 = vunpack.c.l.b16 %v313
        %v784 = vunpack.c.h.b16 %v313
        %v785 = vunpack.c.l.b16 %v314
        %v786 = vunpack.c.h.b16 %v314
        %v787 = vunpack.c.l.b16 %v315
        %v788 = vunpack.c.h.b16 %v315
        %v789 = vunpack.c.l.b16 %v316
        %v790 = vunpack.c.h.b16 %v316
        %v791 = vunpack.c.l.b16 %v317
        %v792 = vunpack.c.h.b16 %v317
        %v793 = vunpack.c.l.b16 %v318
        %v794 = vunpack.c.h.b16 %v318
        %v795 = vunpack.c.l.b16 %v319
        %v796 = vunpack.c.h.b16 %v319
        %v797 = vunpack.c.l.b16 %v320
        %v798 = vunpack.c.h.b16 %v320
        %v799 = vunpack.c.l.b16 %v321
        %v800 = vunpack.c.h.b16 %v321
        %v801 = vunpack.c.l.b16 %v322
        %v802 = vunpack.c.h.b16 %v322
        %v803 = vunpack.c.l.b16 %v323
        %v804 = vunpack.c.h.b16 %v323
        %v805 = vunpack.c.l.b16 %v324
        %v806 = vunpack.c.h.b16 %v324
        %v807 = vunpack.c.l.b16 %v325
        %v808 = vunpack.c.h.b16 %v325
        %v809 = vunpack.c.l.b16 %v326
        %v810 = vunpack.c.h.b16 %v326
        %v811 = vunpack.c.l.b16 %v327
        %v812 = vunpack.c.h.b16 %v327
        %v813 = vunpack.c.l.b16 %v328
        %v814 = vunpack.c.h.b16 %v328
        %v815 = vunpack.c.l.b16 %v329
        %v816 = vunpack.c.h.b16 %v329
        %v817 = vunpack.c.l.b16 %v330
        %v818 = vunpack.c.h.b16 %v330
        %v819 = vunpack.c.l.b16 %v331
        %v820 = vunpack.c.h.b16 %v331
        %v821 = vunpack.c.l.b16 %v332
        %v822 = vunpack.c.h.b16 %v332
        %v823 = vunpack.c.l.b16 %v333
        %v824 = vunpack.c.h.b16 %v333
        %v825 = vunpack.c.l.b16 %v334
        %v826 = vunpack.c.h.b16 %v334
        %v827 = vunpack.c.l.b16 %v335
        %v828 = vunpack.c.h.b16 %v335
        %v829 = vunpack.c.l.b16 %v336
        %v830 = vunpack.c.h.b16 %v336
        %v831 = vunpack.c.l.b16 %v337
        %v832 = vunpack.c.h.b16 %v337
        %v833 = vunpack.c.l.b16 %v338
        %v834 = vunpack.c.h.b16 %v338
        %v835 = vunpack.c.l.b16 %v339
        %v836 = vunpack.c.h.b16 %v339
        %v837 = vunpack.c.l.b16 %v340
        %v838 = vunpack.c.h.b16 %v340
        %v839 = vunpack.c.l.b16 %v341
        %v840 = vunpack.c.h.b16 %v341
        %v841 = vunpack.c.l.b16 %v342
        %v842 = vunpack.c.h.b16 %v342
        %v843 = vunpack.c.l.b16 %v343
        %v844 = vunpack.c.h.b16 %v343
        %v845 = vunpack.c.l.b16 %v344
        %v846 = vunpack.c.h.b16 %v344
        %v847 = vunpack.c.l.b16 %v345
        %v848 = vunpack.c.h.b16 %v345
        %v849 = vunpack.c.l.b16 %v346
        %v850 = vunpack.c.h.b16 %v346
        %v851 = vunpack.c.l.b16 %v347
        %v852 = vunpack.c.h.b16 %v347
        %v853 = vunpack.c.l.b16 %v348
        %v854 = vunpack.c.h.b16 %v348
        %v855 = vunpack.c.l.b16 %v349
        %v856 = vunpack.c.h.b16 %v349
        %v857 = vunpack.c.l.b16 %v350
        %v858 = vunpack.c.h.b16 %v350
        %v859 = vunpack.c.l.b16 %v351
        %v860 = vunpack.c.h.b16 %v351
        %v861 = vunpack.c.l.b16 %v352
        %v862 = vunpack.c.h.b16 %v352
        %v863 = vunpack.c.l.b16 %v353
        %v864 = vunpack.c.h.b16 %v353
        %v865 = vunpack.c.l.b16 %v354
        %v866 = vunpack.c.h.b16 %v354
        %v867 = vunpack.c.l.b16 %v355
        %v868 = vunpack.c.h.b16 %v355
        %v869 = vunpack.c.l.b16 %v356
        %v870 = vunpack.c.h.b16 %v356
        %v871 = vunpack.c.l.b16 %v357
        %v872 = vunpack.c.h.b16 %v357
        %v873 = vunpack.c.l.b16 %v358
        %v874 = vunpack.c.h.b16 %v358
        %v875 = vunpack.c.l.b16 %v359
        %v876 = vunpack.c.h.b16 %v359
        %v877 = vunpack.c.l.b16 %v360
        %v878 = vunpack.c.h.b16 %v360
        %v879 = vunpack.c.l.b16 %v361
        %v880 = vunpack.c.h.b16 %v361
        %v881 = vunpack.c.l.b16 %v362
        %v882 = vunpack.c.h.b16 %v362
        %v883 = vunpack.c.l.b16 %v363
        %v884 = vunpack.c.h.b16 %v363
        %v885 = vunpack.c.l.b16 %v364
        %v886 = vunpack.c.h.b16 %v364
        %v887 = vunpack.c.l.b16 %v365
        %v888 = vunpack.c.h.b16 %v365
        %v889 = vunpack.c.l.b16 %v366
        %v890 = vunpack.c.h.b16 %v366
        %v891 = vunpack.c.l.b16 %v367
        %v892 = vunpack.c.h.b16 %v367
        %v893 = vunpack.c.l.b16 %v368
        %v894 = vunpack.c.h.b16 %v368
        %v895 = vunpack.c.l.b16 %v369
        %v896 = vunpack.c.h.b16 %v369
        %v897 = vunpack.c.l.b16 %v370
        %v898 = vunpack.c.h.b16 %v370
        %v899 = vunpack.c.l.b16 %v371
        %v900 = vunpack.c.h.b16 %v371
        %v901 = vunpack.c.l.b16 %v372
        %v902 = vunpack.c.h.b16 %v372
        %v903 = vunpack.c.l.b16 %v373
        %v904 = vunpack.c.h.b16 %v373
        %v905 = vunpack.c.l.b16 %v374
        %v906 = vunpack.c.h.b16 %v374
        %v907 = vunpack.c.l.b16 %v375
        %v908 = vunpack.c.h.b16 %v375
        %v909 = vunpack.c.l.b16 %v376
        %v910 = vunpack.c.h.b16 %v376
        %v911 = vunpack.c.l.b16 %v377
        %v912 = vunpack.c.h.b16 %v377
        %v913 = vunpack.c.l.b16 %v378
        %v914 = vunpack.c.h.b16 %v378
        %v915 = vunpack.c.l.b16 %v379
        %v916 = vunpack.c.h.b16 %v379
        %v917 = vunpack.c.l.b16 %v380
        %v918 = vunpack.c.h.b16 %v380
        %v919 = vunpack.c.l.b16 %v381
        %v920 = vunpack.c.h.b16 %v381
        %v921 = vunpack.c.l.b16 %v382
        %v922 = vunpack.c.h.b16 %v382
        %v923 = vunpack.c.l.b16 %v383
        %v924 = vunpack.c.h.b16 %v383
        %v925 = vunpack.c.l.b16 %v384
        %v926 = vunpack.c.h.b16 %v384
        %v927 = vunpack.c.l.b16 %v385
        %v928 = vunpack.c.h.b16 %v385
        %v929 = vunpack.c.l.b16 %v386
        %v930 = vunpack.c.h.b16 %v386
        %v931 = vunpack.c.l.b16 %v387
        %v932 = vunpack.c.h.b16 %v387
        %v933 = vunpack.c.l.b16 %v388
        %v934 = vunpack.c.h.b16 %v388
        %v935 = vunpack.c.l.b16 %v389
        %v936 = vunpack.c.h.b16 %v389
        %v937 = vunpack.c.l.b16 %v390
        %v938 = vunpack.c.h.b16 %v390
        %v939 = vunpack.c.l.b16 %v391
        %v940 = vunpack.c.h.b16 %v391
        %v941 = vunpack.c.l.b16 %v392
        %v942 = vunpack.c.h.b16 %v392
        %v943 = vunpack.c.l.b16 %v393
        %v944 = vunpack.c.h.b16 %v393
        %v945 = vunpack.c.l.b16 %v394
        %v946 = vunpack.c.h.b16 %v394
        %v947 = vunpack.c.l.b16 %v395
        %v948 = vunpack.c.h.b16 %v395
        %v949 = vunpack.c.l.b16 %v396
        %v950 = vunpack.c.h.b16 %v396
        %v951 = vunpack.c.l.b16 %v397
        %v952 = vunpack.c.h.b16 %v397
        %v953 = vunpack.c.l.b16 %v398
        %v954 = vunpack.c.h.b16 %v398
        %v955 = vunpack.c.l.b16 %v399
        %v956 = vunpack.c.h.b16 %v399
        %v957 = vunpack.c.l.b16 %v400
        %v958 = vunpack.c.h.b16 %v400
        %v959 = vunpack.c.l.b16 %v401
        %v960 = vunpack.c.h.b16 %v401
        %v961 = vunpack.c.l.b16 %v402
        %v962 = vunpack.c.h.b16 %v402
        %v963 = vunpack.c.l.b16 %v403
        %v964 = vunpack.c.h.b16 %v403
        %v965 = vunpack.c.l.b16 %v404
        %v966 = vunpack.c.h.b16 %v404
        %v967 = vunpack.c.l.b16 %v405
        %v968 = vunpack.c.h.b16 %v405
        %v969 = vunpack.c.l.b16 %v406
        %v970 = vunpack.c.h.b16 %v406
        %v971 = vunpack.c.l.b16 %v407
        %v972 = vunpack.c.h.b16 %v407
        %v973 = vunpack.c.l.b16 %v408
        %v974 = vunpack.c.h.b16 %v408
        %v975 = vpack.c.b16 %v723, %v719
        %v976 = vpack.c.b16 %v724, %v720
        %v977 = vpack.c.b16 %v725, %v721
        %v978 = vpack.c.b16 %v726, %v722
        %v979 = vpack.c.b16 %v731, %v727
        %v980 = vpack.c.b16 %v732, %v728
        %v981 = vpack.c.b16 %v733, %v729
        %v982 = vpack.c.b16 %v734, %v730
        %v983 = vpack.c.b16 %v739, %v735
        %v984 = vpack.c.b16 %v740, %v736
        %v985 = vpack.c.b16 %v741, %v737
        %v986 = vpack.c.b16 %v742, %v738
        %v987 = vpack.c.b16 %v747, %v743
        %v988 = vpack.c.b16 %v748, %v744
        %v989 = vpack.c.b16 %v749, %v745
        %v990 = vpack.c.b16 %v750, %v746
        %v991 = vpack.c.b16 %v755, %v751
        %v992 = vpack.c.b16 %v756, %v752
        %v993 = vpack.c.b16 %v757, %v753
        %v994 = vpack.c.b16 %v758, %v754
        %v995 = vpack.c.b16 %v763, %v759
        %v996 = vpack.c.b16 %v764, %v760
        %v997 = vpack.c.b16 %v765, %v761
        %v998 = vpack.c.b16 %v766, %v762
        %v999 = vpack.c.b16 %v771, %v767
        %v1000 = vpack.c.b16 %v772, %v768
        %v1001 = vpack.c.b16 %v773, %v769
        %v1002 = vpack.c.b16 %v774, %v770
        %v1003 = vpack.c.b16 %v779, %v775
        %v1004 = vpack.c.b16 %v780, %v776
        %v1005 = vpack.c.b16 %v781, %v777
        %v1006 = vpack.c.b16 %v782, %v778
        %v1007 = vpack.c.b16 %v787, %v783
        %v1008 = vpack.c.b16 %v788, %v784
        %v1009 = vpack.c.b16 %v789, %v785
        %v1010 = vpack.c.b16 %v790, %v786
        %v1011 = vpack.c.b16 %v795, %v791
        %v1012 = vpack.c.b16 %v796, %v792
        %v1013 = vpack.c.b16 %v797, %v793
        %v1014 = vpack.c.b16 %v798, %v794
        %v1015 = vpack.c.b16 %v803, %v799
        %v1016 = vpack.c.b16 %v804, %v800
        %v1017 = vpack.c.b16 %v805, %v801
        %v1018 = vpack.c.b16 %v806, %v802
        %v1019 = vpack.c.b16 %v811, %v807
        %v1020 = vpack.c.b16 %v812, %v808
        %v1021 = vpack.c.b16 %v813, %v809
        %v1022 = vpack.c.b16 %v814, %v810
        %v1023 = vpack.c.b16 %v819, %v815
        %v1024 = vpack.c.b16 %v820, %v816
        %v1025 = vpack.c.b16 %v821, %v817
        %v1026 = vpack.c.b16 %v822, %v818
        %v1027 = vpack.c.b16 %v827, %v823
        %v1028 = vpack.c.b16 %v828, %v824
        %v1029 = vpack.c.b16 %v829, %v825
        %v1030 = vpack.c.b16 %v830, %v826
        %v1031 = vpack.c.b16 %v835, %v831
        %v1032 = vpack.c.b16 %v836, %v832
        %v1033 = vpack.c.b16 %v837, %v833
        %v1034 = vpack.c.b16 %v838, %v834
        %v1035 = vpack.c.b16 %v843, %v839
        %v1036 = vpack.c.b16 %v844, %v840
        %v1037 = vpack.c.b16 %v845, %v841
        %v1038 = vpack.c.b16 %v846, %v842
        %v1039 = vpack.c.b16 %v851, %v847
        %v1040 = vpack.c.b16 %v852, %v848
        %v1041 = vpack.c.b16 %v853, %v849
        %v1042 = vpack.c.b16 %v854, %v850
        %v1043 = vpack.c.b16 %v859, %v855
        %v1044 = vpack.c.b16 %v860, %v856
        %v1045 = vpack.c.b16 %v861, %v857
        %v1046 = vpack.c.b16 %v862, %v858
        %v1047 = vpack.c.b16 %v867, %v863
        %v1048 = vpack.c.b16 %v868, %v864
        %v1049 = vpack.c.b16 %v869, %v865
        %v1050 = vpack.c.b16 %v870, %v866
        %v1051 = vpack.c.b16 %v875, %v871
        %v1052 = vpack.c.b16 %v876, %v872
        %v1053 = vpack.c.b16 %v877, %v873
        %v1054 = vpack.c.b16 %v878, %v874
        %v1055 = vpack.c.b16 %v883, %v879
        %v1056 = vpack.c.b16 %v884, %v880
        %v1057 = vpack.c.b16 %v885, %v881
        %v1058 = vpack.c.b16 %v886, %v882
        %v1059 = vpack.c.b16 %v891, %v887
        %v1060 = vpack.c.b16 %v892, %v888
        %v1061 = vpack.c.b16 %v893, %v889
        %v1062 = vpack.c.b16 %v894, %v890
        %v1063 = vpack.c.b16 %v899, %v895
        %v1064 = vpack.c.b16 %v900, %v896
        %v1065 = vpack.c.b16 %v901, %v897
        %v1066 = vpack.c.b16 %v902, %v898
        %v1067 = vpack.c.b16 %v907, %v903
        %v1068 = vpack.c.b16 %v908, %v904
        %v1069 = vpack.c.b16 %v909, %v905
        %v1070 = vpack.c.b16 %v910, %v906
        %v1071 = vpack.c.b16 %v915, %v911
        %v1072 = vpack.c.b16 %v916, %v912
        %v1073 = vpack.c.b16 %v917, %v913
        %v1074 = vpack.c.b16 %v918, %v914
        %v1075 = vpack.c.b16 %v923, %v919
        %v1076 = vpack.c.b16 %v924, %v920
        %v1077 = vpack.c.b16 %v925, %v921
        %v1078 = vpack.c.b16 %v926, %v922
        %v1079 = vpack.c.b16 %v931, %v927
        %v1080 = vpack.c.b16 %v932, %v928
        %v1081 = vpack.c.b16 %v933, %v929
        %v1082 = vpack.c.b16 %v934, %v930
        %v1083 = vpack.c.b16 %v939, %v935
        %v1084 = vpack.c.b16 %v940, %v936
        %v1085 = vpack.c.b16 %v941, %v937
        %v1086 = vpack.c.b16 %v942, %v938
        %v1087 = vpack.c.b16 %v947, %v943
        %v1088 = vpack.c.b16 %v948, %v944
        %v1089 = vpack.c.b16 %v949, %v945
        %v1090 = vpack.c.b16 %v950, %v946
        %v1091 = vpack.c.b16 %v955, %v951
        %v1092 = vpack.c.b16 %v956, %v952
        %v1093 = vpack.c.b16 %v957, %v953
        %v1094 = vpack.c.b16 %v958, %v954
        %v1095 = vpack.c.b16 %v963, %v959
        %v1096 = vpack.c.b16 %v964, %v960
        %v1097 = vpack.c.b16 %v965, %v961
        %v1098 = vpack.c.b16 %v966, %v962
        %v1099 = vpack.c.b16 %v971, %v967
        %v1100 = vpack.c.b16 %v972, %v968
        %v1101 = vpack.c.b16 %v973, %v969
        %v1102 = vpack.c.b16 %v974, %v970
        %1231 = vmatprep.subr.bf16.mxu0 %v976
        %1232 = vmatpush1.bf16.msra.mxu0 %v975
        %1233 = vmatprep.subr.bf16.mxu0 %v980
        %1234 = vmatpush1.bf16.msra.mxu0 %v979
        %1235 = vmatprep.subr.bf16.mxu0 %v984
        %1236 = vmatpush1.bf16.msra.mxu0 %v983
        %1237 = vmatprep.subr.bf16.mxu0 %v988
        %1238 = vmatpush1.bf16.msra.mxu0 %v987
        %1239 = vmatprep.subr.bf16.mxu0 %v992
        %1240 = vmatpush1.bf16.msra.mxu0 %v991
        %1241 = vmatprep.subr.bf16.mxu0 %v996
        %1242 = vmatpush1.bf16.msra.mxu0 %v995
        %1243 = vmatprep.subr.bf16.mxu0 %v1000
        %1244 = vmatpush1.bf16.msra.mxu0 %v999
        %1245 = vmatprep.subr.bf16.mxu0 %v1004
        %1246 = vmatpush1.bf16.msra.mxu0 %v1003
        %1247 = vmatprep.subr.bf16.mxu0 %v1008
        %1248 = vmatpush1.bf16.msra.mxu0 %v1007
        %1249 = vmatprep.subr.bf16.mxu0 %v1012
        %1250 = vmatpush1.bf16.msra.mxu0 %v1011
        %1251 = vmatprep.subr.bf16.mxu0 %v1016
        %1252 = vmatpush1.bf16.msra.mxu0 %v1015
        %1253 = vmatprep.subr.bf16.mxu0 %v1020
        %1254 = vmatpush1.bf16.msra.mxu0 %v1019
        %1255 = vmatprep.subr.bf16.mxu0 %v1024
        %1256 = vmatpush1.bf16.msra.mxu0 %v1023
        %1257 = vmatprep.subr.bf16.mxu0 %v1028
        %1258 = vmatpush1.bf16.msra.mxu0 %v1027
        %1259 = vmatprep.subr.bf16.mxu0 %v1032
        %1260 = vmatpush1.bf16.msra.mxu0 %v1031
        %1261 = vmatprep.subr.bf16.mxu0 %v1036
        %1262 = vmatpush1.bf16.msra.mxu0 %v1035
        %1263 = vmatprep.mubr.bf16.mxu0 %v528
        %1264 = vmatmul.mubr.bf16.gmra.mrb[0].mxu0 %v527
        %v1265 = vpop.f32.mrb[0].mxu0
        %v1266 = vadd.f32 %v414, %v1265
        %v1267 = vpop.f32.mrb[0].mxu0
        %v1268 = vadd.f32 %v418, %v1267
        %v1269 = vpop.f32.mrb[0].mxu0
        %v1270 = vadd.f32 %v414, %v1269
        %v1271 = vpop.f32.mrb[0].mxu0
        %v1272 = vadd.f32 %v418, %v1271
        %1273 = vmatprep.mubr.bf16.mxu0 %v532
        %1274 = vmatmul.mubr.bf16.gmra.mrb[0].mxu0 %v531
        %v1275 = vpop.f32.mrb[0].mxu0
        %v1276 = vadd.f32 %v414, %v1275
        %v1277 = vpop.f32.mrb[0].mxu0
        %v1278 = vadd.f32 %v418, %v1277
        %v1279 = vpop.f32.mrb[0].mxu0
        %v1280 = vadd.f32 %v414, %v1279
        %v1281 = vpop.f32.mrb[0].mxu0
        %v1282 = vadd.f32 %v418, %v1281
        %1283 = vmatprep.mubr.bf16.mxu0 %v536
        %1284 = vmatmul.mubr.bf16.gmra.mrb[0].mxu0 %v535
        %v1285 = vpop.f32.mrb[0].mxu0
        %v1286 = vadd.f32 %v414, %v1285
        %v1287 = vpop.f32.mrb[0].mxu0
        %v1288 = vadd.f32 %v418, %v1287
        %v1289 = vpop.f32.mrb[0].mxu0
        %v1290 = vadd.f32 %v414, %v1289
        %v1291 = vpop.f32.mrb[0].mxu0
        %v1292 = vadd.f32 %v418, %v1291
        %1293 = vmatprep.mubr.bf16.mxu0 %v540
        %1294 = vmatmul.mubr.bf16.gmra.mrb[0].mxu0 %v539
        %v1295 = vpop.f32.mrb[0].mxu0
        %v1296 = vadd.f32 %v414, %v1295
        %v1297 = vpop.f32.mrb[0].mxu0
        %v1298 = vadd.f32 %v418, %v1297
        %v1299 = vpop.f32.mrb[0].mxu0
        %v1300 = vadd.f32 %v414, %v1299
        %v1301 = vpop.f32.mrb[0].mxu0
        %v1302 = vadd.f32 %v418, %v1301
        %1303 = vmatprep.mubr.bf16.mxu0 %v544
        %1304 = vmatmul.mubr.bf16.gmra.mrb[0].mxu0 %v543
        %v1305 = vpop.f32.mrb[0].mxu0
        %v1306 = vadd.f32 %v414, %v1305
        %v1307 = vpop.f32.mrb[0].mxu0
        %v1308 = vadd.f32 %v418, %v1307
        %v1309 = vpop.f32.mrb[0].mxu0
        %v1310 = vadd.f32 %v414, %v1309
        %v1311 = vpop.f32.mrb[0].mxu0
        %v1312 = vadd.f32 %v418, %v1311
        %1313 = vmatprep.mubr.bf16.mxu0 %v548
        %1314 = vmatmul.mubr.bf16.gmra.mrb[0].mxu0 %v547
        %v1315 = vpop.f32.mrb[0].mxu0
        %v1316 = vadd.f32 %v414, %v1315
        %v1317 = vpop.f32.mrb[0].mxu0
        %v1318 = vadd.f32 %v418, %v1317
        %v1319 = vpop.f32.mrb[0].mxu0
        %v1320 = vadd.f32 %v414, %v1319
        %v1321 = vpop.f32.mrb[0].mxu0
        %v1322 = vadd.f32 %v418, %v1321
        %1323 = vmatprep.mubr.bf16.mxu0 %v552
        %1324 = vmatmul.mubr.bf16.gmra.mrb[0].mxu0 %v551
        %v1325 = vpop.f32.mrb[0].mxu0
        %v1326 = vadd.f32 %v414, %v1325
        %v1327 = vpop.f32.mrb[0].mxu0
        %v1328 = vadd.f32 %v418, %v1327
        %v1329 = vpop.f32.mrb[0].mxu0
        %v1330 = vadd.f32 %v414, %v1329
        %v1331 = vpop.f32.mrb[0].mxu0
        %v1332 = vadd.f32 %v418, %v1331
        %1333 = vmatprep.mubr.bf16.mxu0 %v556
        %1334 = vmatmul.mubr.bf16.gmra.mrb[0].mxu0 %v555
        %v1335 = vpop.f32.mrb[0].mxu0
        %v1336 = vadd.f32 %v414, %v1335
        %v1337 = vpop.f32.mrb[0].mxu0
        %v1338 = vadd.f32 %v418, %v1337
        %v1339 = vpop.f32.mrb[0].mxu0
        %v1340 = vadd.f32 %v414, %v1339
        %v1341 = vpop.f32.mrb[0].mxu0
        %v1342 = vadd.f32 %v418, %v1341
        %1343 = vdwg.mxu0
        %1344 = vmatprep.subr.bf16.mxu0 %v1040
        %1345 = vmatpush1.bf16.msra.mxu0 %v1039
        %1346 = vmatprep.subr.bf16.mxu0 %v1044
        %1347 = vmatpush1.bf16.msra.mxu0 %v1043
        %1348 = vmatprep.subr.bf16.mxu0 %v1048
        %1349 = vmatpush1.bf16.msra.mxu0 %v1047
        %1350 = vmatprep.subr.bf16.mxu0 %v1052
        %1351 = vmatpush1.bf16.msra.mxu0 %v1051
        %1352 = vmatprep.subr.bf16.mxu0 %v1056
        %1353 = vmatpush1.bf16.msra.mxu0 %v1055
        %1354 = vmatprep.subr.bf16.mxu0 %v1060
        %1355 = vmatpush1.bf16.msra.mxu0 %v1059
        %1356 = vmatprep.subr.bf16.mxu0 %v1064
        %1357 = vmatpush1.bf16.msra.mxu0 %v1063
        %1358 = vmatprep.subr.bf16.mxu0 %v1068
        %1359 = vmatpush1.bf16.msra.mxu0 %v1067
        %1360 = vmatprep.subr.bf16.mxu0 %v1072
        %1361 = vmatpush1.bf16.msra.mxu0 %v1071
        %1362 = vmatprep.subr.bf16.mxu0 %v1076
        %1363 = vmatpush1.bf16.msra.mxu0 %v1075
        %1364 = vmatprep.subr.bf16.mxu0 %v1080
        %1365 = vmatpush1.bf16.msra.mxu0 %v1079
        %1366 = vmatprep.subr.bf16.mxu0 %v1084
        %1367 = vmatpush1.bf16.msra.mxu0 %v1083
        %1368 = vmatprep.subr.bf16.mxu0 %v1088
        %1369 = vmatpush1.bf16.msra.mxu0 %v1087
        %1370 = vmatprep.subr.bf16.mxu0 %v1092
        %1371 = vmatpush1.bf16.msra.mxu0 %v1091
        %1372 = vmatprep.subr.bf16.mxu0 %v1096
        %1373 = vmatpush1.bf16.msra.mxu0 %v1095
        %1374 = vmatprep.subr.bf16.mxu0 %v1100
        %1375 = vmatpush1.bf16.msra.mxu0 %v1099
        %1376 = vmatprep.mubr.bf16.mxu0 %v530
        %1377 = vmatmul.mubr.bf16.gmra.mrb[0].mxu0 %v529
        %v1378 = vpop.f32.mrb[0].mxu0
        %v1379 = vadd.f32 %v1266, %v1378
        %v1380 = vpop.f32.mrb[0].mxu0
        %v1381 = vadd.f32 %v1268, %v1380
        %v1382 = vpop.f32.mrb[0].mxu0
        %v1383 = vadd.f32 %v1270, %v1382
        %v1384 = vpop.f32.mrb[0].mxu0
        %v1385 = vadd.f32 %v1272, %v1384
        %1386 = vmatprep.mubr.bf16.mxu0 %v534
        %1387 = vmatmul.mubr.bf16.gmra.mrb[0].mxu0 %v533
        %v1388 = vpop.f32.mrb[0].mxu0
        %v1389 = vadd.f32 %v1276, %v1388
        %v1390 = vpop.f32.mrb[0].mxu0
        %v1391 = vadd.f32 %v1278, %v1390
        %v1392 = vpop.f32.mrb[0].mxu0
        %v1393 = vadd.f32 %v1280, %v1392
        %v1394 = vpop.f32.mrb[0].mxu0
        %v1395 = vadd.f32 %v1282, %v1394
        %1396 = vmatprep.mubr.bf16.mxu0 %v538
        %1397 = vmatmul.mubr.bf16.gmra.mrb[0].mxu0 %v537
        %v1398 = vpop.f32.mrb[0].mxu0
        %v1399 = vadd.f32 %v1286, %v1398
        %v1400 = vpop.f32.mrb[0].mxu0
        %v1401 = vadd.f32 %v1288, %v1400
        %v1402 = vpop.f32.mrb[0].mxu0
        %v1403 = vadd.f32 %v1290, %v1402
        %v1404 = vpop.f32.mrb[0].mxu0
        %v1405 = vadd.f32 %v1292, %v1404
        %1406 = vmatprep.mubr.bf16.mxu0 %v542
        %1407 = vmatmul.mubr.bf16.gmra.mrb[0].mxu0 %v541
        %v1408 = vpop.f32.mrb[0].mxu0
        %v1409 = vadd.f32 %v1296, %v1408
        %v1410 = vpop.f32.mrb[0].mxu0
        %v1411 = vadd.f32 %v1298, %v1410
        %v1412 = vpop.f32.mrb[0].mxu0
        %v1413 = vadd.f32 %v1300, %v1412
        %v1414 = vpop.f32.mrb[0].mxu0
        %v1415 = vadd.f32 %v1302, %v1414
        %1416 = vmatprep.mubr.bf16.mxu0 %v546
        %1417 = vmatmul.mubr.bf16.gmra.mrb[0].mxu0 %v545
        %v1418 = vpop.f32.mrb[0].mxu0
        %v1419 = vadd.f32 %v1306, %v1418
        %v1420 = vpop.f32.mrb[0].mxu0
        %v1421 = vadd.f32 %v1308, %v1420
        %v1422 = vpop.f32.mrb[0].mxu0
        %v1423 = vadd.f32 %v1310, %v1422
        %v1424 = vpop.f32.mrb[0].mxu0
        %v1425 = vadd.f32 %v1312, %v1424
        %1426 = vmatprep.mubr.bf16.mxu0 %v550
        %1427 = vmatmul.mubr.bf16.gmra.mrb[0].mxu0 %v549
        %v1428 = vpop.f32.mrb[0].mxu0
        %v1429 = vadd.f32 %v1316, %v1428
        %v1430 = vpop.f32.mrb[0].mxu0
        %v1431 = vadd.f32 %v1318, %v1430
        %v1432 = vpop.f32.mrb[0].mxu0
        %v1433 = vadd.f32 %v1320, %v1432
        %v1434 = vpop.f32.mrb[0].mxu0
        %v1435 = vadd.f32 %v1322, %v1434
        %1436 = vmatprep.mubr.bf16.mxu0 %v554
        %1437 = vmatmul.mubr.bf16.gmra.mrb[0].mxu0 %v553
        %v1438 = vpop.f32.mrb[0].mxu0
        %v1439 = vadd.f32 %v1326, %v1438
        %v1440 = vpop.f32.mrb[0].mxu0
        %v1441 = vadd.f32 %v1328, %v1440
        %v1442 = vpop.f32.mrb[0].mxu0
        %v1443 = vadd.f32 %v1330, %v1442
        %v1444 = vpop.f32.mrb[0].mxu0
        %v1445 = vadd.f32 %v1332, %v1444
        %1446 = vmatprep.mubr.bf16.mxu0 %v558
        %1447 = vmatmul.mubr.bf16.gmra.mrb[0].mxu0 %v557
        %v1448 = vpop.f32.mrb[0].mxu0
        %v1449 = vadd.f32 %v1336, %v1448
        %v1450 = vpop.f32.mrb[0].mxu0
        %v1451 = vadd.f32 %v1338, %v1450
        %v1452 = vpop.f32.mrb[0].mxu0
        %v1453 = vadd.f32 %v1340, %v1452
        %v1454 = vpop.f32.mrb[0].mxu0
        %v1455 = vadd.f32 %v1342, %v1454
        %1456 = vdwg.mxu0
        %1457 = vmatprep.subr.bf16.mxu0 %v978
        %1458 = vmatpush1.bf16.msra.mxu0 %v977
        %1459 = vmatprep.subr.bf16.mxu0 %v982
        %1460 = vmatpush1.bf16.msra.mxu0 %v981
        %1461 = vmatprep.subr.bf16.mxu0 %v986
        %1462 = vmatpush1.bf16.msra.mxu0 %v985
        %1463 = vmatprep.subr.bf16.mxu0 %v990
        %1464 = vmatpush1.bf16.msra.mxu0 %v989
        %1465 = vmatprep.subr.bf16.mxu0 %v994
        %1466 = vmatpush1.bf16.msra.mxu0 %v993
        %1467 = vmatprep.subr.bf16.mxu0 %v998
        %1468 = vmatpush1.bf16.msra.mxu0 %v997
        %1469 = vmatprep.subr.bf16.mxu0 %v1002
        %1470 = vmatpush1.bf16.msra.mxu0 %v1001
        %1471 = vmatprep.subr.bf16.mxu0 %v1006
        %1472 = vmatpush1.bf16.msra.mxu0 %v1005
        %1473 = vmatprep.subr.bf16.mxu0 %v1010
        %1474 = vmatpush1.bf16.msra.mxu0 %v1009
        %1475 = vmatprep.subr.bf16.mxu0 %v1014
        %1476 = vmatpush1.bf16.msra.mxu0 %v1013
        %1477 = vmatprep.subr.bf16.mxu0 %v1018
        %1478 = vmatpush1.bf16.msra.mxu0 %v1017
        %1479 = vmatprep.subr.bf16.mxu0 %v1022
        %1480 = vmatpush1.bf16.msra.mxu0 %v1021
        %1481 = vmatprep.subr.bf16.mxu0 %v1026
        %1482 = vmatpush1.bf16.msra.mxu0 %v1025
        %1483 = vmatprep.subr.bf16.mxu0 %v1030
        %1484 = vmatpush1.bf16.msra.mxu0 %v1029
        %1485 = vmatprep.subr.bf16.mxu0 %v1034
        %1486 = vmatpush1.bf16.msra.mxu0 %v1033
        %1487 = vmatprep.subr.bf16.mxu0 %v1038
        %1488 = vmatpush1.bf16.msra.mxu0 %v1037
        %1489 = vmatprep.mubr.bf16.mxu0 %v528
        %1490 = vmatmul.mubr.bf16.gmra.mrb[0].mxu0 %v527
        %v1491 = vpop.f32.mrb[0].mxu0
        %v1492 = vadd.f32 %v422, %v1491
        %v1493 = vpop.f32.mrb[0].mxu0
        %v1494 = vadd.f32 %v426, %v1493
        %v1495 = vpop.f32.mrb[0].mxu0
        %v1496 = vadd.f32 %v422, %v1495
        %v1497 = vpop.f32.mrb[0].mxu0
        %v1498 = vadd.f32 %v426, %v1497
        %1499 = vmatprep.mubr.bf16.mxu0 %v532
        %1500 = vmatmul.mubr.bf16.gmra.mrb[0].mxu0 %v531
        %v1501 = vpop.f32.mrb[0].mxu0
        %v1502 = vadd.f32 %v422, %v1501
        %v1503 = vpop.f32.mrb[0].mxu0
        %v1504 = vadd.f32 %v426, %v1503
        %v1505 = vpop.f32.mrb[0].mxu0
        %v1506 = vadd.f32 %v422, %v1505
        %v1507 = vpop.f32.mrb[0].mxu0
        %v1508 = vadd.f32 %v426, %v1507
        %1509 = vmatprep.mubr.bf16.mxu0 %v536
        %1510 = vmatmul.mubr.bf16.gmra.mrb[0].mxu0 %v535
        %v1511 = vpop.f32.mrb[0].mxu0
        %v1512 = vadd.f32 %v422, %v1511
        %v1513 = vpop.f32.mrb[0].mxu0
        %v1514 = vadd.f32 %v426, %v1513
        %v1515 = vpop.f32.mrb[0].mxu0
        %v1516 = vadd.f32 %v422, %v1515
        %v1517 = vpop.f32.mrb[0].mxu0
        %v1518 = vadd.f32 %v426, %v1517
        %1519 = vmatprep.mubr.bf16.mxu0 %v540
        %1520 = vmatmul.mubr.bf16.gmra.mrb[0].mxu0 %v539
        %v1521 = vpop.f32.mrb[0].mxu0
        %v1522 = vadd.f32 %v422, %v1521
        %v1523 = vpop.f32.mrb[0].mxu0
        %v1524 = vadd.f32 %v426, %v1523
        %v1525 = vpop.f32.mrb[0].mxu0
        %v1526 = vadd.f32 %v422, %v1525
        %v1527 = vpop.f32.mrb[0].mxu0
        %v1528 = vadd.f32 %v426, %v1527
        %1529 = vmatprep.mubr.bf16.mxu0 %v544
        %1530 = vmatmul.mubr.bf16.gmra.mrb[0].mxu0 %v543
        %v1531 = vpop.f32.mrb[0].mxu0
        %v1532 = vadd.f32 %v422, %v1531
        %v1533 = vpop.f32.mrb[0].mxu0
        %v1534 = vadd.f32 %v426, %v1533
        %v1535 = vpop.f32.mrb[0].mxu0
        %v1536 = vadd.f32 %v422, %v1535
        %v1537 = vpop.f32.mrb[0].mxu0
        %v1538 = vadd.f32 %v426, %v1537
        %1539 = vmatprep.mubr.bf16.mxu0 %v548
        %1540 = vmatmul.mubr.bf16.gmra.mrb[0].mxu0 %v547
        %v1541 = vpop.f32.mrb[0].mxu0
        %v1542 = vadd.f32 %v422, %v1541
        %v1543 = vpop.f32.mrb[0].mxu0
        %v1544 = vadd.f32 %v426, %v1543
        %v1545 = vpop.f32.mrb[0].mxu0
        %v1546 = vadd.f32 %v422, %v1545
        %v1547 = vpop.f32.mrb[0].mxu0
        %v1548 = vadd.f32 %v426, %v1547
        %1549 = vmatprep.mubr.bf16.mxu0 %v552
        %1550 = vmatmul.mubr.bf16.gmra.mrb[0].mxu0 %v551
        %v1551 = vpop.f32.mrb[0].mxu0
        %v1552 = vadd.f32 %v422, %v1551
        %v1553 = vpop.f32.mrb[0].mxu0
        %v1554 = vadd.f32 %v426, %v1553
        %v1555 = vpop.f32.mrb[0].mxu0
        %v1556 = vadd.f32 %v422, %v1555
        %v1557 = vpop.f32.mrb[0].mxu0
        %v1558 = vadd.f32 %v426, %v1557
        %1559 = vmatprep.mubr.bf16.mxu0 %v556
        %1560 = vmatmul.mubr.bf16.gmra.mrb[0].mxu0 %v555
        %v1561 = vpop.f32.mrb[0].mxu0
        %v1562 = vadd.f32 %v422, %v1561
        %v1563 = vpop.f32.mrb[0].mxu0
        %v1564 = vadd.f32 %v426, %v1563
        %v1565 = vpop.f32.mrb[0].mxu0
        %v1566 = vadd.f32 %v422, %v1565
        %v1567 = vpop.f32.mrb[0].mxu0
        %v1568 = vadd.f32 %v426, %v1567
        %1569 = vdwg.mxu0
        %1570 = vmatprep.subr.bf16.mxu0 %v1042
        %1571 = vmatpush1.bf16.msra.mxu0 %v1041
        %1572 = vmatprep.subr.bf16.mxu0 %v1046
        %1573 = vmatpush1.bf16.msra.mxu0 %v1045
        %1574 = vmatprep.subr.bf16.mxu0 %v1050
        %1575 = vmatpush1.bf16.msra.mxu0 %v1049
        %1576 = vmatprep.subr.bf16.mxu0 %v1054
        %1577 = vmatpush1.bf16.msra.mxu0 %v1053
        %1578 = vmatprep.subr.bf16.mxu0 %v1058
        %1579 = vmatpush1.bf16.msra.mxu0 %v1057
        %1580 = vmatprep.subr.bf16.mxu0 %v1062
        %1581 = vmatpush1.bf16.msra.mxu0 %v1061
        %1582 = vmatprep.subr.bf16.mxu0 %v1066
        %1583 = vmatpush1.bf16.msra.mxu0 %v1065
        %1584 = vmatprep.subr.bf16.mxu0 %v1070
        %1585 = vmatpush1.bf16.msra.mxu0 %v1069
        %1586 = vmatprep.subr.bf16.mxu0 %v1074
        %1587 = vmatpush1.bf16.msra.mxu0 %v1073
        %1588 = vmatprep.subr.bf16.mxu0 %v1078
        %1589 = vmatpush1.bf16.msra.mxu0 %v1077
        %1590 = vmatprep.subr.bf16.mxu0 %v1082
        %1591 = vmatpush1.bf16.msra.mxu0 %v1081
        %1592 = vmatprep.subr.bf16.mxu0 %v1086
        %1593 = vmatpush1.bf16.msra.mxu0 %v1085
        %1594 = vmatprep.subr.bf16.mxu0 %v1090
        %1595 = vmatpush1.bf16.msra.mxu0 %v1089
        %1596 = vmatprep.subr.bf16.mxu0 %v1094
        %1597 = vmatpush1.bf16.msra.mxu0 %v1093
        %1598 = vmatprep.subr.bf16.mxu0 %v1098
        %1599 = vmatpush1.bf16.msra.mxu0 %v1097
        %1600 = vmatprep.subr.bf16.mxu0 %v1102
        %1601 = vmatpush1.bf16.msra.mxu0 %v1101
        %1602 = vmatprep.mubr.bf16.mxu0 %v530
        %1603 = vmatmul.mubr.bf16.gmra.mrb[0].mxu0 %v529
        %v1604 = vpop.f32.mrb[0].mxu0
        %v1605 = vadd.f32 %v1492, %v1604
        %v1606 = vpop.f32.mrb[0].mxu0
        %v1607 = vadd.f32 %v1494, %v1606
        %v1608 = vpop.f32.mrb[0].mxu0
        %v1609 = vadd.f32 %v1496, %v1608
        %v1610 = vpop.f32.mrb[0].mxu0
        %v1611 = vadd.f32 %v1498, %v1610
        %1612 = vmatprep.mubr.bf16.mxu0 %v534
        %1613 = vmatmul.mubr.bf16.gmra.mrb[0].mxu0 %v533
        %v1614 = vpop.f32.mrb[0].mxu0
        %v1615 = vadd.f32 %v1502, %v1614
        %v1616 = vpop.f32.mrb[0].mxu0
        %v1617 = vadd.f32 %v1504, %v1616
        %v1618 = vpop.f32.mrb[0].mxu0
        %v1619 = vadd.f32 %v1506, %v1618
        %v1620 = vpop.f32.mrb[0].mxu0
        %v1621 = vadd.f32 %v1508, %v1620
        %1622 = vmatprep.mubr.bf16.mxu0 %v538
        %1623 = vmatmul.mubr.bf16.gmra.mrb[0].mxu0 %v537
        %v1624 = vpop.f32.mrb[0].mxu0
        %v1625 = vadd.f32 %v1512, %v1624
        %v1626 = vpop.f32.mrb[0].mxu0
        %v1627 = vadd.f32 %v1514, %v1626
        %v1628 = vpop.f32.mrb[0].mxu0
        %v1629 = vadd.f32 %v1516, %v1628
        %v1630 = vpop.f32.mrb[0].mxu0
        %v1631 = vadd.f32 %v1518, %v1630
        %1632 = vmatprep.mubr.bf16.mxu0 %v542
        %1633 = vmatmul.mubr.bf16.gmra.mrb[0].mxu0 %v541
        %v1634 = vpop.f32.mrb[0].mxu0
        %v1635 = vadd.f32 %v1522, %v1634
        %v1636 = vpop.f32.mrb[0].mxu0
        %v1637 = vadd.f32 %v1524, %v1636
        %v1638 = vpop.f32.mrb[0].mxu0
        %v1639 = vadd.f32 %v1526, %v1638
        %v1640 = vpop.f32.mrb[0].mxu0
        %v1641 = vadd.f32 %v1528, %v1640
        %1642 = vmatprep.mubr.bf16.mxu0 %v546
        %1643 = vmatmul.mubr.bf16.gmra.mrb[0].mxu0 %v545
        %v1644 = vpop.f32.mrb[0].mxu0
        %v1645 = vadd.f32 %v1532, %v1644
        %v1646 = vpop.f32.mrb[0].mxu0
        %v1647 = vadd.f32 %v1534, %v1646
        %v1648 = vpop.f32.mrb[0].mxu0
        %v1649 = vadd.f32 %v1536, %v1648
        %v1650 = vpop.f32.mrb[0].mxu0
        %v1651 = vadd.f32 %v1538, %v1650
        %1652 = vmatprep.mubr.bf16.mxu0 %v550
        %1653 = vmatmul.mubr.bf16.gmra.mrb[0].mxu0 %v549
        %v1654 = vpop.f32.mrb[0].mxu0
        %v1655 = vadd.f32 %v1542, %v1654
        %v1656 = vpop.f32.mrb[0].mxu0
        %v1657 = vadd.f32 %v1544, %v1656
        %v1658 = vpop.f32.mrb[0].mxu0
        %v1659 = vadd.f32 %v1546, %v1658
        %v1660 = vpop.f32.mrb[0].mxu0
        %v1661 = vadd.f32 %v1548, %v1660
        %1662 = vmatprep.mubr.bf16.mxu0 %v554
        %1663 = vmatmul.mubr.bf16.gmra.mrb[0].mxu0 %v553
        %v1664 = vpop.f32.mrb[0].mxu0
        %v1665 = vadd.f32 %v1552, %v1664
        %v1666 = vpop.f32.mrb[0].mxu0
        %v1667 = vadd.f32 %v1554, %v1666
        %v1668 = vpop.f32.mrb[0].mxu0
        %v1669 = vadd.f32 %v1556, %v1668
        %v1670 = vpop.f32.mrb[0].mxu0
        %v1671 = vadd.f32 %v1558, %v1670
        %1672 = vmatprep.mubr.bf16.mxu0 %v558
        %1673 = vmatmul.mubr.bf16.gmra.mrb[0].mxu0 %v557
        %v1674 = vpop.f32.mrb[0].mxu0
        %v1675 = vadd.f32 %v1562, %v1674
        %v1676 = vpop.f32.mrb[0].mxu0
        %v1677 = vadd.f32 %v1564, %v1676
        %v1678 = vpop.f32.mrb[0].mxu0
        %v1679 = vadd.f32 %v1566, %v1678
        %v1680 = vpop.f32.mrb[0].mxu0
        %v1681 = vadd.f32 %v1568, %v1680
        %1682 = vdwg.mxu0
        %v1683 = vtanh.pop %v1379
        %v1684 = vtanh.pop %v1381
        %v1685 = vtanh.pop %v1605
        %v1686 = vtanh.pop %v1607
        %v1687 = vtanh.pop %v1383
        %v1688 = vtanh.pop %v1385
        %v1689 = vtanh.pop %v1609
        %v1690 = vtanh.pop %v1611
        %v1691 = vtanh.pop %v1389
        %v1692 = vtanh.pop %v1391
        %v1693 = vtanh.pop %v1615
        %v1694 = vtanh.pop %v1617
        %v1695 = vtanh.pop %v1393
        %v1696 = vtanh.pop %v1395
        %v1697 = vtanh.pop %v1619
        %v1698 = vtanh.pop %v1621
        %v1699 = vtanh.pop %v1399
        %v1700 = vtanh.pop %v1401
        %v1701 = vtanh.pop %v1625
        %v1702 = vtanh.pop %v1627
        %v1703 = vtanh.pop %v1403
        %v1704 = vtanh.pop %v1405
        %v1705 = vtanh.pop %v1629
        %v1706 = vtanh.pop %v1631
        %v1707 = vtanh.pop %v1409
        %v1708 = vtanh.pop %v1411
        %v1709 = vtanh.pop %v1635
        %v1710 = vtanh.pop %v1637
        %v1711 = vtanh.pop %v1413
        %v1712 = vtanh.pop %v1415
        %v1713 = vtanh.pop %v1639
        %v1714 = vtanh.pop %v1641
        %v1715 = vtanh.pop %v1419
        %v1716 = vtanh.pop %v1421
        %v1717 = vtanh.pop %v1645
        %v1718 = vtanh.pop %v1647
        %v1719 = vtanh.pop %v1423
        %v1720 = vtanh.pop %v1425
        %v1721 = vtanh.pop %v1649
        %v1722 = vtanh.pop %v1651
        %v1723 = vtanh.pop %v1429
        %v1724 = vtanh.pop %v1431
        %v1725 = vtanh.pop %v1655
        %v1726 = vtanh.pop %v1657
        %v1727 = vtanh.pop %v1433
        %v1728 = vtanh.pop %v1435
        %v1729 = vtanh.pop %v1659
        %v1730 = vtanh.pop %v1661
        %v1731 = vtanh.pop %v1439
        %v1732 = vtanh.pop %v1441
        %v1733 = vtanh.pop %v1665
        %v1734 = vtanh.pop %v1667
        %v1735 = vtanh.pop %v1443
        %v1736 = vtanh.pop %v1445
        %v1737 = vtanh.pop %v1669
        %v1738 = vtanh.pop %v1671
        %v1739 = vtanh.pop %v1449
        %v1740 = vtanh.pop %v1451
        %v1741 = vtanh.pop %v1675
        %v1742 = vtanh.pop %v1677
        %v1743 = vtanh.pop %v1453
        %v1744 = vtanh.pop %v1455
        %v1745 = vtanh.pop %v1679
        %v1746 = vtanh.pop %v1681
        %v1747 = vpack.c.bf16 %v1687, %v1683
        %v1748 = vpack.c.bf16 %v1688, %v1684
        %v1749 = vpack.c.bf16 %v1689, %v1685
        %v1750 = vpack.c.bf16 %v1690, %v1686
        %v1751 = vpack.c.bf16 %v1695, %v1691
        %v1752 = vpack.c.bf16 %v1696, %v1692
        %v1753 = vpack.c.bf16 %v1697, %v1693
        %v1754 = vpack.c.bf16 %v1698, %v1694
        %v1755 = vpack.c.bf16 %v1703, %v1699
        %v1756 = vpack.c.bf16 %v1704, %v1700
        %v1757 = vpack.c.bf16 %v1705, %v1701
        %v1758 = vpack.c.bf16 %v1706, %v1702
        %v1759 = vpack.c.bf16 %v1711, %v1707
        %v1760 = vpack.c.bf16 %v1712, %v1708
        %v1761 = vpack.c.bf16 %v1713, %v1709
        %v1762 = vpack.c.bf16 %v1714, %v1710
        %v1763 = vpack.c.bf16 %v1719, %v1715
        %v1764 = vpack.c.bf16 %v1720, %v1716
        %v1765 = vpack.c.bf16 %v1721, %v1717
        %v1766 = vpack.c.bf16 %v1722, %v1718
        %v1767 = vpack.c.bf16 %v1727, %v1723
        %v1768 = vpack.c.bf16 %v1728, %v1724
        %v1769 = vpack.c.bf16 %v1729, %v1725
        %v1770 = vpack.c.bf16 %v1730, %v1726
        %v1771 = vpack.c.bf16 %v1735, %v1731
        %v1772 = vpack.c.bf16 %v1736, %v1732
        %v1773 = vpack.c.bf16 %v1737, %v1733
        %v1774 = vpack.c.bf16 %v1738, %v1734
        %v1775 = vpack.c.bf16 %v1743, %v1739
        %v1776 = vpack.c.bf16 %v1744, %v1740
        %v1777 = vpack.c.bf16 %v1745, %v1741
        %v1778 = vpack.c.bf16 %v1746, %v1742
        %v1779 = vld [vmem:[#allocation7] sm:$0xf]
        %v1780 = vld [vmem:[#allocation7 + $0x4] sm:$0xf]
        %v1781 = vld [vmem:[#allocation7 + $0x8] sm:$0xf]
        %v1782 = vld [vmem:[#allocation7 + $0xc] sm:$0xf]
        %v1783 = vld [vmem:[#allocation7 + $0x10] sm:$0xf]
        %v1784 = vld [vmem:[#allocation7 + $0x14] sm:$0xf]
        %v1785 = vld [vmem:[#allocation7 + $0x18] sm:$0xf]
        %v1786 = vld [vmem:[#allocation7 + $0x1c] sm:$0xf]
        %v1787 = vld [vmem:[#allocation7 + $0x20] sm:$0xf]
        %v1788 = vld [vmem:[#allocation7 + $0x24] sm:$0xf]
        %v1789 = vld [vmem:[#allocation7 + $0x28] sm:$0xf]
        %v1790 = vld [vmem:[#allocation7 + $0x2c] sm:$0xf]
        %v1791 = vld [vmem:[#allocation7 + $0x30] sm:$0xf]
        %v1792 = vld [vmem:[#allocation7 + $0x34] sm:$0xf]
        %v1793 = vld [vmem:[#allocation7 + $0x38] sm:$0xf]
        %v1794 = vld [vmem:[#allocation7 + $0x3c] sm:$0xf]
        %v1795 = vld [vmem:[#allocation7 + $0x40] sm:$0xf]
        %v1796 = vld [vmem:[#allocation7 + $0x44] sm:$0xf]
        %v1797 = vld [vmem:[#allocation7 + $0x48] sm:$0xf]
        %v1798 = vld [vmem:[#allocation7 + $0x4c] sm:$0xf]
        %v1799 = vld [vmem:[#allocation7 + $0x50] sm:$0xf]
        %v1800 = vld [vmem:[#allocation7 + $0x54] sm:$0xf]
        %v1801 = vld [vmem:[#allocation7 + $0x58] sm:$0xf]
        %v1802 = vld [vmem:[#allocation7 + $0x5c] sm:$0xf]
        %v1803 = vld [vmem:[#allocation7 + $0x60] sm:$0xf]
        %v1804 = vld [vmem:[#allocation7 + $0x64] sm:$0xf]
        %v1805 = vld [vmem:[#allocation7 + $0x68] sm:$0xf]
        %v1806 = vld [vmem:[#allocation7 + $0x6c] sm:$0xf]
        %v1807 = vld [vmem:[#allocation7 + $0x70] sm:$0xf]
        %v1808 = vld [vmem:[#allocation7 + $0x74] sm:$0xf]
        %v1809 = vld [vmem:[#allocation7 + $0x78] sm:$0xf]
        %v1810 = vld [vmem:[#allocation7 + $0x7c] sm:$0xf]
        %v1811 = vld [vmem:[#allocation7 + $0x80] sm:$0xf]
        %v1812 = vld [vmem:[#allocation7 + $0x84] sm:$0xf]
        %v1813 = vld [vmem:[#allocation7 + $0x88] sm:$0xf]
        %v1814 = vld [vmem:[#allocation7 + $0x8c] sm:$0xf]
        %v1815 = vld [vmem:[#allocation7 + $0x90] sm:$0xf]
        %v1816 = vld [vmem:[#allocation7 + $0x94] sm:$0xf]
        %v1817 = vld [vmem:[#allocation7 + $0x98] sm:$0xf]
        %v1818 = vld [vmem:[#allocation7 + $0x9c] sm:$0xf]
        %v1819 = vld [vmem:[#allocation7 + $0xa0] sm:$0xf]
        %v1820 = vld [vmem:[#allocation7 + $0xa4] sm:$0xf]
        %v1821 = vld [vmem:[#allocation7 + $0xa8] sm:$0xf]
        %v1822 = vld [vmem:[#allocation7 + $0xac] sm:$0xf]
        %v1823 = vld [vmem:[#allocation7 + $0xb0] sm:$0xf]
        %v1824 = vld [vmem:[#allocation7 + $0xb4] sm:$0xf]
        %v1825 = vld [vmem:[#allocation7 + $0xb8] sm:$0xf]
        %v1826 = vld [vmem:[#allocation7 + $0xbc] sm:$0xf]
        %v1827 = vld [vmem:[#allocation7 + $0xc0] sm:$0xf]
        %v1828 = vld [vmem:[#allocation7 + $0xc4] sm:$0xf]
        %v1829 = vld [vmem:[#allocation7 + $0xc8] sm:$0xf]
        %v1830 = vld [vmem:[#allocation7 + $0xcc] sm:$0xf]
        %v1831 = vld [vmem:[#allocation7 + $0xd0] sm:$0xf]
        %v1832 = vld [vmem:[#allocation7 + $0xd4] sm:$0xf]
        %v1833 = vld [vmem:[#allocation7 + $0xd8] sm:$0xf]
        %v1834 = vld [vmem:[#allocation7 + $0xdc] sm:$0xf]
        %v1835 = vld [vmem:[#allocation7 + $0xe0] sm:$0xf]
        %v1836 = vld [vmem:[#allocation7 + $0xe4] sm:$0xf]
        %v1837 = vld [vmem:[#allocation7 + $0xe8] sm:$0xf]
        %v1838 = vld [vmem:[#allocation7 + $0xec] sm:$0xf]
        %v1839 = vld [vmem:[#allocation7 + $0xf0] sm:$0xf]
        %v1840 = vld [vmem:[#allocation7 + $0xf4] sm:$0xf]
        %v1841 = vld [vmem:[#allocation7 + $0xf8] sm:$0xf]
        %v1842 = vld [vmem:[#allocation7 + $0xfc] sm:$0xf]
        %v1907 = vunpack.c.l.b16 %v1779
        %v1908 = vunpack.c.l.b16 %v1780
        %v1909 = vunpack.c.l.b16 %v1781
        %v1910 = vunpack.c.l.b16 %v1782
        %v1911 = vunpack.c.l.b16 %v1783
        %v1912 = vunpack.c.l.b16 %v1784
        %v1913 = vunpack.c.l.b16 %v1785
        %v1914 = vunpack.c.l.b16 %v1786
        %v1915 = vunpack.c.l.b16 %v1787
        %v1916 = vunpack.c.l.b16 %v1788
        %v1917 = vunpack.c.l.b16 %v1789
        %v1918 = vunpack.c.l.b16 %v1790
        %v1919 = vunpack.c.l.b16 %v1791
        %v1920 = vunpack.c.l.b16 %v1792
        %v1921 = vunpack.c.l.b16 %v1793
        %v1922 = vunpack.c.l.b16 %v1794
        %v1923 = vunpack.c.l.b16 %v1795
        %v1924 = vunpack.c.l.b16 %v1796
        %v1925 = vunpack.c.l.b16 %v1797
        %v1926 = vunpack.c.l.b16 %v1798
        %v1927 = vunpack.c.l.b16 %v1799
        %v1928 = vunpack.c.l.b16 %v1800
        %v1929 = vunpack.c.l.b16 %v1801
        %v1930 = vunpack.c.l.b16 %v1802
        %v1931 = vunpack.c.l.b16 %v1803
        %v1932 = vunpack.c.l.b16 %v1804
        %v1933 = vunpack.c.l.b16 %v1805
        %v1934 = vunpack.c.l.b16 %v1806
        %v1935 = vunpack.c.l.b16 %v1807
        %v1936 = vunpack.c.l.b16 %v1808
        %v1937 = vunpack.c.l.b16 %v1809
        %v1938 = vunpack.c.l.b16 %v1810
        %v1939 = vunpack.c.l.b16 %v1811
        %v1940 = vunpack.c.l.b16 %v1812
        %v1941 = vunpack.c.l.b16 %v1813
        %v1942 = vunpack.c.l.b16 %v1814
        %v1943 = vunpack.c.l.b16 %v1815
        %v1944 = vunpack.c.l.b16 %v1816
        %v1945 = vunpack.c.l.b16 %v1817
        %v1946 = vunpack.c.l.b16 %v1818
        %v1947 = vunpack.c.l.b16 %v1819
        %v1948 = vunpack.c.l.b16 %v1820
        %v1949 = vunpack.c.l.b16 %v1821
        %v1950 = vunpack.c.l.b16 %v1822
        %v1951 = vunpack.c.l.b16 %v1823
        %v1952 = vunpack.c.l.b16 %v1824
        %v1953 = vunpack.c.l.b16 %v1825
        %v1954 = vunpack.c.l.b16 %v1826
        %v1955 = vunpack.c.l.b16 %v1827
        %v1956 = vunpack.c.l.b16 %v1828
        %v1957 = vunpack.c.l.b16 %v1829
        %v1958 = vunpack.c.l.b16 %v1830
        %v1959 = vunpack.c.l.b16 %v1831
        %v1960 = vunpack.c.l.b16 %v1832
        %v1961 = vunpack.c.l.b16 %v1833
        %v1962 = vunpack.c.l.b16 %v1834
        %v1963 = vunpack.c.l.b16 %v1835
        %v1964 = vunpack.c.l.b16 %v1836
        %v1965 = vunpack.c.l.b16 %v1837
        %v1966 = vunpack.c.l.b16 %v1838
        %v1967 = vunpack.c.l.b16 %v1839
        %v1968 = vunpack.c.l.b16 %v1840
        %v1969 = vunpack.c.l.b16 %v1841
        %v1970 = vunpack.c.l.b16 %v1842
        %v1971 = vpack.c.b16 %v1908, %v1907
        %v1972 = vpack.c.b16 %v1910, %v1909
        %v1973 = vpack.c.b16 %v1912, %v1911
        %v1974 = vpack.c.b16 %v1914, %v1913
        %v1975 = vpack.c.b16 %v1916, %v1915
        %v1976 = vpack.c.b16 %v1918, %v1917
        %v1977 = vpack.c.b16 %v1920, %v1919
        %v1978 = vpack.c.b16 %v1922, %v1921
        %v1979 = vpack.c.b16 %v1924, %v1923
        %v1980 = vpack.c.b16 %v1926, %v1925
        %v1981 = vpack.c.b16 %v1928, %v1927
        %v1982 = vpack.c.b16 %v1930, %v1929
        %v1983 = vpack.c.b16 %v1932, %v1931
        %v1984 = vpack.c.b16 %v1934, %v1933
        %v1985 = vpack.c.b16 %v1936, %v1935
        %v1986 = vpack.c.b16 %v1938, %v1937
        %v1987 = vpack.c.b16 %v1940, %v1939
        %v1988 = vpack.c.b16 %v1942, %v1941
        %v1989 = vpack.c.b16 %v1944, %v1943
        %v1990 = vpack.c.b16 %v1946, %v1945
        %v1991 = vpack.c.b16 %v1948, %v1947
        %v1992 = vpack.c.b16 %v1950, %v1949
        %v1993 = vpack.c.b16 %v1952, %v1951
        %v1994 = vpack.c.b16 %v1954, %v1953
        %v1995 = vpack.c.b16 %v1956, %v1955
        %v1996 = vpack.c.b16 %v1958, %v1957
        %v1997 = vpack.c.b16 %v1960, %v1959
        %v1998 = vpack.c.b16 %v1962, %v1961
        %v1999 = vpack.c.b16 %v1964, %v1963
        %v2000 = vpack.c.b16 %v1966, %v1965
        %v2001 = vpack.c.b16 %v1968, %v1967
        %v2002 = vpack.c.b16 %v1970, %v1969
        %2035 = vmatprep.subr.bf16.mxu0 0
        %2036 = vmatpush1.bf16.msra.mxu0 %v1971
        %2037 = vmatprep.subr.bf16.mxu0 0
        %2038 = vmatpush1.bf16.msra.mxu0 %v1972
        %2039 = vmatprep.subr.bf16.mxu0 0
        %2040 = vmatpush1.bf16.msra.mxu0 %v1973
        %2041 = vmatprep.subr.bf16.mxu0 0
        %2042 = vmatpush1.bf16.msra.mxu0 %v1974
        %2043 = vmatprep.subr.bf16.mxu0 0
        %2044 = vmatpush1.bf16.msra.mxu0 %v1975
        %2045 = vmatprep.subr.bf16.mxu0 0
        %2046 = vmatpush1.bf16.msra.mxu0 %v1976
        %2047 = vmatprep.subr.bf16.mxu0 0
        %2048 = vmatpush1.bf16.msra.mxu0 %v1977
        %2049 = vmatprep.subr.bf16.mxu0 0
        %2050 = vmatpush1.bf16.msra.mxu0 %v1978
        %2051 = vmatprep.subr.bf16.mxu0 0
        %2052 = vmatpush1.bf16.msra.mxu0 %v1979
        %2053 = vmatprep.subr.bf16.mxu0 0
        %2054 = vmatpush1.bf16.msra.mxu0 %v1980
        %2055 = vmatprep.subr.bf16.mxu0 0
        %2056 = vmatpush1.bf16.msra.mxu0 %v1981
        %2057 = vmatprep.subr.bf16.mxu0 0
        %2058 = vmatpush1.bf16.msra.mxu0 %v1982
        %2059 = vmatprep.subr.bf16.mxu0 0
        %2060 = vmatpush1.bf16.msra.mxu0 %v1983
        %2061 = vmatprep.subr.bf16.mxu0 0
        %2062 = vmatpush1.bf16.msra.mxu0 %v1984
        %2063 = vmatprep.subr.bf16.mxu0 0
        %2064 = vmatpush1.bf16.msra.mxu0 %v1985
        %2065 = vmatprep.subr.bf16.mxu0 0
        %2066 = vmatpush1.bf16.msra.mxu0 %v1986
        %2067 = vmatprep.mubr.bf16.mxu0 %v1748
        %2068 = vmatmul.mubr.bf16.gmra.mrb[0].mxu0 %v1747
        %v2069 = vpop.f32.mrb[0].mxu0
        %v2070 = vadd.f32 0.0, %v2069
        %v2071 = vpop.f32.mrb[0].mxu0
        %v2072 = vpop.f32.mrb[0].mxu0
        %v2073 = vadd.f32 0.0, %v2072
        %v2074 = vpop.f32.mrb[0].mxu0
        %2075 = vmatprep.mubr.bf16.mxu0 %v1752
        %2076 = vmatmul.mubr.bf16.gmra.mrb[0].mxu0 %v1751
        %v2077 = vpop.f32.mrb[0].mxu0
        %v2078 = vadd.f32 0.0, %v2077
        %v2079 = vpop.f32.mrb[0].mxu0
        %v2080 = vpop.f32.mrb[0].mxu0
        %v2081 = vadd.f32 0.0, %v2080
        %v2082 = vpop.f32.mrb[0].mxu0
        %2083 = vmatprep.mubr.bf16.mxu0 %v1756
        %2084 = vmatmul.mubr.bf16.gmra.mrb[0].mxu0 %v1755
        %v2085 = vpop.f32.mrb[0].mxu0
        %v2086 = vadd.f32 0.0, %v2085
        %v2087 = vpop.f32.mrb[0].mxu0
        %v2088 = vpop.f32.mrb[0].mxu0
        %v2089 = vadd.f32 0.0, %v2088
        %v2090 = vpop.f32.mrb[0].mxu0
        %2091 = vmatprep.mubr.bf16.mxu0 %v1760
        %2092 = vmatmul.mubr.bf16.gmra.mrb[0].mxu0 %v1759
        %v2093 = vpop.f32.mrb[0].mxu0
        %v2094 = vadd.f32 0.0, %v2093
        %v2095 = vpop.f32.mrb[0].mxu0
        %v2096 = vpop.f32.mrb[0].mxu0
        %v2097 = vadd.f32 0.0, %v2096
        %v2098 = vpop.f32.mrb[0].mxu0
        %2099 = vmatprep.mubr.bf16.mxu0 %v1764
        %2100 = vmatmul.mubr.bf16.gmra.mrb[0].mxu0 %v1763
        %v2101 = vpop.f32.mrb[0].mxu0
        %v2102 = vadd.f32 0.0, %v2101
        %v2103 = vpop.f32.mrb[0].mxu0
        %v2104 = vpop.f32.mrb[0].mxu0
        %v2105 = vadd.f32 0.0, %v2104
        %v2106 = vpop.f32.mrb[0].mxu0
        %2107 = vmatprep.mubr.bf16.mxu0 %v1768
        %2108 = vmatmul.mubr.bf16.gmra.mrb[0].mxu0 %v1767
        %v2109 = vpop.f32.mrb[0].mxu0
        %v2110 = vadd.f32 0.0, %v2109
        %v2111 = vpop.f32.mrb[0].mxu0
        %v2112 = vpop.f32.mrb[0].mxu0
        %v2113 = vadd.f32 0.0, %v2112
        %v2114 = vpop.f32.mrb[0].mxu0
        %2115 = vmatprep.mubr.bf16.mxu0 %v1772
        %2116 = vmatmul.mubr.bf16.gmra.mrb[0].mxu0 %v1771
        %v2117 = vpop.f32.mrb[0].mxu0
        %v2118 = vadd.f32 0.0, %v2117
        %v2119 = vpop.f32.mrb[0].mxu0
        %v2120 = vpop.f32.mrb[0].mxu0
        %v2121 = vadd.f32 0.0, %v2120
        %v2122 = vpop.f32.mrb[0].mxu0
        %2123 = vmatprep.mubr.bf16.mxu0 %v1776
        %2124 = vmatmul.mubr.bf16.gmra.mrb[0].mxu0 %v1775
        %v2125 = vpop.f32.mrb[0].mxu0
        %v2126 = vadd.f32 0.0, %v2125
        %v2127 = vpop.f32.mrb[0].mxu0
        %v2128 = vpop.f32.mrb[0].mxu0
        %v2129 = vadd.f32 0.0, %v2128
        %v2130 = vpop.f32.mrb[0].mxu0
        %2131 = vdwg.mxu0
        %2132 = vmatprep.subr.bf16.mxu0 0
        %2133 = vmatpush1.bf16.msra.mxu0 %v1987
        %2134 = vmatprep.subr.bf16.mxu0 0
        %2135 = vmatpush1.bf16.msra.mxu0 %v1988
        %2136 = vmatprep.subr.bf16.mxu0 0
        %2137 = vmatpush1.bf16.msra.mxu0 %v1989
        %2138 = vmatprep.subr.bf16.mxu0 0
        %2139 = vmatpush1.bf16.msra.mxu0 %v1990
        %2140 = vmatprep.subr.bf16.mxu0 0
        %2141 = vmatpush1.bf16.msra.mxu0 %v1991
        %2142 = vmatprep.subr.bf16.mxu0 0
        %2143 = vmatpush1.bf16.msra.mxu0 %v1992
        %2144 = vmatprep.subr.bf16.mxu0 0
        %2145 = vmatpush1.bf16.msra.mxu0 %v1993
        %2146 = vmatprep.subr.bf16.mxu0 0
        %2147 = vmatpush1.bf16.msra.mxu0 %v1994
        %2148 = vmatprep.subr.bf16.mxu0 0
        %2149 = vmatpush1.bf16.msra.mxu0 %v1995
        %2150 = vmatprep.subr.bf16.mxu0 0
        %2151 = vmatpush1.bf16.msra.mxu0 %v1996
        %2152 = vmatprep.subr.bf16.mxu0 0
        %2153 = vmatpush1.bf16.msra.mxu0 %v1997
        %2154 = vmatprep.subr.bf16.mxu0 0
        %2155 = vmatpush1.bf16.msra.mxu0 %v1998
        %2156 = vmatprep.subr.bf16.mxu0 0
        %2157 = vmatpush1.bf16.msra.mxu0 %v1999
        %2158 = vmatprep.subr.bf16.mxu0 0
        %2159 = vmatpush1.bf16.msra.mxu0 %v2000
        %2160 = vmatprep.subr.bf16.mxu0 0
        %2161 = vmatpush1.bf16.msra.mxu0 %v2001
        %2162 = vmatprep.subr.bf16.mxu0 0
        %2163 = vmatpush1.bf16.msra.mxu0 %v2002
        %2164 = vmatprep.mubr.bf16.mxu0 %v1750
        %2165 = vmatmul.mubr.bf16.gmra.mrb[0].mxu0 %v1749
        %v2166 = vpop.f32.mrb[0].mxu0
        %v2167 = vadd.f32 %v2070, %v2166
        %v2168 = vpop.f32.mrb[0].mxu0
        %v2169 = vpop.f32.mrb[0].mxu0
        %v2170 = vadd.f32 %v2073, %v2169
        %v2171 = vpop.f32.mrb[0].mxu0
        %2172 = vmatprep.mubr.bf16.mxu0 %v1754
        %2173 = vmatmul.mubr.bf16.gmra.mrb[0].mxu0 %v1753
        %v2174 = vpop.f32.mrb[0].mxu0
        %v2175 = vadd.f32 %v2078, %v2174
        %v2176 = vpop.f32.mrb[0].mxu0
        %v2177 = vpop.f32.mrb[0].mxu0
        %v2178 = vadd.f32 %v2081, %v2177
        %v2179 = vpop.f32.mrb[0].mxu0
        %2180 = vmatprep.mubr.bf16.mxu0 %v1758
        %2181 = vmatmul.mubr.bf16.gmra.mrb[0].mxu0 %v1757
        %v2182 = vpop.f32.mrb[0].mxu0
        %v2183 = vadd.f32 %v2086, %v2182
        %v2184 = vpop.f32.mrb[0].mxu0
        %v2185 = vpop.f32.mrb[0].mxu0
        %v2186 = vadd.f32 %v2089, %v2185
        %v2187 = vpop.f32.mrb[0].mxu0
        %2188 = vmatprep.mubr.bf16.mxu0 %v1762
        %2189 = vmatmul.mubr.bf16.gmra.mrb[0].mxu0 %v1761
        %v2190 = vpop.f32.mrb[0].mxu0
        %v2191 = vadd.f32 %v2094, %v2190
        %v2192 = vpop.f32.mrb[0].mxu0
        %v2193 = vpop.f32.mrb[0].mxu0
        %v2194 = vadd.f32 %v2097, %v2193
        %v2195 = vpop.f32.mrb[0].mxu0
        %2196 = vmatprep.mubr.bf16.mxu0 %v1766
        %2197 = vmatmul.mubr.bf16.gmra.mrb[0].mxu0 %v1765
        %v2198 = vpop.f32.mrb[0].mxu0
        %v2199 = vadd.f32 %v2102, %v2198
        %v2200 = vpop.f32.mrb[0].mxu0
        %v2201 = vpop.f32.mrb[0].mxu0
        %v2202 = vadd.f32 %v2105, %v2201
        %v2203 = vpop.f32.mrb[0].mxu0
        %2204 = vmatprep.mubr.bf16.mxu0 %v1770
        %2205 = vmatmul.mubr.bf16.gmra.mrb[0].mxu0 %v1769
        %v2206 = vpop.f32.mrb[0].mxu0
        %v2207 = vadd.f32 %v2110, %v2206
        %v2208 = vpop.f32.mrb[0].mxu0
        %v2209 = vpop.f32.mrb[0].mxu0
        %v2210 = vadd.f32 %v2113, %v2209
        %v2211 = vpop.f32.mrb[0].mxu0
        %2212 = vmatprep.mubr.bf16.mxu0 %v1774
        %2213 = vmatmul.mubr.bf16.gmra.mrb[0].mxu0 %v1773
        %v2214 = vpop.f32.mrb[0].mxu0
        %v2215 = vadd.f32 %v2118, %v2214
        %v2216 = vpop.f32.mrb[0].mxu0
        %v2217 = vpop.f32.mrb[0].mxu0
        %v2218 = vadd.f32 %v2121, %v2217
        %v2219 = vpop.f32.mrb[0].mxu0
        %2220 = vmatprep.mubr.bf16.mxu0 %v1778
        %2221 = vmatmul.mubr.bf16.gmra.mrb[0].mxu0 %v1777
        %v2222 = vpop.f32.mrb[0].mxu0
        %v2223 = vadd.f32 %v2126, %v2222
        %v2224 = vpop.f32.mrb[0].mxu0
        %v2225 = vpop.f32.mrb[0].mxu0
        %v2226 = vadd.f32 %v2129, %v2225
        %v2227 = vpop.f32.mrb[0].mxu0
        %2228 = vdwg.mxu0
        %2229 = vst [vmem:[%s245] sm:$0xff] %v2167
        %2230 = vst [vmem:[%s245 + $0x8] sm:$0xff] %v2170
        %2231 = vst [vmem:[%s245 + $0x10] sm:$0xff] %v2175
        %2232 = vst [vmem:[%s245 + $0x18] sm:$0xff] %v2178
        %2233 = vst [vmem:[%s245 + $0x20] sm:$0xff] %v2183
        %2234 = vst [vmem:[%s245 + $0x28] sm:$0xff] %v2186
        %2235 = vst [vmem:[%s245 + $0x30] sm:$0xff] %v2191
        %2236 = vst [vmem:[%s245 + $0x38] sm:$0xff] %v2194
        %2237 = vst [vmem:[%s245 + $0x40] sm:$0xff] %v2199
        %2238 = vst [vmem:[%s245 + $0x48] sm:$0xff] %v2202
        %2239 = vst [vmem:[%s245 + $0x50] sm:$0xff] %v2207
        %2240 = vst [vmem:[%s245 + $0x58] sm:$0xff] %v2210
        %2241 = vst [vmem:[%s245 + $0x60] sm:$0xff] %v2215
        %2242 = vst [vmem:[%s245 + $0x68] sm:$0xff] %v2218
        %2243 = vst [vmem:[%s245 + $0x70] sm:$0xff] %v2223
        %2244 = vst [vmem:[%s245 + $0x78] sm:$0xff] %v2226
        %s2245 = sand.u32 %s119, 1
        %s2246 = scalar_lea.sflag [#allocation4], %s2245
        %s2247 = sand.u32 %s119, 1
        %s2248 = smul.addr %s2247, 128
        %s2249 = scalar_lea.vmem [#allocation8], %s2248
        // Predicated region
        $region49: #{tpu_custom_call.1} parent=35 // pred_check
          %p2250 = pneg %p129
        $region50: #{tpu_custom_call.1} parent=35 // pred_check_branch
          %2252 = sbr.rel (%p2250) target = $region52
        $region51: #{tpu_custom_call.1} parent=35 // pred_region
          %s2253 = smul.u32 16, %s22
          %s2255 = ssub.s32 2048, 2048
          %2256 = vsyncadd %s2246, %s2255
          %s2257 = smul.addr %s2253, 128
          %s2258 = scalar_lea.hbm %s4, %s2257
          %s2259 = sshll.u32 %s2249, 4
          %s2260 = int_to_ptr.vmem [resolvable:$true] %s2259
          %2265 = dma.vmem_to_hbm [thread:$0]  %s2260, 2048, %s2258, %s2246, 128, 128, 8
        $region52: #{tpu_custom_call.1} parent=35 // pred_fallthru
          _
      $region36: #{tpu_custom_call.1} parent=5 // pred_fallthru
        _
      %p2266 = scmp.le.s32.totalorder 2, %s17
      // Predicated region
      $region53: #{tpu_custom_call.1} parent=5 // pred_check
        %p2267 = pneg %p2266
      $region54: #{tpu_custom_call.1} parent=5 // pred_check_branch
        %2269 = sbr.rel (%p2267) target = $region56
      $region55: #{tpu_custom_call.1} parent=5 // pred_region
        %s2270 = ssub.s32 %s17, 2
        // Predicated region
        $region57: #{tpu_custom_call.1} parent=55 // pred_check
          %p2271 = pneg %p135
        $region58: #{tpu_custom_call.1} parent=55 // pred_check_branch
          %2273 = sbr.rel (%p2271) target = $region60
        $region59: #{tpu_custom_call.1} parent=55 // pred_region
          %s2274 = sand.u32 %s120, 1
          %s2275 = scalar_lea.sflag [#allocation4], %s2274
          %s2276 = sand.u32 %s120, 1
          %s2277 = smul.addr %s2276, 128
          %s2278 = scalar_lea.vmem [#allocation8], %s2277
          %2279 = dma.done %s2275, 2048
        $region60: #{tpu_custom_call.1} parent=55 // pred_fallthru
          _
      $region56: #{tpu_custom_call.1} parent=5 // pred_fallthru
        _
    $region6: #{tpu_custom_call.1} parent=1 // loop_footer
      %s21 = sadd.s32 1, %s17
    $region7: #{tpu_custom_call.1} parent=1 // loop_footer_branch
      %16 = sbr.rel target = $region3
    $region8: #{tpu_custom_call.1} parent=1 // loop_exit
      _
    %2280 = vsyncpa [#allocation3], 1
    %s2281 = scalar_lea.sflag [#allocation3], 1
    %2282 = vsyncpa %s2281, 1
    %2283 = vsyncpa [#allocation6], 1
    %2284 = vsyncpa [#allocation4], 1
    %s2285 = scalar_lea.sflag [#allocation4], 1
    %2286 = vsyncpa %s2285, 1

</llo_original>
